<compile_context>
chip_gen: v7x
topology: tpu7x:2x2x1
jax: 0.10.0
libtpu: 0.0.40
codegen_flags: <defaults>
</compile_context>

<pallas_src>
import jax
import jax.numpy as jnp
from jax.experimental import pallas as pl
from jax.experimental.pallas import tpu as pltpu


_SMALL_N_FALLBACK = 4096       # below this, use plain jnp (launch overhead dominates)
_VMEM_BLOCK_BUDGET = 24 << 20  # bytes allowed for the double-buffered blocks
_LANE = 128
_SUBLANE = 8


def _round_up(x, m):
    return ((x + m - 1) // m) * m


def _gaussian_smearing_kernel(coeff_ref, dist_ref, offset_ref, out_ref):
    # coeff_ref:  (1, 1)       SMEM scalar (safe for traced coeff)
    # dist_ref:   (TILE_N, 1)  distances for this tile (column vector)
    # offset_ref: (1, G)       full row of Gaussian centers (same every tile)
    # out_ref:    (TILE_N, G)
    d = dist_ref[...]                          # (TILE_N, 1)
    off = offset_ref[...]                      # (1, G)
    diff = d - off                             # broadcast -> (TILE_N, G)
    c = coeff_ref[0, 0]
    # exp on the EUP; cast only at the store so bf16 output keeps f32 math.
    out_ref[...] = jnp.exp(c * diff * diff).astype(out_ref.dtype)


def gaussian_smearing(dist, offset, coeff, *, tile_n=8192,
                      out_dtype=jnp.float32, min_grid_steps=2):
    """GaussianSmearing forward.  dist: any shape; returns (N, G), N = dist.size.

    out_dtype: float32 matches the PyTorch module exactly; pass jnp.bfloat16
               when the downstream Linear consumes bf16 (halves the dominant
               HBM write traffic of this write-bound kernel).
    """
    dist_flat = dist.reshape(-1).astype(jnp.float32)
    n = dist_flat.shape[0]
    g = offset.shape[0]
    offset_f32 = offset.astype(jnp.float32)
    coeff_arr = jnp.asarray(coeff, jnp.float32)

    # Small-N fallback: let XLA fuse the elementwise op with neighboring graph ops.
    if n <= _SMALL_N_FALLBACK:
        out = jnp.exp(coeff_arr * (dist_flat[:, None] - offset_f32[None, :]) ** 2)
        return out.astype(out_dtype)

    out_itemsize = jnp.dtype(out_dtype).itemsize

    # VMEM cost per row of the double-buffered blocks: both the (tile, 1) dist
    # block and the (tile, G) out block are lane-padded to 128 lanes.
    per_row_bytes = 2 * _LANE * (4 + out_itemsize)
    max_tile = max(_SUBLANE,
                   (_VMEM_BLOCK_BUDGET // per_row_bytes) // _SUBLANE * _SUBLANE)

    # Big tiles amortize the ~0.35 us per-grid-step overhead, but keep at least
    # `min_grid_steps` grid steps so the parallel axis can shard across the two
    # TensorCores on v7x for mid-size N.
    tile = min(int(tile_n), max_tile,
               _round_up(pl.cdiv(n, min_grid_steps), _SUBLANE))
    tile = max(_SUBLANE, _round_up(tile, _SUBLANE))
    grid = pl.cdiv(n, tile)   # ragged final block: OOB writes are dropped

    dist2d = dist_flat.reshape(n, 1)
    offset2d = offset_f32.reshape(1, g)
    coeff2d = coeff_arr.reshape(1, 1)

    cost = pl.CostEstimate(
        flops=3 * n * g,                 # sub, square, scale per element
        transcendentals=n * g,           # one exp per element
        bytes_accessed=n * g * out_itemsize + 4 * n + 4 * g + 4,
    )

    out = pl.pallas_call(
        _gaussian_smearing_kernel,
        out_shape=jax.ShapeDtypeStruct((n, g), out_dtype),
        grid_spec=pltpu.PrefetchScalarGridSpec(
            num_scalar_prefetch=0,
            grid=(grid,),
            in_specs=[
                pl.BlockSpec(memory_space=pltpu.MemorySpace.SMEM),  # coeff (1,1)
                pl.BlockSpec((tile, 1), lambda i: (i, 0)),          # dist
                pl.BlockSpec((1, g), lambda i: (0, 0)),             # offsets
            ],
            out_specs=pl.BlockSpec((tile, g), lambda i: (i, 0)),
        ),
        compiler_params=pltpu.CompilerParams(
            dimension_semantics=("parallel",),
            # 16 MiB of blocks at tile=8192 would saturate v5e's 16 MiB scoped
            # default; 32 MiB is <= physical VMEM on every generation.
            vmem_limit_bytes=32 << 20,
        ),
        cost_estimate=cost,
    )(coeff2d, dist2d, offset2d)

    return out


def make_gaussian_smearing_params(start=0.0, stop=5.0, num_gaussians=50):
    # Deterministic "parameter" setup matching the module's __init__.
    offset = jnp.linspace(start, stop, num_gaussians, dtype=jnp.float32)
    step = (stop - start) / (num_gaussians - 1)
    coeff = -0.5 / (step ** 2)
    return offset, coeff


if __name__ == "__main__":
    key = jax.random.PRNGKey(0)
    k1, k2 = jax.random.split(key)
    offset, coeff = make_gaussian_smearing_params(0.0, 5.0, 50)

    # Case 1: tiny edge list (typical radius-graph batch) -> jnp fallback path.
    dist_small = jax.random.uniform(k1, (200,), dtype=jnp.float32,
                                    minval=0.0, maxval=5.0)
    out_small = jax.block_until_ready(gaussian_smearing(dist_small, offset, coeff))
    ref_small = jnp.exp(coeff * (dist_small[:, None] - offset[None, :]) ** 2)
    assert out_small.shape == (200, 50)
    assert jnp.allclose(out_small, ref_small, atol=1e-6, rtol=1e-5)

    # Case 2: large enough for the Pallas path; N chosen so the final grid
    # block is ragged (exercises the masked OOB writes) and the grid has two
    # steps (v7x dual-TC sharding path).
    num_edges = 6001
    dist = jax.random.uniform(k2, (num_edges,), dtype=jnp.float32,
                              minval=0.0, maxval=5.0)
    out = jax.block_until_ready(gaussian_smearing(dist, offset, coeff))
    ref = jnp.exp(coeff * (dist[:, None] - offset[None, :]) ** 2)
    assert out.shape == (num_edges, 50)
    assert jnp.allclose(out, ref, atol=1e-6, rtol=1e-5)

    print("KERNEL_OK")
</pallas_src>

<mosaic_0001>
module attributes {stable_mosaic.version = 11 : i64} {
  func.func @_gaussian_smearing_kernel(%arg0: i32, %arg1: memref<1x1xf32, #tpu.memory_space<smem>>, %arg2: memref<3008x1xf32, #tpu.memory_space<vmem>>, %arg3: memref<1x50xf32, #tpu.memory_space<vmem>>, %arg4: memref<3008x50xf32, #tpu.memory_space<vmem>>) attributes {dimension_semantics = [#tpu.dimension_semantics<parallel>], iteration_bounds = array<i64: 2>, scalar_prefetch = 0 : i64, scratch_operands = 0 : i64, tpu.core_type = #tpu.core_type<tc>, window_params = [{transform_indices = @transform_0, window_bounds = array<i64: 1, 1>}, {transform_indices = @transform_1, window_bounds = array<i64: 3008, 1>}, {pipeline_mode = #tpu.pipeline_mode<synchronous>, transform_indices = @transform_2, window_bounds = array<i64: 1, 50>}, {transform_indices = @transform_3, window_bounds = array<i64: 3008, 50>}]} {
    %c0 = arith.constant 0 : index
    %c0_0 = arith.constant 0 : index
    %0 = vector.load %arg2[%c0, %c0_0] : memref<3008x1xf32, #tpu.memory_space<vmem>>, vector<3008x1xf32>
    %c0_1 = arith.constant 0 : index
    %c0_2 = arith.constant 0 : index
    %1 = vector.load %arg3[%c0_1, %c0_2] : memref<1x50xf32, #tpu.memory_space<vmem>>, vector<1x50xf32>
    %2 = vector.broadcast %0 : vector<3008x1xf32> to vector<3008x50xf32>
    %3 = vector.broadcast %1 : vector<1x50xf32> to vector<3008x50xf32>
    %4 = arith.subf %2, %3 : vector<3008x50xf32>
    %c0_3 = arith.constant 0 : index
    %c0_4 = arith.constant 0 : index
    %5 = memref.load %arg1[%c0_3, %c0_4] : memref<1x1xf32, #tpu.memory_space<smem>>
    %6 = vector.broadcast %5 : f32 to vector<3008x50xf32>
    %7 = arith.mulf %6, %4 : vector<3008x50xf32>
    %8 = arith.mulf %7, %4 : vector<3008x50xf32>
    %9 = math.exp %8 : vector<3008x50xf32>
    %c0_5 = arith.constant 0 : index
    %c0_6 = arith.constant 0 : index
    %10 = vector.load %arg4[%c0_5, %c0_6] : memref<3008x50xf32, #tpu.memory_space<vmem>>, vector<3008x50xf32>
    tpu.vector_store %arg4[%c0_5, %c0_6], %9 {strides = array<i32>} : memref<3008x50xf32, #tpu.memory_space<vmem>>, vector<3008x50xf32>,
    return
  }
  func.func @transform_0(%arg0: i32) -> (i32, i32) {
    %c0_i32 = arith.constant 0 : i32
    %c0_i32_0 = arith.constant 0 : i32
    %c0_i32_1 = arith.constant 0 : i32
    return %c0_i32, %c0_i32_0 : i32, i32
  }
  func.func @transform_1(%arg0: i32) -> (i32, i32) {
    %c0_i32 = arith.constant 0 : i32
    %c0_i32_0 = arith.constant 0 : i32
    return %arg0, %c0_i32 : i32, i32
  }
  func.func @transform_2(%arg0: i32) -> (i32, i32) {
    %c0_i32 = arith.constant 0 : i32
    %c0_i32_0 = arith.constant 0 : i32
    %c0_i32_1 = arith.constant 0 : i32
    return %c0_i32, %c0_i32_0 : i32, i32
  }
  func.func @transform_3(%arg0: i32) -> (i32, i32) {
    %c0_i32 = arith.constant 0 : i32
    %c0_i32_0 = arith.constant 0 : i32
    return %arg0, %c0_i32 : i32, i32
  }
}

</mosaic_0001>

<llo_original>
// kernel: tpu_custom_call.1
$region0: #{tpu_custom_call.1}
  #allocation0 [shape = 'u32[]', space=smem, size = 0x4, offset = 0x4, fixed_abs, tag = 'smem constant byte address 0x4 - core index']
  #allocation1 [shape = 'u32[144,128]{1,0:T(1,128)}', space=vmem, size = 0x12000, scoped, tag = 'internal scratch']
  #allocation2 [shape = 'f32[1,1]{1,0:T(1,128)S(6)}', space=smem, size = 0x200, scoped, tag = 'scoped memory for tpu_custom_call.1']
  %s0 = inlined_call_operand.<no memory space> [shape: f32[1,1], index: 0, kind: input, shape index: {}]
  %s1 = inlined_call_operand.vmem [shape: f32[6001,1], index: 1, kind: input, shape index: {}]
  %s2 = inlined_call_operand.vmem [shape: f32[1,50], index: 2, kind: input, shape index: {}]
  %s3 = inlined_call_operand.vmem [shape: f32[6001,50], index: 3, kind: output, shape index: {}]
  %s4 = sld [smem:[#allocation0]]
  $region93: #{tpu_custom_call.1} parent=0
    _
  %s6 = ssub.s32 1, %s4
  %s7 = scalar_select 0, %s6, %s4
  %8 = sst [smem:[#allocation2]] %s0
  $region1: #{tpu_custom_call.1} parent=0
    #allocation3 [shape = 'u8[3080192]{0}', space=vmem, size = 0x2f0000, scoped, tag = 'output window, operand 0']
    loop: start=0, step=1, limit=4
    $region2: #{tpu_custom_call.1} parent=1 // loop_pre_header
      _
    $region3: #{tpu_custom_call.1} parent=1 // loop_header
      %s10 = sphi 0, %s14
      %p11 = scmp.ge.s32.totalorder %s10, 4
      %s18 = sphi 0, %s18
      %s20 = sphi 0, %s18
      %s21 = sphi 0, %s20
      %s35 = sphi 0, %s21
      %s41 = sphi 0, %s43
      %s44 = sphi 0, %s41
      %s45 = sphi 0, %s44
      %s61 = sphi 0, %s45
      %s65 = sphi 0, %s65
      %s67 = sphi 0, %s65
      %s68 = sphi 0, %s67
      %s82 = sphi 0, %s68
      %s88 = sphi 0, %s90
      %s91 = sphi 0, %s88
      %s92 = sphi 0, %s91
      %s108 = sphi 0, %s92
    $region4: #{tpu_custom_call.1} parent=1 // loop_header_branch
      %13 = sbr.rel (%p11) target = $region8
    $region5: #{tpu_custom_call.1} parent=1 // loop_body
      %s15 = ssub.s32 %s10, 1
      %s16 = ssub.s32 %s10, 2
      %s17 = sadd.s32 %s10, 1
      %s19 = sadd.s32 %s18, 1
      %p22 = scmp.eq.s32.totalorder %s10, 1
      %p23 = scmp.ne.s32.totalorder %s18, %s20
      %p24 = scmp.eq.s32.totalorder %s10, 0
      %p25 = por %p23, %p24
      %p26 = scmp.ne.s32.totalorder %s18, %s20
      %p27 = scmp.eq.s32.totalorder %s15, 1
      %p28 = por %p26, %p27
      %p29 = scmp.ne.s32.totalorder %s20, %s21
      %p30 = scmp.eq.s32.totalorder %s15, 0
      %p31 = por %p29, %p30
      %p32 = scmp.ne.s32.totalorder %s20, %s21
      %p33 = scmp.eq.s32.totalorder %s16, 1
      %p34 = por %p32, %p33
      %p36 = scmp.ne.s32.totalorder %s21, %s35
      %p37 = scmp.eq.s32.totalorder %s16, 0
      %p38 = por %p36, %p37
      %s39 = ssub.s32 %s10, %s17
      %p40 = scmp.eq.s32.totalorder %s39, 0
      %s42 = sadd.s32 %s41, 1
      %s43 = scalar_select %p40, %s41, %s42
      %p46 = pneg %p40
      %p47 = scmp.eq.s32.totalorder %s10, 1
      %p48 = por %p46, %p47
      %p49 = scmp.ne.s32.totalorder %s41, %s44
      %p50 = scmp.eq.s32.totalorder %s10, 0
      %p51 = por %p49, %p50
      %p52 = scmp.ne.s32.totalorder %s41, %s44
      %p53 = scmp.eq.s32.totalorder %s15, 1
      %p54 = por %p52, %p53
      %p55 = scmp.ne.s32.totalorder %s44, %s45
      %p56 = scmp.eq.s32.totalorder %s15, 0
      %p57 = por %p55, %p56
      %p58 = scmp.ne.s32.totalorder %s44, %s45
      %p59 = scmp.eq.s32.totalorder %s16, 1
      %p60 = por %p58, %p59
      %p62 = scmp.ne.s32.totalorder %s45, %s61
      %p63 = scmp.eq.s32.totalorder %s16, 0
      %p64 = por %p62, %p63
      %s66 = sadd.s32 %s65, 1
      %p69 = scmp.eq.s32.totalorder %s10, 1
      %p70 = scmp.ne.s32.totalorder %s65, %s67
      %p71 = scmp.eq.s32.totalorder %s10, 0
      %p72 = por %p70, %p71
      %p73 = scmp.ne.s32.totalorder %s65, %s67
      %p74 = scmp.eq.s32.totalorder %s15, 1
      %p75 = por %p73, %p74
      %p76 = scmp.ne.s32.totalorder %s67, %s68
      %p77 = scmp.eq.s32.totalorder %s15, 0
      %p78 = por %p76, %p77
      %p79 = scmp.ne.s32.totalorder %s67, %s68
      %p80 = scmp.eq.s32.totalorder %s16, 1
      %p81 = por %p79, %p80
      %p83 = scmp.ne.s32.totalorder %s68, %s82
      %p84 = scmp.eq.s32.totalorder %s16, 0
      %p85 = por %p83, %p84
      %s86 = ssub.s32 %s10, %s17
      %p87 = scmp.eq.s32.totalorder %s86, 0
      %s89 = sadd.s32 %s88, 1
      %s90 = scalar_select %p87, %s88, %s89
      %p93 = pneg %p87
      %p94 = scmp.eq.s32.totalorder %s10, 1
      %p95 = por %p93, %p94
      %p96 = scmp.ne.s32.totalorder %s88, %s91
      %p97 = scmp.eq.s32.totalorder %s10, 0
      %p98 = por %p96, %p97
      %p99 = scmp.ne.s32.totalorder %s88, %s91
      %p100 = scmp.eq.s32.totalorder %s15, 1
      %p101 = por %p99, %p100
      %p102 = scmp.ne.s32.totalorder %s91, %s92
      %p103 = scmp.eq.s32.totalorder %s15, 0
      %p104 = por %p102, %p103
      %p105 = scmp.ne.s32.totalorder %s91, %s92
      %p106 = scmp.eq.s32.totalorder %s16, 1
      %p107 = por %p105, %p106
      %p109 = scmp.ne.s32.totalorder %s92, %s108
      %p110 = scmp.eq.s32.totalorder %s16, 0
      %p111 = por %p109, %p110
      %p112 = scmp.le.s32.totalorder 1, %s10
      %p113 = scmp.lt.s32.totalorder %s10, 3
      %p114 = pnand %p112, %p113
      %p115 = pneg %p114
      // Predicated region
      $region9: #{tpu_custom_call.1} parent=5 // pred_check
        _
      $region10: #{tpu_custom_call.1} parent=5 // pred_check_branch
        %117 = sbr.rel (%p114) target = $region12
      $region11: #{tpu_custom_call.1} parent=5 // pred_region
        %s118 = ssub.s32 %s10, 1
        // Predicated region
        $region13: #{tpu_custom_call.1} parent=11 // pred_check
          %p119 = pneg %p31
        $region14: #{tpu_custom_call.1} parent=11 // pred_check_branch
          %121 = sbr.rel (%p119) target = $region16
        $region15: #{tpu_custom_call.1} parent=11 // pred_region
          _
        $region16: #{tpu_custom_call.1} parent=11 // pred_fallthru
          _
        // Predicated region
        $region17: #{tpu_custom_call.1} parent=11 // pred_check
          %p122 = pneg %p78
        $region18: #{tpu_custom_call.1} parent=11 // pred_check_branch
          %124 = sbr.rel (%p122) target = $region20
        $region19: #{tpu_custom_call.1} parent=11 // pred_region
          _
        $region20: #{tpu_custom_call.1} parent=11 // pred_fallthru
          _
      $region12: #{tpu_custom_call.1} parent=5 // pred_fallthru
        _
      %p125 = scmp.lt.s32.totalorder %s10, 2
      // Predicated region
      $region21: #{tpu_custom_call.1} parent=5 // pred_check
        %p126 = pneg %p125
      $region22: #{tpu_custom_call.1} parent=5 // pred_check_branch
        %128 = sbr.rel (%p126) target = $region24
      $region23: #{tpu_custom_call.1} parent=5 // pred_region
        // Predicated region
        $region25: #{tpu_custom_call.1} parent=23 // pred_check
          %p129 = pneg %p51
        $region26: #{tpu_custom_call.1} parent=23 // pred_check_branch
          %131 = sbr.rel (%p129) target = $region28
        $region27: #{tpu_custom_call.1} parent=23 // pred_region
          %s132 = smul.u32 376, %s10
          %s133 = ssub.s32 751, %s132
          %p134 = scmp.lt.s32.totalorder %s133, 376
          %s135 = scalar_select %p134, %s133, 376
          %s136 = smul.u32 128, %s135
          %p137 = scmp.lt.s32.totalorder %s132, 750
          %s138 = scalar_select %p137, %s132, 750
          %s139 = smul.addr %s138, 8
          %s140 = scalar_lea.vmem %s1, %s139
          %s141 = smul.u32 376, %s10
          %s142 = ssub.s32 751, %s141
          %p143 = scmp.lt.s32.totalorder %s142, 376
          %s144 = scalar_select %p143, %s142, 376
          %s145 = smul.u32 128, %s144
        $region28: #{tpu_custom_call.1} parent=23 // pred_fallthru
          _
      $region24: #{tpu_custom_call.1} parent=5 // pred_fallthru
        _
      %p146 = scmp.le.s32.totalorder 1, %s10
      %p147 = scmp.lt.s32.totalorder %s10, 3
      %p148 = pnand %p146, %p147
      %p149 = pneg %p148
      // Predicated region
      $region29: #{tpu_custom_call.1} parent=5 // pred_check
        _
      $region30: #{tpu_custom_call.1} parent=5 // pred_check_branch
        %151 = sbr.rel (%p148) target = $region32
      $region31: #{tpu_custom_call.1} parent=5 // pred_region
        %s152 = ssub.s32 %s10, 1
        %p153 = pneg %p31
        %p154 = pneg %p28
        %s155 = smul.u32 376, %s15
        %s156 = ssub.s32 751, %s155
        %p157 = scmp.lt.s32.totalorder %s156, 376
        %s158 = scalar_select %p157, %s156, 376
        %s159 = smul.u32 128, %s158
        %p160 = scmp.lt.s32.totalorder %s155, 750
        %s161 = scalar_select %p160, %s155, 750
        %s162 = smul.addr %s161, 8
        %s163 = scalar_lea.vmem %s1, %s162
        %p164 = pneg %p57
        %p165 = pneg %p54
        %p166 = pneg %p78
        %p167 = pneg %p75
        %p168 = pneg %p104
        %p169 = pneg %p101
        %s170 = sand.u32 %s91, 1
        %s171 = sand.u32 %s91, 1
        %s172 = smul.addr %s171, 3008
        %s173 = scalar_lea.vmem [#allocation3], %s172
        %s174 = smul.u32 376, %s15
        %s175 = ssub.s32 751, %s174
        %p176 = scmp.lt.s32.totalorder %s175, 376
        %s177 = scalar_select %p176, %s175, 376
        %s178 = smul.u32 128, %s177
        %p179 = scmp.lt.s32.totalorder %s174, 750
        %s180 = scalar_select %p179, %s174, 750
        %s181 = smul.addr %s180, 8
        %s182 = scalar_lea.vmem %s1, %s181
        %s183 = smul.u32 376, %s15
        %s184 = ssub.s32 751, %s183
        %p185 = scmp.lt.s32.totalorder %s184, 376
        %s186 = scalar_select %p185, %s184, 376
        %s187 = smul.u32 128, %s186
        %s188 = smul.u32 376, %s15
        %s189 = ssub.s32 751, %s188
        %p190 = scmp.lt.s32.totalorder %s189, 376
        %s191 = scalar_select %p190, %s189, 376
        %s192 = smul.u32 128, %s191
        %v193 = vld [vmem:[%s182] sm:$0xff]
        %v194 = vld [vmem:[%s182 + $0x8] sm:$0xff]
        %v195 = vld [vmem:[%s182 + $0x10] sm:$0xff]
        %v196 = vld [vmem:[%s182 + $0x18] sm:$0xff]
        %v197 = vld [vmem:[%s182 + $0x20] sm:$0xff]
        %v198 = vld [vmem:[%s182 + $0x28] sm:$0xff]
        %v199 = vld [vmem:[%s182 + $0x30] sm:$0xff]
        %v200 = vld [vmem:[%s182 + $0x38] sm:$0xff]
        %v201 = vld [vmem:[%s182 + $0x40] sm:$0xff]
        %v202 = vld [vmem:[%s182 + $0x48] sm:$0xff]
        %v203 = vld [vmem:[%s182 + $0x50] sm:$0xff]
        %v204 = vld [vmem:[%s182 + $0x58] sm:$0xff]
        %v205 = vld [vmem:[%s182 + $0x60] sm:$0xff]
        %v206 = vld [vmem:[%s182 + $0x68] sm:$0xff]
        %v207 = vld [vmem:[%s182 + $0x70] sm:$0xff]
        %v208 = vld [vmem:[%s182 + $0x78] sm:$0xff]
        %v209 = vld [vmem:[%s182 + $0x80] sm:$0xff]
        %v210 = vld [vmem:[%s182 + $0x88] sm:$0xff]
        %v211 = vld [vmem:[%s182 + $0x90] sm:$0xff]
        %v212 = vld [vmem:[%s182 + $0x98] sm:$0xff]
        %v213 = vld [vmem:[%s182 + $0xa0] sm:$0xff]
        %v214 = vld [vmem:[%s182 + $0xa8] sm:$0xff]
        %v215 = vld [vmem:[%s182 + $0xb0] sm:$0xff]
        %v216 = vld [vmem:[%s182 + $0xb8] sm:$0xff]
        %v217 = vld [vmem:[%s182 + $0xc0] sm:$0xff]
        %v218 = vld [vmem:[%s182 + $0xc8] sm:$0xff]
        %v219 = vld [vmem:[%s182 + $0xd0] sm:$0xff]
        %v220 = vld [vmem:[%s182 + $0xd8] sm:$0xff]
        %v221 = vld [vmem:[%s182 + $0xe0] sm:$0xff]
        %v222 = vld [vmem:[%s182 + $0xe8] sm:$0xff]
        %v223 = vld [vmem:[%s182 + $0xf0] sm:$0xff]
        %v224 = vld [vmem:[%s182 + $0xf8] sm:$0xff]
        %v225 = vld [vmem:[%s182 + $0x100] sm:$0xff]
        %v226 = vld [vmem:[%s182 + $0x108] sm:$0xff]
        %v227 = vld [vmem:[%s182 + $0x110] sm:$0xff]
        %v228 = vld [vmem:[%s182 + $0x118] sm:$0xff]
        %v229 = vld [vmem:[%s182 + $0x120] sm:$0xff]
        %v230 = vld [vmem:[%s182 + $0x128] sm:$0xff]
        %v231 = vld [vmem:[%s182 + $0x130] sm:$0xff]
        %v232 = vld [vmem:[%s182 + $0x138] sm:$0xff]
        %v233 = vld [vmem:[%s182 + $0x140] sm:$0xff]
        %v234 = vld [vmem:[%s182 + $0x148] sm:$0xff]
        %v235 = vld [vmem:[%s182 + $0x150] sm:$0xff]
        %v236 = vld [vmem:[%s182 + $0x158] sm:$0xff]
        %v237 = vld [vmem:[%s182 + $0x160] sm:$0xff]
        %v238 = vld [vmem:[%s182 + $0x168] sm:$0xff]
        %v239 = vld [vmem:[%s182 + $0x170] sm:$0xff]
        %v240 = vld [vmem:[%s182 + $0x178] sm:$0xff]
        %v241 = vld [vmem:[%s182 + $0x180] sm:$0xff]
        %v242 = vld [vmem:[%s182 + $0x188] sm:$0xff]
        %v243 = vld [vmem:[%s182 + $0x190] sm:$0xff]
        %v244 = vld [vmem:[%s182 + $0x198] sm:$0xff]
        %v245 = vld [vmem:[%s182 + $0x1a0] sm:$0xff]
        %v246 = vld [vmem:[%s182 + $0x1a8] sm:$0xff]
        %v247 = vld [vmem:[%s182 + $0x1b0] sm:$0xff]
        %v248 = vld [vmem:[%s182 + $0x1b8] sm:$0xff]
        %v249 = vld [vmem:[%s182 + $0x1c0] sm:$0xff]
        %v250 = vld [vmem:[%s182 + $0x1c8] sm:$0xff]
        %v251 = vld [vmem:[%s182 + $0x1d0] sm:$0xff]
        %v252 = vld [vmem:[%s182 + $0x1d8] sm:$0xff]
        %v253 = vld [vmem:[%s182 + $0x1e0] sm:$0xff]
        %v254 = vld [vmem:[%s182 + $0x1e8] sm:$0xff]
        %v255 = vld [vmem:[%s182 + $0x1f0] sm:$0xff]
        %v256 = vld [vmem:[%s182 + $0x1f8] sm:$0xff]
        %v257 = vld [vmem:[%s182 + $0x200] sm:$0xff]
        %v258 = vld [vmem:[%s182 + $0x208] sm:$0xff]
        %v259 = vld [vmem:[%s182 + $0x210] sm:$0xff]
        %v260 = vld [vmem:[%s182 + $0x218] sm:$0xff]
        %v261 = vld [vmem:[%s182 + $0x220] sm:$0xff]
        %v262 = vld [vmem:[%s182 + $0x228] sm:$0xff]
        %v263 = vld [vmem:[%s182 + $0x230] sm:$0xff]
        %v264 = vld [vmem:[%s182 + $0x238] sm:$0xff]
        %v265 = vld [vmem:[%s182 + $0x240] sm:$0xff]
        %v266 = vld [vmem:[%s182 + $0x248] sm:$0xff]
        %v267 = vld [vmem:[%s182 + $0x250] sm:$0xff]
        %v268 = vld [vmem:[%s182 + $0x258] sm:$0xff]
        %v269 = vld [vmem:[%s182 + $0x260] sm:$0xff]
        %v270 = vld [vmem:[%s182 + $0x268] sm:$0xff]
        %v271 = vld [vmem:[%s182 + $0x270] sm:$0xff]
        %v272 = vld [vmem:[%s182 + $0x278] sm:$0xff]
        %v273 = vld [vmem:[%s182 + $0x280] sm:$0xff]
        %v274 = vld [vmem:[%s182 + $0x288] sm:$0xff]
        %v275 = vld [vmem:[%s182 + $0x290] sm:$0xff]
        %v276 = vld [vmem:[%s182 + $0x298] sm:$0xff]
        %v277 = vld [vmem:[%s182 + $0x2a0] sm:$0xff]
        %v278 = vld [vmem:[%s182 + $0x2a8] sm:$0xff]
        %v279 = vld [vmem:[%s182 + $0x2b0] sm:$0xff]
        %v280 = vld [vmem:[%s182 + $0x2b8] sm:$0xff]
        %v281 = vld [vmem:[%s182 + $0x2c0] sm:$0xff]
        %v282 = vld [vmem:[%s182 + $0x2c8] sm:$0xff]
        %v283 = vld [vmem:[%s182 + $0x2d0] sm:$0xff]
        %v284 = vld [vmem:[%s182 + $0x2d8] sm:$0xff]
        %v285 = vld [vmem:[%s182 + $0x2e0] sm:$0xff]
        %v286 = vld [vmem:[%s182 + $0x2e8] sm:$0xff]
        %v287 = vld [vmem:[%s182 + $0x2f0] sm:$0xff]
        %v288 = vld [vmem:[%s182 + $0x2f8] sm:$0xff]
        %v289 = vld [vmem:[%s182 + $0x300] sm:$0xff]
        %v290 = vld [vmem:[%s182 + $0x308] sm:$0xff]
        %v291 = vld [vmem:[%s182 + $0x310] sm:$0xff]
        %v292 = vld [vmem:[%s182 + $0x318] sm:$0xff]
        %v293 = vld [vmem:[%s182 + $0x320] sm:$0xff]
        %v294 = vld [vmem:[%s182 + $0x328] sm:$0xff]
        %v295 = vld [vmem:[%s182 + $0x330] sm:$0xff]
        %v296 = vld [vmem:[%s182 + $0x338] sm:$0xff]
        %v297 = vld [vmem:[%s182 + $0x340] sm:$0xff]
        %v298 = vld [vmem:[%s182 + $0x348] sm:$0xff]
        %v299 = vld [vmem:[%s182 + $0x350] sm:$0xff]
        %v300 = vld [vmem:[%s182 + $0x358] sm:$0xff]
        %v301 = vld [vmem:[%s182 + $0x360] sm:$0xff]
        %v302 = vld [vmem:[%s182 + $0x368] sm:$0xff]
        %v303 = vld [vmem:[%s182 + $0x370] sm:$0xff]
        %v304 = vld [vmem:[%s182 + $0x378] sm:$0xff]
        %v305 = vld [vmem:[%s182 + $0x380] sm:$0xff]
        %v306 = vld [vmem:[%s182 + $0x388] sm:$0xff]
        %v307 = vld [vmem:[%s182 + $0x390] sm:$0xff]
        %v308 = vld [vmem:[%s182 + $0x398] sm:$0xff]
        %v309 = vld [vmem:[%s182 + $0x3a0] sm:$0xff]
        %v310 = vld [vmem:[%s182 + $0x3a8] sm:$0xff]
        %v311 = vld [vmem:[%s182 + $0x3b0] sm:$0xff]
        %v312 = vld [vmem:[%s182 + $0x3b8] sm:$0xff]
        %v313 = vld [vmem:[%s182 + $0x3c0] sm:$0xff]
        %v314 = vld [vmem:[%s182 + $0x3c8] sm:$0xff]
        %v315 = vld [vmem:[%s182 + $0x3d0] sm:$0xff]
        %v316 = vld [vmem:[%s182 + $0x3d8] sm:$0xff]
        %v317 = vld [vmem:[%s182 + $0x3e0] sm:$0xff]
        %v318 = vld [vmem:[%s182 + $0x3e8] sm:$0xff]
        %v319 = vld [vmem:[%s182 + $0x3f0] sm:$0xff]
        %v320 = vld [vmem:[%s182 + $0x3f8] sm:$0xff]
        %v321 = vld [vmem:[%s182 + $0x400] sm:$0xff]
        %v322 = vld [vmem:[%s182 + $0x408] sm:$0xff]
        %v323 = vld [vmem:[%s182 + $0x410] sm:$0xff]
        %v324 = vld [vmem:[%s182 + $0x418] sm:$0xff]
        %v325 = vld [vmem:[%s182 + $0x420] sm:$0xff]
        %v326 = vld [vmem:[%s182 + $0x428] sm:$0xff]
        %v327 = vld [vmem:[%s182 + $0x430] sm:$0xff]
        %v328 = vld [vmem:[%s182 + $0x438] sm:$0xff]
        %v329 = vld [vmem:[%s182 + $0x440] sm:$0xff]
        %v330 = vld [vmem:[%s182 + $0x448] sm:$0xff]
        %v331 = vld [vmem:[%s182 + $0x450] sm:$0xff]
        %v332 = vld [vmem:[%s182 + $0x458] sm:$0xff]
        %v333 = vld [vmem:[%s182 + $0x460] sm:$0xff]
        %v334 = vld [vmem:[%s182 + $0x468] sm:$0xff]
        %v335 = vld [vmem:[%s182 + $0x470] sm:$0xff]
        %v336 = vld [vmem:[%s182 + $0x478] sm:$0xff]
        %v337 = vld [vmem:[%s182 + $0x480] sm:$0xff]
        %v338 = vld [vmem:[%s182 + $0x488] sm:$0xff]
        %v339 = vld [vmem:[%s182 + $0x490] sm:$0xff]
        %v340 = vld [vmem:[%s182 + $0x498] sm:$0xff]
        %v341 = vld [vmem:[%s182 + $0x4a0] sm:$0xff]
        %v342 = vld [vmem:[%s182 + $0x4a8] sm:$0xff]
        %v343 = vld [vmem:[%s182 + $0x4b0] sm:$0xff]
        %v344 = vld [vmem:[%s182 + $0x4b8] sm:$0xff]
        %v345 = vld [vmem:[%s182 + $0x4c0] sm:$0xff]
        %v346 = vld [vmem:[%s182 + $0x4c8] sm:$0xff]
        %v347 = vld [vmem:[%s182 + $0x4d0] sm:$0xff]
        %v348 = vld [vmem:[%s182 + $0x4d8] sm:$0xff]
        %v349 = vld [vmem:[%s182 + $0x4e0] sm:$0xff]
        %v350 = vld [vmem:[%s182 + $0x4e8] sm:$0xff]
        %v351 = vld [vmem:[%s182 + $0x4f0] sm:$0xff]
        %v352 = vld [vmem:[%s182 + $0x4f8] sm:$0xff]
        %v353 = vld [vmem:[%s182 + $0x500] sm:$0xff]
        %v354 = vld [vmem:[%s182 + $0x508] sm:$0xff]
        %v355 = vld [vmem:[%s182 + $0x510] sm:$0xff]
        %v356 = vld [vmem:[%s182 + $0x518] sm:$0xff]
        %v357 = vld [vmem:[%s182 + $0x520] sm:$0xff]
        %v358 = vld [vmem:[%s182 + $0x528] sm:$0xff]
        %v359 = vld [vmem:[%s182 + $0x530] sm:$0xff]
        %v360 = vld [vmem:[%s182 + $0x538] sm:$0xff]
        %v361 = vld [vmem:[%s182 + $0x540] sm:$0xff]
        %v362 = vld [vmem:[%s182 + $0x548] sm:$0xff]
        %v363 = vld [vmem:[%s182 + $0x550] sm:$0xff]
        %v364 = vld [vmem:[%s182 + $0x558] sm:$0xff]
        %v365 = vld [vmem:[%s182 + $0x560] sm:$0xff]
        %v366 = vld [vmem:[%s182 + $0x568] sm:$0xff]
        %v367 = vld [vmem:[%s182 + $0x570] sm:$0xff]
        %v368 = vld [vmem:[%s182 + $0x578] sm:$0xff]
        %v369 = vld [vmem:[%s182 + $0x580] sm:$0xff]
        %v370 = vld [vmem:[%s182 + $0x588] sm:$0xff]
        %v371 = vld [vmem:[%s182 + $0x590] sm:$0xff]
        %v372 = vld [vmem:[%s182 + $0x598] sm:$0xff]
        %v373 = vld [vmem:[%s182 + $0x5a0] sm:$0xff]
        %v374 = vld [vmem:[%s182 + $0x5a8] sm:$0xff]
        %v375 = vld [vmem:[%s182 + $0x5b0] sm:$0xff]
        %v376 = vld [vmem:[%s182 + $0x5b8] sm:$0xff]
        %v377 = vld [vmem:[%s182 + $0x5c0] sm:$0xff]
        %v378 = vld [vmem:[%s182 + $0x5c8] sm:$0xff]
        %v379 = vld [vmem:[%s182 + $0x5d0] sm:$0xff]
        %v380 = vld [vmem:[%s182 + $0x5d8] sm:$0xff]
        %v381 = vld [vmem:[%s182 + $0x5e0] sm:$0xff]
        %v382 = vld [vmem:[%s182 + $0x5e8] sm:$0xff]
        %v383 = vld [vmem:[%s182 + $0x5f0] sm:$0xff]
        %v384 = vld [vmem:[%s182 + $0x5f8] sm:$0xff]
        %v385 = vld [vmem:[%s182 + $0x600] sm:$0xff]
        %v386 = vld [vmem:[%s182 + $0x608] sm:$0xff]
        %v387 = vld [vmem:[%s182 + $0x610] sm:$0xff]
        %v388 = vld [vmem:[%s182 + $0x618] sm:$0xff]
        %v389 = vld [vmem:[%s182 + $0x620] sm:$0xff]
        %v390 = vld [vmem:[%s182 + $0x628] sm:$0xff]
        %v391 = vld [vmem:[%s182 + $0x630] sm:$0xff]
        %v392 = vld [vmem:[%s182 + $0x638] sm:$0xff]
        %v393 = vld [vmem:[%s182 + $0x640] sm:$0xff]
        %v394 = vld [vmem:[%s182 + $0x648] sm:$0xff]
        %v395 = vld [vmem:[%s182 + $0x650] sm:$0xff]
        %v396 = vld [vmem:[%s182 + $0x658] sm:$0xff]
        %v397 = vld [vmem:[%s182 + $0x660] sm:$0xff]
        %v398 = vld [vmem:[%s182 + $0x668] sm:$0xff]
        %v399 = vld [vmem:[%s182 + $0x670] sm:$0xff]
        %v400 = vld [vmem:[%s182 + $0x678] sm:$0xff]
        %v401 = vld [vmem:[%s182 + $0x680] sm:$0xff]
        %v402 = vld [vmem:[%s182 + $0x688] sm:$0xff]
        %v403 = vld [vmem:[%s182 + $0x690] sm:$0xff]
        %v404 = vld [vmem:[%s182 + $0x698] sm:$0xff]
        %v405 = vld [vmem:[%s182 + $0x6a0] sm:$0xff]
        %v406 = vld [vmem:[%s182 + $0x6a8] sm:$0xff]
        %v407 = vld [vmem:[%s182 + $0x6b0] sm:$0xff]
        %v408 = vld [vmem:[%s182 + $0x6b8] sm:$0xff]
        %v409 = vld [vmem:[%s182 + $0x6c0] sm:$0xff]
        %v410 = vld [vmem:[%s182 + $0x6c8] sm:$0xff]
        %v411 = vld [vmem:[%s182 + $0x6d0] sm:$0xff]
        %v412 = vld [vmem:[%s182 + $0x6d8] sm:$0xff]
        %v413 = vld [vmem:[%s182 + $0x6e0] sm:$0xff]
        %v414 = vld [vmem:[%s182 + $0x6e8] sm:$0xff]
        %v415 = vld [vmem:[%s182 + $0x6f0] sm:$0xff]
        %v416 = vld [vmem:[%s182 + $0x6f8] sm:$0xff]
        %v417 = vld [vmem:[%s182 + $0x700] sm:$0xff]
        %v418 = vld [vmem:[%s182 + $0x708] sm:$0xff]
        %v419 = vld [vmem:[%s182 + $0x710] sm:$0xff]
        %v420 = vld [vmem:[%s182 + $0x718] sm:$0xff]
        %v421 = vld [vmem:[%s182 + $0x720] sm:$0xff]
        %v422 = vld [vmem:[%s182 + $0x728] sm:$0xff]
        %v423 = vld [vmem:[%s182 + $0x730] sm:$0xff]
        %v424 = vld [vmem:[%s182 + $0x738] sm:$0xff]
        %v425 = vld [vmem:[%s182 + $0x740] sm:$0xff]
        %v426 = vld [vmem:[%s182 + $0x748] sm:$0xff]
        %v427 = vld [vmem:[%s182 + $0x750] sm:$0xff]
        %v428 = vld [vmem:[%s182 + $0x758] sm:$0xff]
        %v429 = vld [vmem:[%s182 + $0x760] sm:$0xff]
        %v430 = vld [vmem:[%s182 + $0x768] sm:$0xff]
        %v431 = vld [vmem:[%s182 + $0x770] sm:$0xff]
        %v432 = vld [vmem:[%s182 + $0x778] sm:$0xff]
        %v433 = vld [vmem:[%s182 + $0x780] sm:$0xff]
        %v434 = vld [vmem:[%s182 + $0x788] sm:$0xff]
        %v435 = vld [vmem:[%s182 + $0x790] sm:$0xff]
        %v436 = vld [vmem:[%s182 + $0x798] sm:$0xff]
        %v437 = vld [vmem:[%s182 + $0x7a0] sm:$0xff]
        %v438 = vld [vmem:[%s182 + $0x7a8] sm:$0xff]
        %v439 = vld [vmem:[%s182 + $0x7b0] sm:$0xff]
        %v440 = vld [vmem:[%s182 + $0x7b8] sm:$0xff]
        %v441 = vld [vmem:[%s182 + $0x7c0] sm:$0xff]
        %v442 = vld [vmem:[%s182 + $0x7c8] sm:$0xff]
        %v443 = vld [vmem:[%s182 + $0x7d0] sm:$0xff]
        %v444 = vld [vmem:[%s182 + $0x7d8] sm:$0xff]
        %v445 = vld [vmem:[%s182 + $0x7e0] sm:$0xff]
        %v446 = vld [vmem:[%s182 + $0x7e8] sm:$0xff]
        %v447 = vld [vmem:[%s182 + $0x7f0] sm:$0xff]
        %v448 = vld [vmem:[%s182 + $0x7f8] sm:$0xff]
        %v449 = vld [vmem:[%s182 + $0x800] sm:$0xff]
        %v450 = vld [vmem:[%s182 + $0x808] sm:$0xff]
        %v451 = vld [vmem:[%s182 + $0x810] sm:$0xff]
        %v452 = vld [vmem:[%s182 + $0x818] sm:$0xff]
        %v453 = vld [vmem:[%s182 + $0x820] sm:$0xff]
        %v454 = vld [vmem:[%s182 + $0x828] sm:$0xff]
        %v455 = vld [vmem:[%s182 + $0x830] sm:$0xff]
        %v456 = vld [vmem:[%s182 + $0x838] sm:$0xff]
        %v457 = vld [vmem:[%s182 + $0x840] sm:$0xff]
        %v458 = vld [vmem:[%s182 + $0x848] sm:$0xff]
        %v459 = vld [vmem:[%s182 + $0x850] sm:$0xff]
        %v460 = vld [vmem:[%s182 + $0x858] sm:$0xff]
        %v461 = vld [vmem:[%s182 + $0x860] sm:$0xff]
        %v462 = vld [vmem:[%s182 + $0x868] sm:$0xff]
        %v463 = vld [vmem:[%s182 + $0x870] sm:$0xff]
        %v464 = vld [vmem:[%s182 + $0x878] sm:$0xff]
        %v465 = vld [vmem:[%s182 + $0x880] sm:$0xff]
        %v466 = vld [vmem:[%s182 + $0x888] sm:$0xff]
        %v467 = vld [vmem:[%s182 + $0x890] sm:$0xff]
        %v468 = vld [vmem:[%s182 + $0x898] sm:$0xff]
        %v469 = vld [vmem:[%s182 + $0x8a0] sm:$0xff]
        %v470 = vld [vmem:[%s182 + $0x8a8] sm:$0xff]
        %v471 = vld [vmem:[%s182 + $0x8b0] sm:$0xff]
        %v472 = vld [vmem:[%s182 + $0x8b8] sm:$0xff]
        %v473 = vld [vmem:[%s182 + $0x8c0] sm:$0xff]
        %v474 = vld [vmem:[%s182 + $0x8c8] sm:$0xff]
        %v475 = vld [vmem:[%s182 + $0x8d0] sm:$0xff]
        %v476 = vld [vmem:[%s182 + $0x8d8] sm:$0xff]
        %v477 = vld [vmem:[%s182 + $0x8e0] sm:$0xff]
        %v478 = vld [vmem:[%s182 + $0x8e8] sm:$0xff]
        %v479 = vld [vmem:[%s182 + $0x8f0] sm:$0xff]
        %v480 = vld [vmem:[%s182 + $0x8f8] sm:$0xff]
        %v481 = vld [vmem:[%s182 + $0x900] sm:$0xff]
        %v482 = vld [vmem:[%s182 + $0x908] sm:$0xff]
        %v483 = vld [vmem:[%s182 + $0x910] sm:$0xff]
        %v484 = vld [vmem:[%s182 + $0x918] sm:$0xff]
        %v485 = vld [vmem:[%s182 + $0x920] sm:$0xff]
        %v486 = vld [vmem:[%s182 + $0x928] sm:$0xff]
        %v487 = vld [vmem:[%s182 + $0x930] sm:$0xff]
        %v488 = vld [vmem:[%s182 + $0x938] sm:$0xff]
        %v489 = vld [vmem:[%s182 + $0x940] sm:$0xff]
        %v490 = vld [vmem:[%s182 + $0x948] sm:$0xff]
        %v491 = vld [vmem:[%s182 + $0x950] sm:$0xff]
        %v492 = vld [vmem:[%s182 + $0x958] sm:$0xff]
        %v493 = vld [vmem:[%s182 + $0x960] sm:$0xff]
        %v494 = vld [vmem:[%s182 + $0x968] sm:$0xff]
        %v495 = vld [vmem:[%s182 + $0x970] sm:$0xff]
        %v496 = vld [vmem:[%s182 + $0x978] sm:$0xff]
        %v497 = vld [vmem:[%s182 + $0x980] sm:$0xff]
        %v498 = vld [vmem:[%s182 + $0x988] sm:$0xff]
        %v499 = vld [vmem:[%s182 + $0x990] sm:$0xff]
        %v500 = vld [vmem:[%s182 + $0x998] sm:$0xff]
        %v501 = vld [vmem:[%s182 + $0x9a0] sm:$0xff]
        %v502 = vld [vmem:[%s182 + $0x9a8] sm:$0xff]
        %v503 = vld [vmem:[%s182 + $0x9b0] sm:$0xff]
        %v504 = vld [vmem:[%s182 + $0x9b8] sm:$0xff]
        %v505 = vld [vmem:[%s182 + $0x9c0] sm:$0xff]
        %v506 = vld [vmem:[%s182 + $0x9c8] sm:$0xff]
        %v507 = vld [vmem:[%s182 + $0x9d0] sm:$0xff]
        %v508 = vld [vmem:[%s182 + $0x9d8] sm:$0xff]
        %v509 = vld [vmem:[%s182 + $0x9e0] sm:$0xff]
        %v510 = vld [vmem:[%s182 + $0x9e8] sm:$0xff]
        %v511 = vld [vmem:[%s182 + $0x9f0] sm:$0xff]
        %v512 = vld [vmem:[%s182 + $0x9f8] sm:$0xff]
        %v513 = vld [vmem:[%s182 + $0xa00] sm:$0xff]
        %v514 = vld [vmem:[%s182 + $0xa08] sm:$0xff]
        %v515 = vld [vmem:[%s182 + $0xa10] sm:$0xff]
        %v516 = vld [vmem:[%s182 + $0xa18] sm:$0xff]
        %v517 = vld [vmem:[%s182 + $0xa20] sm:$0xff]
        %v518 = vld [vmem:[%s182 + $0xa28] sm:$0xff]
        %v519 = vld [vmem:[%s182 + $0xa30] sm:$0xff]
        %v520 = vld [vmem:[%s182 + $0xa38] sm:$0xff]
        %v521 = vld [vmem:[%s182 + $0xa40] sm:$0xff]
        %v522 = vld [vmem:[%s182 + $0xa48] sm:$0xff]
        %v523 = vld [vmem:[%s182 + $0xa50] sm:$0xff]
        %v524 = vld [vmem:[%s182 + $0xa58] sm:$0xff]
        %v525 = vld [vmem:[%s182 + $0xa60] sm:$0xff]
        %v526 = vld [vmem:[%s182 + $0xa68] sm:$0xff]
        %v527 = vld [vmem:[%s182 + $0xa70] sm:$0xff]
        %v528 = vld [vmem:[%s182 + $0xa78] sm:$0xff]
        %v529 = vld [vmem:[%s182 + $0xa80] sm:$0xff]
        %v530 = vld [vmem:[%s182 + $0xa88] sm:$0xff]
        %v531 = vld [vmem:[%s182 + $0xa90] sm:$0xff]
        %v532 = vld [vmem:[%s182 + $0xa98] sm:$0xff]
        %v533 = vld [vmem:[%s182 + $0xaa0] sm:$0xff]
        %v534 = vld [vmem:[%s182 + $0xaa8] sm:$0xff]
        %v535 = vld [vmem:[%s182 + $0xab0] sm:$0xff]
        %v536 = vld [vmem:[%s182 + $0xab8] sm:$0xff]
        %v537 = vld [vmem:[%s182 + $0xac0] sm:$0xff]
        %v538 = vld [vmem:[%s182 + $0xac8] sm:$0xff]
        %v539 = vld [vmem:[%s182 + $0xad0] sm:$0xff]
        %v540 = vld [vmem:[%s182 + $0xad8] sm:$0xff]
        %v541 = vld [vmem:[%s182 + $0xae0] sm:$0xff]
        %v542 = vld [vmem:[%s182 + $0xae8] sm:$0xff]
        %v543 = vld [vmem:[%s182 + $0xaf0] sm:$0xff]
        %v544 = vld [vmem:[%s182 + $0xaf8] sm:$0xff]
        %v545 = vld [vmem:[%s182 + $0xb00] sm:$0xff]
        %v546 = vld [vmem:[%s182 + $0xb08] sm:$0xff]
        %v547 = vld [vmem:[%s182 + $0xb10] sm:$0xff]
        %v548 = vld [vmem:[%s182 + $0xb18] sm:$0xff]
        %v549 = vld [vmem:[%s182 + $0xb20] sm:$0xff]
        %v550 = vld [vmem:[%s182 + $0xb28] sm:$0xff]
        %v551 = vld [vmem:[%s182 + $0xb30] sm:$0xff]
        %v552 = vld [vmem:[%s182 + $0xb38] sm:$0xff]
        %v553 = vld [vmem:[%s182 + $0xb40] sm:$0xff]
        %v554 = vld [vmem:[%s182 + $0xb48] sm:$0xff]
        %v555 = vld [vmem:[%s182 + $0xb50] sm:$0xff]
        %v556 = vld [vmem:[%s182 + $0xb58] sm:$0xff]
        %v557 = vld [vmem:[%s182 + $0xb60] sm:$0xff]
        %v558 = vld [vmem:[%s182 + $0xb68] sm:$0xff]
        %v559 = vld [vmem:[%s182 + $0xb70] sm:$0xff]
        %v560 = vld [vmem:[%s182 + $0xb78] sm:$0xff]
        %v561 = vld [vmem:[%s182 + $0xb80] sm:$0xff]
        %v562 = vld [vmem:[%s182 + $0xb88] sm:$0xff]
        %v563 = vld [vmem:[%s182 + $0xb90] sm:$0xff]
        %v564 = vld [vmem:[%s182 + $0xb98] sm:$0xff]
        %v565 = vld [vmem:[%s182 + $0xba0] sm:$0xff]
        %v566 = vld [vmem:[%s182 + $0xba8] sm:$0xff]
        %v567 = vld [vmem:[%s182 + $0xbb0] sm:$0xff]
        %v568 = vld [vmem:[%s182 + $0xbb8] sm:$0xff]
        %v569 = vld [vmem:[%s2] sm:$0x1]
        %571 = vset.pattern.permute.xlu0 0
        %572 = vperm.xlu0 %571, %v193
        %v573 = vpop.permute.xlu0 %572
        %576 = vset.pattern.permute.xlu0 0
        %577 = vperm.xlu0 %576, %v194
        %v578 = vpop.permute.xlu0 %577
        %581 = vset.pattern.permute.xlu0 0
        %582 = vperm.xlu0 %581, %v195
        %v583 = vpop.permute.xlu0 %582
        %586 = vset.pattern.permute.xlu0 0
        %587 = vperm.xlu0 %586, %v196
        %v588 = vpop.permute.xlu0 %587
        %591 = vset.pattern.permute.xlu0 0
        %592 = vperm.xlu0 %591, %v197
        %v593 = vpop.permute.xlu0 %592
        %596 = vset.pattern.permute.xlu0 0
        %597 = vperm.xlu0 %596, %v198
        %v598 = vpop.permute.xlu0 %597
        %601 = vset.pattern.permute.xlu0 0
        %602 = vperm.xlu0 %601, %v199
        %v603 = vpop.permute.xlu0 %602
        %606 = vset.pattern.permute.xlu0 0
        %607 = vperm.xlu0 %606, %v200
        %v608 = vpop.permute.xlu0 %607
        %611 = vset.pattern.permute.xlu0 0
        %612 = vperm.xlu0 %611, %v201
        %v613 = vpop.permute.xlu0 %612
        %616 = vset.pattern.permute.xlu0 0
        %617 = vperm.xlu0 %616, %v202
        %v618 = vpop.permute.xlu0 %617
        %621 = vset.pattern.permute.xlu0 0
        %622 = vperm.xlu0 %621, %v203
        %v623 = vpop.permute.xlu0 %622
        %626 = vset.pattern.permute.xlu0 0
        %627 = vperm.xlu0 %626, %v204
        %v628 = vpop.permute.xlu0 %627
        %631 = vset.pattern.permute.xlu0 0
        %632 = vperm.xlu0 %631, %v205
        %v633 = vpop.permute.xlu0 %632
        %636 = vset.pattern.permute.xlu0 0
        %637 = vperm.xlu0 %636, %v206
        %v638 = vpop.permute.xlu0 %637
        %641 = vset.pattern.permute.xlu0 0
        %642 = vperm.xlu0 %641, %v207
        %v643 = vpop.permute.xlu0 %642
        %646 = vset.pattern.permute.xlu0 0
        %647 = vperm.xlu0 %646, %v208
        %v648 = vpop.permute.xlu0 %647
        %651 = vset.pattern.permute.xlu0 0
        %652 = vperm.xlu0 %651, %v209
        %v653 = vpop.permute.xlu0 %652
        %656 = vset.pattern.permute.xlu0 0
        %657 = vperm.xlu0 %656, %v210
        %v658 = vpop.permute.xlu0 %657
        %661 = vset.pattern.permute.xlu0 0
        %662 = vperm.xlu0 %661, %v211
        %v663 = vpop.permute.xlu0 %662
        %666 = vset.pattern.permute.xlu0 0
        %667 = vperm.xlu0 %666, %v212
        %v668 = vpop.permute.xlu0 %667
        %671 = vset.pattern.permute.xlu0 0
        %672 = vperm.xlu0 %671, %v213
        %v673 = vpop.permute.xlu0 %672
        %676 = vset.pattern.permute.xlu0 0
        %677 = vperm.xlu0 %676, %v214
        %v678 = vpop.permute.xlu0 %677
        %681 = vset.pattern.permute.xlu0 0
        %682 = vperm.xlu0 %681, %v215
        %v683 = vpop.permute.xlu0 %682
        %686 = vset.pattern.permute.xlu0 0
        %687 = vperm.xlu0 %686, %v216
        %v688 = vpop.permute.xlu0 %687
        %691 = vset.pattern.permute.xlu0 0
        %692 = vperm.xlu0 %691, %v217
        %v693 = vpop.permute.xlu0 %692
        %696 = vset.pattern.permute.xlu0 0
        %697 = vperm.xlu0 %696, %v218
        %v698 = vpop.permute.xlu0 %697
        %701 = vset.pattern.permute.xlu0 0
        %702 = vperm.xlu0 %701, %v219
        %v703 = vpop.permute.xlu0 %702
        %706 = vset.pattern.permute.xlu0 0
        %707 = vperm.xlu0 %706, %v220
        %v708 = vpop.permute.xlu0 %707
        %711 = vset.pattern.permute.xlu0 0
        %712 = vperm.xlu0 %711, %v221
        %v713 = vpop.permute.xlu0 %712
        %716 = vset.pattern.permute.xlu0 0
        %717 = vperm.xlu0 %716, %v222
        %v718 = vpop.permute.xlu0 %717
        %721 = vset.pattern.permute.xlu0 0
        %722 = vperm.xlu0 %721, %v223
        %v723 = vpop.permute.xlu0 %722
        %726 = vset.pattern.permute.xlu0 0
        %727 = vperm.xlu0 %726, %v224
        %v728 = vpop.permute.xlu0 %727
        %731 = vset.pattern.permute.xlu0 0
        %732 = vperm.xlu0 %731, %v225
        %v733 = vpop.permute.xlu0 %732
        %736 = vset.pattern.permute.xlu0 0
        %737 = vperm.xlu0 %736, %v226
        %v738 = vpop.permute.xlu0 %737
        %741 = vset.pattern.permute.xlu0 0
        %742 = vperm.xlu0 %741, %v227
        %v743 = vpop.permute.xlu0 %742
        %746 = vset.pattern.permute.xlu0 0
        %747 = vperm.xlu0 %746, %v228
        %v748 = vpop.permute.xlu0 %747
        %751 = vset.pattern.permute.xlu0 0
        %752 = vperm.xlu0 %751, %v229
        %v753 = vpop.permute.xlu0 %752
        %756 = vset.pattern.permute.xlu0 0
        %757 = vperm.xlu0 %756, %v230
        %v758 = vpop.permute.xlu0 %757
        %761 = vset.pattern.permute.xlu0 0
        %762 = vperm.xlu0 %761, %v231
        %v763 = vpop.permute.xlu0 %762
        %766 = vset.pattern.permute.xlu0 0
        %767 = vperm.xlu0 %766, %v232
        %v768 = vpop.permute.xlu0 %767
        %771 = vset.pattern.permute.xlu0 0
        %772 = vperm.xlu0 %771, %v233
        %v773 = vpop.permute.xlu0 %772
        %776 = vset.pattern.permute.xlu0 0
        %777 = vperm.xlu0 %776, %v234
        %v778 = vpop.permute.xlu0 %777
        %781 = vset.pattern.permute.xlu0 0
        %782 = vperm.xlu0 %781, %v235
        %v783 = vpop.permute.xlu0 %782
        %786 = vset.pattern.permute.xlu0 0
        %787 = vperm.xlu0 %786, %v236
        %v788 = vpop.permute.xlu0 %787
        %791 = vset.pattern.permute.xlu0 0
        %792 = vperm.xlu0 %791, %v237
        %v793 = vpop.permute.xlu0 %792
        %796 = vset.pattern.permute.xlu0 0
        %797 = vperm.xlu0 %796, %v238
        %v798 = vpop.permute.xlu0 %797
        %801 = vset.pattern.permute.xlu0 0
        %802 = vperm.xlu0 %801, %v239
        %v803 = vpop.permute.xlu0 %802
        %806 = vset.pattern.permute.xlu0 0
        %807 = vperm.xlu0 %806, %v240
        %v808 = vpop.permute.xlu0 %807
        %811 = vset.pattern.permute.xlu0 0
        %812 = vperm.xlu0 %811, %v241
        %v813 = vpop.permute.xlu0 %812
        %816 = vset.pattern.permute.xlu0 0
        %817 = vperm.xlu0 %816, %v242
        %v818 = vpop.permute.xlu0 %817
        %821 = vset.pattern.permute.xlu0 0
        %822 = vperm.xlu0 %821, %v243
        %v823 = vpop.permute.xlu0 %822
        %826 = vset.pattern.permute.xlu0 0
        %827 = vperm.xlu0 %826, %v244
        %v828 = vpop.permute.xlu0 %827
        %831 = vset.pattern.permute.xlu0 0
        %832 = vperm.xlu0 %831, %v245
        %v833 = vpop.permute.xlu0 %832
        %836 = vset.pattern.permute.xlu0 0
        %837 = vperm.xlu0 %836, %v246
        %v838 = vpop.permute.xlu0 %837
        %841 = vset.pattern.permute.xlu0 0
        %842 = vperm.xlu0 %841, %v247
        %v843 = vpop.permute.xlu0 %842
        %846 = vset.pattern.permute.xlu0 0
        %847 = vperm.xlu0 %846, %v248
        %v848 = vpop.permute.xlu0 %847
        %851 = vset.pattern.permute.xlu0 0
        %852 = vperm.xlu0 %851, %v249
        %v853 = vpop.permute.xlu0 %852
        %856 = vset.pattern.permute.xlu0 0
        %857 = vperm.xlu0 %856, %v250
        %v858 = vpop.permute.xlu0 %857
        %861 = vset.pattern.permute.xlu0 0
        %862 = vperm.xlu0 %861, %v251
        %v863 = vpop.permute.xlu0 %862
        %866 = vset.pattern.permute.xlu0 0
        %867 = vperm.xlu0 %866, %v252
        %v868 = vpop.permute.xlu0 %867
        %871 = vset.pattern.permute.xlu0 0
        %872 = vperm.xlu0 %871, %v253
        %v873 = vpop.permute.xlu0 %872
        %876 = vset.pattern.permute.xlu0 0
        %877 = vperm.xlu0 %876, %v254
        %v878 = vpop.permute.xlu0 %877
        %881 = vset.pattern.permute.xlu0 0
        %882 = vperm.xlu0 %881, %v255
        %v883 = vpop.permute.xlu0 %882
        %886 = vset.pattern.permute.xlu0 0
        %887 = vperm.xlu0 %886, %v256
        %v888 = vpop.permute.xlu0 %887
        %891 = vset.pattern.permute.xlu0 0
        %892 = vperm.xlu0 %891, %v257
        %v893 = vpop.permute.xlu0 %892
        %896 = vset.pattern.permute.xlu0 0
        %897 = vperm.xlu0 %896, %v258
        %v898 = vpop.permute.xlu0 %897
        %901 = vset.pattern.permute.xlu0 0
        %902 = vperm.xlu0 %901, %v259
        %v903 = vpop.permute.xlu0 %902
        %906 = vset.pattern.permute.xlu0 0
        %907 = vperm.xlu0 %906, %v260
        %v908 = vpop.permute.xlu0 %907
        %911 = vset.pattern.permute.xlu0 0
        %912 = vperm.xlu0 %911, %v261
        %v913 = vpop.permute.xlu0 %912
        %916 = vset.pattern.permute.xlu0 0
        %917 = vperm.xlu0 %916, %v262
        %v918 = vpop.permute.xlu0 %917
        %921 = vset.pattern.permute.xlu0 0
        %922 = vperm.xlu0 %921, %v263
        %v923 = vpop.permute.xlu0 %922
        %926 = vset.pattern.permute.xlu0 0
        %927 = vperm.xlu0 %926, %v264
        %v928 = vpop.permute.xlu0 %927
        %931 = vset.pattern.permute.xlu0 0
        %932 = vperm.xlu0 %931, %v265
        %v933 = vpop.permute.xlu0 %932
        %936 = vset.pattern.permute.xlu0 0
        %937 = vperm.xlu0 %936, %v266
        %v938 = vpop.permute.xlu0 %937
        %941 = vset.pattern.permute.xlu0 0
        %942 = vperm.xlu0 %941, %v267
        %v943 = vpop.permute.xlu0 %942
        %946 = vset.pattern.permute.xlu0 0
        %947 = vperm.xlu0 %946, %v268
        %v948 = vpop.permute.xlu0 %947
        %951 = vset.pattern.permute.xlu0 0
        %952 = vperm.xlu0 %951, %v269
        %v953 = vpop.permute.xlu0 %952
        %956 = vset.pattern.permute.xlu0 0
        %957 = vperm.xlu0 %956, %v270
        %v958 = vpop.permute.xlu0 %957
        %961 = vset.pattern.permute.xlu0 0
        %962 = vperm.xlu0 %961, %v271
        %v963 = vpop.permute.xlu0 %962
        %966 = vset.pattern.permute.xlu0 0
        %967 = vperm.xlu0 %966, %v272
        %v968 = vpop.permute.xlu0 %967
        %971 = vset.pattern.permute.xlu0 0
        %972 = vperm.xlu0 %971, %v273
        %v973 = vpop.permute.xlu0 %972
        %976 = vset.pattern.permute.xlu0 0
        %977 = vperm.xlu0 %976, %v274
        %v978 = vpop.permute.xlu0 %977
        %981 = vset.pattern.permute.xlu0 0
        %982 = vperm.xlu0 %981, %v275
        %v983 = vpop.permute.xlu0 %982
        %986 = vset.pattern.permute.xlu0 0
        %987 = vperm.xlu0 %986, %v276
        %v988 = vpop.permute.xlu0 %987
        %991 = vset.pattern.permute.xlu0 0
        %992 = vperm.xlu0 %991, %v277
        %v993 = vpop.permute.xlu0 %992
        %996 = vset.pattern.permute.xlu0 0
        %997 = vperm.xlu0 %996, %v278
        %v998 = vpop.permute.xlu0 %997
        %1001 = vset.pattern.permute.xlu0 0
        %1002 = vperm.xlu0 %1001, %v279
        %v1003 = vpop.permute.xlu0 %1002
        %1006 = vset.pattern.permute.xlu0 0
        %1007 = vperm.xlu0 %1006, %v280
        %v1008 = vpop.permute.xlu0 %1007
        %1011 = vset.pattern.permute.xlu0 0
        %1012 = vperm.xlu0 %1011, %v281
        %v1013 = vpop.permute.xlu0 %1012
        %1016 = vset.pattern.permute.xlu0 0
        %1017 = vperm.xlu0 %1016, %v282
        %v1018 = vpop.permute.xlu0 %1017
        %1021 = vset.pattern.permute.xlu0 0
        %1022 = vperm.xlu0 %1021, %v283
        %v1023 = vpop.permute.xlu0 %1022
        %1026 = vset.pattern.permute.xlu0 0
        %1027 = vperm.xlu0 %1026, %v284
        %v1028 = vpop.permute.xlu0 %1027
        %1031 = vset.pattern.permute.xlu0 0
        %1032 = vperm.xlu0 %1031, %v285
        %v1033 = vpop.permute.xlu0 %1032
        %1036 = vset.pattern.permute.xlu0 0
        %1037 = vperm.xlu0 %1036, %v286
        %v1038 = vpop.permute.xlu0 %1037
        %1041 = vset.pattern.permute.xlu0 0
        %1042 = vperm.xlu0 %1041, %v287
        %v1043 = vpop.permute.xlu0 %1042
        %1046 = vset.pattern.permute.xlu0 0
        %1047 = vperm.xlu0 %1046, %v288
        %v1048 = vpop.permute.xlu0 %1047
        %1051 = vset.pattern.permute.xlu0 0
        %1052 = vperm.xlu0 %1051, %v289
        %v1053 = vpop.permute.xlu0 %1052
        %1056 = vset.pattern.permute.xlu0 0
        %1057 = vperm.xlu0 %1056, %v290
        %v1058 = vpop.permute.xlu0 %1057
        %1061 = vset.pattern.permute.xlu0 0
        %1062 = vperm.xlu0 %1061, %v291
        %v1063 = vpop.permute.xlu0 %1062
        %1066 = vset.pattern.permute.xlu0 0
        %1067 = vperm.xlu0 %1066, %v292
        %v1068 = vpop.permute.xlu0 %1067
        %1071 = vset.pattern.permute.xlu0 0
        %1072 = vperm.xlu0 %1071, %v293
        %v1073 = vpop.permute.xlu0 %1072
        %1076 = vset.pattern.permute.xlu0 0
        %1077 = vperm.xlu0 %1076, %v294
        %v1078 = vpop.permute.xlu0 %1077
        %1081 = vset.pattern.permute.xlu0 0
        %1082 = vperm.xlu0 %1081, %v295
        %v1083 = vpop.permute.xlu0 %1082
        %1086 = vset.pattern.permute.xlu0 0
        %1087 = vperm.xlu0 %1086, %v296
        %v1088 = vpop.permute.xlu0 %1087
        %1091 = vset.pattern.permute.xlu0 0
        %1092 = vperm.xlu0 %1091, %v297
        %v1093 = vpop.permute.xlu0 %1092
        %1096 = vset.pattern.permute.xlu0 0
        %1097 = vperm.xlu0 %1096, %v298
        %v1098 = vpop.permute.xlu0 %1097
        %1101 = vset.pattern.permute.xlu0 0
        %1102 = vperm.xlu0 %1101, %v299
        %v1103 = vpop.permute.xlu0 %1102
        %1106 = vset.pattern.permute.xlu0 0
        %1107 = vperm.xlu0 %1106, %v300
        %v1108 = vpop.permute.xlu0 %1107
        %1111 = vset.pattern.permute.xlu0 0
        %1112 = vperm.xlu0 %1111, %v301
        %v1113 = vpop.permute.xlu0 %1112
        %1116 = vset.pattern.permute.xlu0 0
        %1117 = vperm.xlu0 %1116, %v302
        %v1118 = vpop.permute.xlu0 %1117
        %1121 = vset.pattern.permute.xlu0 0
        %1122 = vperm.xlu0 %1121, %v303
        %v1123 = vpop.permute.xlu0 %1122
        %1126 = vset.pattern.permute.xlu0 0
        %1127 = vperm.xlu0 %1126, %v304
        %v1128 = vpop.permute.xlu0 %1127
        %1131 = vset.pattern.permute.xlu0 0
        %1132 = vperm.xlu0 %1131, %v305
        %v1133 = vpop.permute.xlu0 %1132
        %1136 = vset.pattern.permute.xlu0 0
        %1137 = vperm.xlu0 %1136, %v306
        %v1138 = vpop.permute.xlu0 %1137
        %1141 = vset.pattern.permute.xlu0 0
        %1142 = vperm.xlu0 %1141, %v307
        %v1143 = vpop.permute.xlu0 %1142
        %1146 = vset.pattern.permute.xlu0 0
        %1147 = vperm.xlu0 %1146, %v308
        %v1148 = vpop.permute.xlu0 %1147
        %1151 = vset.pattern.permute.xlu0 0
        %1152 = vperm.xlu0 %1151, %v309
        %v1153 = vpop.permute.xlu0 %1152
        %1156 = vset.pattern.permute.xlu0 0
        %1157 = vperm.xlu0 %1156, %v310
        %v1158 = vpop.permute.xlu0 %1157
        %1161 = vset.pattern.permute.xlu0 0
        %1162 = vperm.xlu0 %1161, %v311
        %v1163 = vpop.permute.xlu0 %1162
        %1166 = vset.pattern.permute.xlu0 0
        %1167 = vperm.xlu0 %1166, %v312
        %v1168 = vpop.permute.xlu0 %1167
        %1171 = vset.pattern.permute.xlu0 0
        %1172 = vperm.xlu0 %1171, %v313
        %v1173 = vpop.permute.xlu0 %1172
        %1176 = vset.pattern.permute.xlu0 0
        %1177 = vperm.xlu0 %1176, %v314
        %v1178 = vpop.permute.xlu0 %1177
        %1181 = vset.pattern.permute.xlu0 0
        %1182 = vperm.xlu0 %1181, %v315
        %v1183 = vpop.permute.xlu0 %1182
        %1186 = vset.pattern.permute.xlu0 0
        %1187 = vperm.xlu0 %1186, %v316
        %v1188 = vpop.permute.xlu0 %1187
        %1191 = vset.pattern.permute.xlu0 0
        %1192 = vperm.xlu0 %1191, %v317
        %v1193 = vpop.permute.xlu0 %1192
        %1196 = vset.pattern.permute.xlu0 0
        %1197 = vperm.xlu0 %1196, %v318
        %v1198 = vpop.permute.xlu0 %1197
        %1201 = vset.pattern.permute.xlu0 0
        %1202 = vperm.xlu0 %1201, %v319
        %v1203 = vpop.permute.xlu0 %1202
        %1206 = vset.pattern.permute.xlu0 0
        %1207 = vperm.xlu0 %1206, %v320
        %v1208 = vpop.permute.xlu0 %1207
        %1211 = vset.pattern.permute.xlu0 0
        %1212 = vperm.xlu0 %1211, %v321
        %v1213 = vpop.permute.xlu0 %1212
        %1216 = vset.pattern.permute.xlu0 0
        %1217 = vperm.xlu0 %1216, %v322
        %v1218 = vpop.permute.xlu0 %1217
        %1221 = vset.pattern.permute.xlu0 0
        %1222 = vperm.xlu0 %1221, %v323
        %v1223 = vpop.permute.xlu0 %1222
        %1226 = vset.pattern.permute.xlu0 0
        %1227 = vperm.xlu0 %1226, %v324
        %v1228 = vpop.permute.xlu0 %1227
        %1231 = vset.pattern.permute.xlu0 0
        %1232 = vperm.xlu0 %1231, %v325
        %v1233 = vpop.permute.xlu0 %1232
        %1236 = vset.pattern.permute.xlu0 0
        %1237 = vperm.xlu0 %1236, %v326
        %v1238 = vpop.permute.xlu0 %1237
        %1241 = vset.pattern.permute.xlu0 0
        %1242 = vperm.xlu0 %1241, %v327
        %v1243 = vpop.permute.xlu0 %1242
        %1246 = vset.pattern.permute.xlu0 0
        %1247 = vperm.xlu0 %1246, %v328
        %v1248 = vpop.permute.xlu0 %1247
        %1251 = vset.pattern.permute.xlu0 0
        %1252 = vperm.xlu0 %1251, %v329
        %v1253 = vpop.permute.xlu0 %1252
        %1256 = vset.pattern.permute.xlu0 0
        %1257 = vperm.xlu0 %1256, %v330
        %v1258 = vpop.permute.xlu0 %1257
        %1261 = vset.pattern.permute.xlu0 0
        %1262 = vperm.xlu0 %1261, %v331
        %v1263 = vpop.permute.xlu0 %1262
        %1266 = vset.pattern.permute.xlu0 0
        %1267 = vperm.xlu0 %1266, %v332
        %v1268 = vpop.permute.xlu0 %1267
        %1271 = vset.pattern.permute.xlu0 0
        %1272 = vperm.xlu0 %1271, %v333
        %v1273 = vpop.permute.xlu0 %1272
        %1276 = vset.pattern.permute.xlu0 0
        %1277 = vperm.xlu0 %1276, %v334
        %v1278 = vpop.permute.xlu0 %1277
        %1281 = vset.pattern.permute.xlu0 0
        %1282 = vperm.xlu0 %1281, %v335
        %v1283 = vpop.permute.xlu0 %1282
        %1286 = vset.pattern.permute.xlu0 0
        %1287 = vperm.xlu0 %1286, %v336
        %v1288 = vpop.permute.xlu0 %1287
        %1291 = vset.pattern.permute.xlu0 0
        %1292 = vperm.xlu0 %1291, %v337
        %v1293 = vpop.permute.xlu0 %1292
        %1296 = vset.pattern.permute.xlu0 0
        %1297 = vperm.xlu0 %1296, %v338
        %v1298 = vpop.permute.xlu0 %1297
        %1301 = vset.pattern.permute.xlu0 0
        %1302 = vperm.xlu0 %1301, %v339
        %v1303 = vpop.permute.xlu0 %1302
        %1306 = vset.pattern.permute.xlu0 0
        %1307 = vperm.xlu0 %1306, %v340
        %v1308 = vpop.permute.xlu0 %1307
        %1311 = vset.pattern.permute.xlu0 0
        %1312 = vperm.xlu0 %1311, %v341
        %v1313 = vpop.permute.xlu0 %1312
        %1316 = vset.pattern.permute.xlu0 0
        %1317 = vperm.xlu0 %1316, %v342
        %v1318 = vpop.permute.xlu0 %1317
        %1321 = vset.pattern.permute.xlu0 0
        %1322 = vperm.xlu0 %1321, %v343
        %v1323 = vpop.permute.xlu0 %1322
        %1326 = vset.pattern.permute.xlu0 0
        %1327 = vperm.xlu0 %1326, %v344
        %v1328 = vpop.permute.xlu0 %1327
        %1331 = vset.pattern.permute.xlu0 0
        %1332 = vperm.xlu0 %1331, %v345
        %v1333 = vpop.permute.xlu0 %1332
        %1336 = vset.pattern.permute.xlu0 0
        %1337 = vperm.xlu0 %1336, %v346
        %v1338 = vpop.permute.xlu0 %1337
        %1341 = vset.pattern.permute.xlu0 0
        %1342 = vperm.xlu0 %1341, %v347
        %v1343 = vpop.permute.xlu0 %1342
        %1346 = vset.pattern.permute.xlu0 0
        %1347 = vperm.xlu0 %1346, %v348
        %v1348 = vpop.permute.xlu0 %1347
        %1351 = vset.pattern.permute.xlu0 0
        %1352 = vperm.xlu0 %1351, %v349
        %v1353 = vpop.permute.xlu0 %1352
        %1356 = vset.pattern.permute.xlu0 0
        %1357 = vperm.xlu0 %1356, %v350
        %v1358 = vpop.permute.xlu0 %1357
        %1361 = vset.pattern.permute.xlu0 0
        %1362 = vperm.xlu0 %1361, %v351
        %v1363 = vpop.permute.xlu0 %1362
        %1366 = vset.pattern.permute.xlu0 0
        %1367 = vperm.xlu0 %1366, %v352
        %v1368 = vpop.permute.xlu0 %1367
        %1371 = vset.pattern.permute.xlu0 0
        %1372 = vperm.xlu0 %1371, %v353
        %v1373 = vpop.permute.xlu0 %1372
        %1376 = vset.pattern.permute.xlu0 0
        %1377 = vperm.xlu0 %1376, %v354
        %v1378 = vpop.permute.xlu0 %1377
        %1381 = vset.pattern.permute.xlu0 0
        %1382 = vperm.xlu0 %1381, %v355
        %v1383 = vpop.permute.xlu0 %1382
        %1386 = vset.pattern.permute.xlu0 0
        %1387 = vperm.xlu0 %1386, %v356
        %v1388 = vpop.permute.xlu0 %1387
        %1391 = vset.pattern.permute.xlu0 0
        %1392 = vperm.xlu0 %1391, %v357
        %v1393 = vpop.permute.xlu0 %1392
        %1396 = vset.pattern.permute.xlu0 0
        %1397 = vperm.xlu0 %1396, %v358
        %v1398 = vpop.permute.xlu0 %1397
        %1401 = vset.pattern.permute.xlu0 0
        %1402 = vperm.xlu0 %1401, %v359
        %v1403 = vpop.permute.xlu0 %1402
        %1406 = vset.pattern.permute.xlu0 0
        %1407 = vperm.xlu0 %1406, %v360
        %v1408 = vpop.permute.xlu0 %1407
        %1411 = vset.pattern.permute.xlu0 0
        %1412 = vperm.xlu0 %1411, %v361
        %v1413 = vpop.permute.xlu0 %1412
        %1416 = vset.pattern.permute.xlu0 0
        %1417 = vperm.xlu0 %1416, %v362
        %v1418 = vpop.permute.xlu0 %1417
        %1421 = vset.pattern.permute.xlu0 0
        %1422 = vperm.xlu0 %1421, %v363
        %v1423 = vpop.permute.xlu0 %1422
        %1426 = vset.pattern.permute.xlu0 0
        %1427 = vperm.xlu0 %1426, %v364
        %v1428 = vpop.permute.xlu0 %1427
        %1431 = vset.pattern.permute.xlu0 0
        %1432 = vperm.xlu0 %1431, %v365
        %v1433 = vpop.permute.xlu0 %1432
        %1436 = vset.pattern.permute.xlu0 0
        %1437 = vperm.xlu0 %1436, %v366
        %v1438 = vpop.permute.xlu0 %1437
        %1441 = vset.pattern.permute.xlu0 0
        %1442 = vperm.xlu0 %1441, %v367
        %v1443 = vpop.permute.xlu0 %1442
        %1446 = vset.pattern.permute.xlu0 0
        %1447 = vperm.xlu0 %1446, %v368
        %v1448 = vpop.permute.xlu0 %1447
        %1451 = vset.pattern.permute.xlu0 0
        %1452 = vperm.xlu0 %1451, %v369
        %v1453 = vpop.permute.xlu0 %1452
        %1456 = vset.pattern.permute.xlu0 0
        %1457 = vperm.xlu0 %1456, %v370
        %v1458 = vpop.permute.xlu0 %1457
        %1461 = vset.pattern.permute.xlu0 0
        %1462 = vperm.xlu0 %1461, %v371
        %v1463 = vpop.permute.xlu0 %1462
        %1466 = vset.pattern.permute.xlu0 0
        %1467 = vperm.xlu0 %1466, %v372
        %v1468 = vpop.permute.xlu0 %1467
        %1471 = vset.pattern.permute.xlu0 0
        %1472 = vperm.xlu0 %1471, %v373
        %v1473 = vpop.permute.xlu0 %1472
        %1476 = vset.pattern.permute.xlu0 0
        %1477 = vperm.xlu0 %1476, %v374
        %v1478 = vpop.permute.xlu0 %1477
        %1481 = vset.pattern.permute.xlu0 0
        %1482 = vperm.xlu0 %1481, %v375
        %v1483 = vpop.permute.xlu0 %1482
        %1486 = vset.pattern.permute.xlu0 0
        %1487 = vperm.xlu0 %1486, %v376
        %v1488 = vpop.permute.xlu0 %1487
        %1491 = vset.pattern.permute.xlu0 0
        %1492 = vperm.xlu0 %1491, %v377
        %v1493 = vpop.permute.xlu0 %1492
        %1496 = vset.pattern.permute.xlu0 0
        %1497 = vperm.xlu0 %1496, %v378
        %v1498 = vpop.permute.xlu0 %1497
        %1501 = vset.pattern.permute.xlu0 0
        %1502 = vperm.xlu0 %1501, %v379
        %v1503 = vpop.permute.xlu0 %1502
        %1506 = vset.pattern.permute.xlu0 0
        %1507 = vperm.xlu0 %1506, %v380
        %v1508 = vpop.permute.xlu0 %1507
        %1511 = vset.pattern.permute.xlu0 0
        %1512 = vperm.xlu0 %1511, %v381
        %v1513 = vpop.permute.xlu0 %1512
        %1516 = vset.pattern.permute.xlu0 0
        %1517 = vperm.xlu0 %1516, %v382
        %v1518 = vpop.permute.xlu0 %1517
        %1521 = vset.pattern.permute.xlu0 0
        %1522 = vperm.xlu0 %1521, %v383
        %v1523 = vpop.permute.xlu0 %1522
        %1526 = vset.pattern.permute.xlu0 0
        %1527 = vperm.xlu0 %1526, %v384
        %v1528 = vpop.permute.xlu0 %1527
        %1531 = vset.pattern.permute.xlu0 0
        %1532 = vperm.xlu0 %1531, %v385
        %v1533 = vpop.permute.xlu0 %1532
        %1536 = vset.pattern.permute.xlu0 0
        %1537 = vperm.xlu0 %1536, %v386
        %v1538 = vpop.permute.xlu0 %1537
        %1541 = vset.pattern.permute.xlu0 0
        %1542 = vperm.xlu0 %1541, %v387
        %v1543 = vpop.permute.xlu0 %1542
        %1546 = vset.pattern.permute.xlu0 0
        %1547 = vperm.xlu0 %1546, %v388
        %v1548 = vpop.permute.xlu0 %1547
        %1551 = vset.pattern.permute.xlu0 0
        %1552 = vperm.xlu0 %1551, %v389
        %v1553 = vpop.permute.xlu0 %1552
        %1556 = vset.pattern.permute.xlu0 0
        %1557 = vperm.xlu0 %1556, %v390
        %v1558 = vpop.permute.xlu0 %1557
        %1561 = vset.pattern.permute.xlu0 0
        %1562 = vperm.xlu0 %1561, %v391
        %v1563 = vpop.permute.xlu0 %1562
        %1566 = vset.pattern.permute.xlu0 0
        %1567 = vperm.xlu0 %1566, %v392
        %v1568 = vpop.permute.xlu0 %1567
        %1571 = vset.pattern.permute.xlu0 0
        %1572 = vperm.xlu0 %1571, %v393
        %v1573 = vpop.permute.xlu0 %1572
        %1576 = vset.pattern.permute.xlu0 0
        %1577 = vperm.xlu0 %1576, %v394
        %v1578 = vpop.permute.xlu0 %1577
        %1581 = vset.pattern.permute.xlu0 0
        %1582 = vperm.xlu0 %1581, %v395
        %v1583 = vpop.permute.xlu0 %1582
        %1586 = vset.pattern.permute.xlu0 0
        %1587 = vperm.xlu0 %1586, %v396
        %v1588 = vpop.permute.xlu0 %1587
        %1591 = vset.pattern.permute.xlu0 0
        %1592 = vperm.xlu0 %1591, %v397
        %v1593 = vpop.permute.xlu0 %1592
        %1596 = vset.pattern.permute.xlu0 0
        %1597 = vperm.xlu0 %1596, %v398
        %v1598 = vpop.permute.xlu0 %1597
        %1601 = vset.pattern.permute.xlu0 0
        %1602 = vperm.xlu0 %1601, %v399
        %v1603 = vpop.permute.xlu0 %1602
        %1606 = vset.pattern.permute.xlu0 0
        %1607 = vperm.xlu0 %1606, %v400
        %v1608 = vpop.permute.xlu0 %1607
        %1611 = vset.pattern.permute.xlu0 0
        %1612 = vperm.xlu0 %1611, %v401
        %v1613 = vpop.permute.xlu0 %1612
        %1616 = vset.pattern.permute.xlu0 0
        %1617 = vperm.xlu0 %1616, %v402
        %v1618 = vpop.permute.xlu0 %1617
        %1621 = vset.pattern.permute.xlu0 0
        %1622 = vperm.xlu0 %1621, %v403
        %v1623 = vpop.permute.xlu0 %1622
        %1626 = vset.pattern.permute.xlu0 0
        %1627 = vperm.xlu0 %1626, %v404
        %v1628 = vpop.permute.xlu0 %1627
        %1631 = vset.pattern.permute.xlu0 0
        %1632 = vperm.xlu0 %1631, %v405
        %v1633 = vpop.permute.xlu0 %1632
        %1636 = vset.pattern.permute.xlu0 0
        %1637 = vperm.xlu0 %1636, %v406
        %v1638 = vpop.permute.xlu0 %1637
        %1641 = vset.pattern.permute.xlu0 0
        %1642 = vperm.xlu0 %1641, %v407
        %v1643 = vpop.permute.xlu0 %1642
        %1646 = vset.pattern.permute.xlu0 0
        %1647 = vperm.xlu0 %1646, %v408
        %v1648 = vpop.permute.xlu0 %1647
        %1651 = vset.pattern.permute.xlu0 0
        %1652 = vperm.xlu0 %1651, %v409
        %v1653 = vpop.permute.xlu0 %1652
        %1656 = vset.pattern.permute.xlu0 0
        %1657 = vperm.xlu0 %1656, %v410
        %v1658 = vpop.permute.xlu0 %1657
        %1661 = vset.pattern.permute.xlu0 0
        %1662 = vperm.xlu0 %1661, %v411
        %v1663 = vpop.permute.xlu0 %1662
        %1666 = vset.pattern.permute.xlu0 0
        %1667 = vperm.xlu0 %1666, %v412
        %v1668 = vpop.permute.xlu0 %1667
        %1671 = vset.pattern.permute.xlu0 0
        %1672 = vperm.xlu0 %1671, %v413
        %v1673 = vpop.permute.xlu0 %1672
        %1676 = vset.pattern.permute.xlu0 0
        %1677 = vperm.xlu0 %1676, %v414
        %v1678 = vpop.permute.xlu0 %1677
        %1681 = vset.pattern.permute.xlu0 0
        %1682 = vperm.xlu0 %1681, %v415
        %v1683 = vpop.permute.xlu0 %1682
        %1686 = vset.pattern.permute.xlu0 0
        %1687 = vperm.xlu0 %1686, %v416
        %v1688 = vpop.permute.xlu0 %1687
        %1691 = vset.pattern.permute.xlu0 0
        %1692 = vperm.xlu0 %1691, %v417
        %v1693 = vpop.permute.xlu0 %1692
        %1696 = vset.pattern.permute.xlu0 0
        %1697 = vperm.xlu0 %1696, %v418
        %v1698 = vpop.permute.xlu0 %1697
        %1701 = vset.pattern.permute.xlu0 0
        %1702 = vperm.xlu0 %1701, %v419
        %v1703 = vpop.permute.xlu0 %1702
        %1706 = vset.pattern.permute.xlu0 0
        %1707 = vperm.xlu0 %1706, %v420
        %v1708 = vpop.permute.xlu0 %1707
        %1711 = vset.pattern.permute.xlu0 0
        %1712 = vperm.xlu0 %1711, %v421
        %v1713 = vpop.permute.xlu0 %1712
        %1716 = vset.pattern.permute.xlu0 0
        %1717 = vperm.xlu0 %1716, %v422
        %v1718 = vpop.permute.xlu0 %1717
        %1721 = vset.pattern.permute.xlu0 0
        %1722 = vperm.xlu0 %1721, %v423
        %v1723 = vpop.permute.xlu0 %1722
        %1726 = vset.pattern.permute.xlu0 0
        %1727 = vperm.xlu0 %1726, %v424
        %v1728 = vpop.permute.xlu0 %1727
        %1731 = vset.pattern.permute.xlu0 0
        %1732 = vperm.xlu0 %1731, %v425
        %v1733 = vpop.permute.xlu0 %1732
        %1736 = vset.pattern.permute.xlu0 0
        %1737 = vperm.xlu0 %1736, %v426
        %v1738 = vpop.permute.xlu0 %1737
        %1741 = vset.pattern.permute.xlu0 0
        %1742 = vperm.xlu0 %1741, %v427
        %v1743 = vpop.permute.xlu0 %1742
        %1746 = vset.pattern.permute.xlu0 0
        %1747 = vperm.xlu0 %1746, %v428
        %v1748 = vpop.permute.xlu0 %1747
        %1751 = vset.pattern.permute.xlu0 0
        %1752 = vperm.xlu0 %1751, %v429
        %v1753 = vpop.permute.xlu0 %1752
        %1756 = vset.pattern.permute.xlu0 0
        %1757 = vperm.xlu0 %1756, %v430
        %v1758 = vpop.permute.xlu0 %1757
        %1761 = vset.pattern.permute.xlu0 0
        %1762 = vperm.xlu0 %1761, %v431
        %v1763 = vpop.permute.xlu0 %1762
        %1766 = vset.pattern.permute.xlu0 0
        %1767 = vperm.xlu0 %1766, %v432
        %v1768 = vpop.permute.xlu0 %1767
        %1771 = vset.pattern.permute.xlu0 0
        %1772 = vperm.xlu0 %1771, %v433
        %v1773 = vpop.permute.xlu0 %1772
        %1776 = vset.pattern.permute.xlu0 0
        %1777 = vperm.xlu0 %1776, %v434
        %v1778 = vpop.permute.xlu0 %1777
        %1781 = vset.pattern.permute.xlu0 0
        %1782 = vperm.xlu0 %1781, %v435
        %v1783 = vpop.permute.xlu0 %1782
        %1786 = vset.pattern.permute.xlu0 0
        %1787 = vperm.xlu0 %1786, %v436
        %v1788 = vpop.permute.xlu0 %1787
        %1791 = vset.pattern.permute.xlu0 0
        %1792 = vperm.xlu0 %1791, %v437
        %v1793 = vpop.permute.xlu0 %1792
        %1796 = vset.pattern.permute.xlu0 0
        %1797 = vperm.xlu0 %1796, %v438
        %v1798 = vpop.permute.xlu0 %1797
        %1801 = vset.pattern.permute.xlu0 0
        %1802 = vperm.xlu0 %1801, %v439
        %v1803 = vpop.permute.xlu0 %1802
        %1806 = vset.pattern.permute.xlu0 0
        %1807 = vperm.xlu0 %1806, %v440
        %v1808 = vpop.permute.xlu0 %1807
        %1811 = vset.pattern.permute.xlu0 0
        %1812 = vperm.xlu0 %1811, %v441
        %v1813 = vpop.permute.xlu0 %1812
        %1816 = vset.pattern.permute.xlu0 0
        %1817 = vperm.xlu0 %1816, %v442
        %v1818 = vpop.permute.xlu0 %1817
        %1821 = vset.pattern.permute.xlu0 0
        %1822 = vperm.xlu0 %1821, %v443
        %v1823 = vpop.permute.xlu0 %1822
        %1826 = vset.pattern.permute.xlu0 0
        %1827 = vperm.xlu0 %1826, %v444
        %v1828 = vpop.permute.xlu0 %1827
        %1831 = vset.pattern.permute.xlu0 0
        %1832 = vperm.xlu0 %1831, %v445
        %v1833 = vpop.permute.xlu0 %1832
        %1836 = vset.pattern.permute.xlu0 0
        %1837 = vperm.xlu0 %1836, %v446
        %v1838 = vpop.permute.xlu0 %1837
        %1841 = vset.pattern.permute.xlu0 0
        %1842 = vperm.xlu0 %1841, %v447
        %v1843 = vpop.permute.xlu0 %1842
        %1846 = vset.pattern.permute.xlu0 0
        %1847 = vperm.xlu0 %1846, %v448
        %v1848 = vpop.permute.xlu0 %1847
        %1851 = vset.pattern.permute.xlu0 0
        %1852 = vperm.xlu0 %1851, %v449
        %v1853 = vpop.permute.xlu0 %1852
        %1856 = vset.pattern.permute.xlu0 0
        %1857 = vperm.xlu0 %1856, %v450
        %v1858 = vpop.permute.xlu0 %1857
        %1861 = vset.pattern.permute.xlu0 0
        %1862 = vperm.xlu0 %1861, %v451
        %v1863 = vpop.permute.xlu0 %1862
        %1866 = vset.pattern.permute.xlu0 0
        %1867 = vperm.xlu0 %1866, %v452
        %v1868 = vpop.permute.xlu0 %1867
        %1871 = vset.pattern.permute.xlu0 0
        %1872 = vperm.xlu0 %1871, %v453
        %v1873 = vpop.permute.xlu0 %1872
        %1876 = vset.pattern.permute.xlu0 0
        %1877 = vperm.xlu0 %1876, %v454
        %v1878 = vpop.permute.xlu0 %1877
        %1881 = vset.pattern.permute.xlu0 0
        %1882 = vperm.xlu0 %1881, %v455
        %v1883 = vpop.permute.xlu0 %1882
        %1886 = vset.pattern.permute.xlu0 0
        %1887 = vperm.xlu0 %1886, %v456
        %v1888 = vpop.permute.xlu0 %1887
        %1891 = vset.pattern.permute.xlu0 0
        %1892 = vperm.xlu0 %1891, %v457
        %v1893 = vpop.permute.xlu0 %1892
        %1896 = vset.pattern.permute.xlu0 0
        %1897 = vperm.xlu0 %1896, %v458
        %v1898 = vpop.permute.xlu0 %1897
        %1901 = vset.pattern.permute.xlu0 0
        %1902 = vperm.xlu0 %1901, %v459
        %v1903 = vpop.permute.xlu0 %1902
        %1906 = vset.pattern.permute.xlu0 0
        %1907 = vperm.xlu0 %1906, %v460
        %v1908 = vpop.permute.xlu0 %1907
        %1911 = vset.pattern.permute.xlu0 0
        %1912 = vperm.xlu0 %1911, %v461
        %v1913 = vpop.permute.xlu0 %1912
        %1916 = vset.pattern.permute.xlu0 0
        %1917 = vperm.xlu0 %1916, %v462
        %v1918 = vpop.permute.xlu0 %1917
        %1921 = vset.pattern.permute.xlu0 0
        %1922 = vperm.xlu0 %1921, %v463
        %v1923 = vpop.permute.xlu0 %1922
        %1926 = vset.pattern.permute.xlu0 0
        %1927 = vperm.xlu0 %1926, %v464
        %v1928 = vpop.permute.xlu0 %1927
        %1931 = vset.pattern.permute.xlu0 0
        %1932 = vperm.xlu0 %1931, %v465
        %v1933 = vpop.permute.xlu0 %1932
        %1936 = vset.pattern.permute.xlu0 0
        %1937 = vperm.xlu0 %1936, %v466
        %v1938 = vpop.permute.xlu0 %1937
        %1941 = vset.pattern.permute.xlu0 0
        %1942 = vperm.xlu0 %1941, %v467
        %v1943 = vpop.permute.xlu0 %1942
        %1946 = vset.pattern.permute.xlu0 0
        %1947 = vperm.xlu0 %1946, %v468
        %v1948 = vpop.permute.xlu0 %1947
        %1951 = vset.pattern.permute.xlu0 0
        %1952 = vperm.xlu0 %1951, %v469
        %v1953 = vpop.permute.xlu0 %1952
        %1956 = vset.pattern.permute.xlu0 0
        %1957 = vperm.xlu0 %1956, %v470
        %v1958 = vpop.permute.xlu0 %1957
        %1961 = vset.pattern.permute.xlu0 0
        %1962 = vperm.xlu0 %1961, %v471
        %v1963 = vpop.permute.xlu0 %1962
        %1966 = vset.pattern.permute.xlu0 0
        %1967 = vperm.xlu0 %1966, %v472
        %v1968 = vpop.permute.xlu0 %1967
        %1971 = vset.pattern.permute.xlu0 0
        %1972 = vperm.xlu0 %1971, %v473
        %v1973 = vpop.permute.xlu0 %1972
        %1976 = vset.pattern.permute.xlu0 0
        %1977 = vperm.xlu0 %1976, %v474
        %v1978 = vpop.permute.xlu0 %1977
        %1981 = vset.pattern.permute.xlu0 0
        %1982 = vperm.xlu0 %1981, %v475
        %v1983 = vpop.permute.xlu0 %1982
        %1986 = vset.pattern.permute.xlu0 0
        %1987 = vperm.xlu0 %1986, %v476
        %v1988 = vpop.permute.xlu0 %1987
        %1991 = vset.pattern.permute.xlu0 0
        %1992 = vperm.xlu0 %1991, %v477
        %v1993 = vpop.permute.xlu0 %1992
        %1996 = vset.pattern.permute.xlu0 0
        %1997 = vperm.xlu0 %1996, %v478
        %v1998 = vpop.permute.xlu0 %1997
        %2001 = vset.pattern.permute.xlu0 0
        %2002 = vperm.xlu0 %2001, %v479
        %v2003 = vpop.permute.xlu0 %2002
        %2006 = vset.pattern.permute.xlu0 0
        %2007 = vperm.xlu0 %2006, %v480
        %v2008 = vpop.permute.xlu0 %2007
        %2011 = vset.pattern.permute.xlu0 0
        %2012 = vperm.xlu0 %2011, %v481
        %v2013 = vpop.permute.xlu0 %2012
        %2016 = vset.pattern.permute.xlu0 0
        %2017 = vperm.xlu0 %2016, %v482
        %v2018 = vpop.permute.xlu0 %2017
        %2021 = vset.pattern.permute.xlu0 0
        %2022 = vperm.xlu0 %2021, %v483
        %v2023 = vpop.permute.xlu0 %2022
        %2026 = vset.pattern.permute.xlu0 0
        %2027 = vperm.xlu0 %2026, %v484
        %v2028 = vpop.permute.xlu0 %2027
        %2031 = vset.pattern.permute.xlu0 0
        %2032 = vperm.xlu0 %2031, %v485
        %v2033 = vpop.permute.xlu0 %2032
        %2036 = vset.pattern.permute.xlu0 0
        %2037 = vperm.xlu0 %2036, %v486
        %v2038 = vpop.permute.xlu0 %2037
        %2041 = vset.pattern.permute.xlu0 0
        %2042 = vperm.xlu0 %2041, %v487
        %v2043 = vpop.permute.xlu0 %2042
        %2046 = vset.pattern.permute.xlu0 0
        %2047 = vperm.xlu0 %2046, %v488
        %v2048 = vpop.permute.xlu0 %2047
        %2051 = vset.pattern.permute.xlu0 0
        %2052 = vperm.xlu0 %2051, %v489
        %v2053 = vpop.permute.xlu0 %2052
        %2056 = vset.pattern.permute.xlu0 0
        %2057 = vperm.xlu0 %2056, %v490
        %v2058 = vpop.permute.xlu0 %2057
        %2061 = vset.pattern.permute.xlu0 0
        %2062 = vperm.xlu0 %2061, %v491
        %v2063 = vpop.permute.xlu0 %2062
        %2066 = vset.pattern.permute.xlu0 0
        %2067 = vperm.xlu0 %2066, %v492
        %v2068 = vpop.permute.xlu0 %2067
        %2071 = vset.pattern.permute.xlu0 0
        %2072 = vperm.xlu0 %2071, %v493
        %v2073 = vpop.permute.xlu0 %2072
        %2076 = vset.pattern.permute.xlu0 0
        %2077 = vperm.xlu0 %2076, %v494
        %v2078 = vpop.permute.xlu0 %2077
        %2081 = vset.pattern.permute.xlu0 0
        %2082 = vperm.xlu0 %2081, %v495
        %v2083 = vpop.permute.xlu0 %2082
        %2086 = vset.pattern.permute.xlu0 0
        %2087 = vperm.xlu0 %2086, %v496
        %v2088 = vpop.permute.xlu0 %2087
        %2091 = vset.pattern.permute.xlu0 0
        %2092 = vperm.xlu0 %2091, %v497
        %v2093 = vpop.permute.xlu0 %2092
        %2096 = vset.pattern.permute.xlu0 0
        %2097 = vperm.xlu0 %2096, %v498
        %v2098 = vpop.permute.xlu0 %2097
        %2101 = vset.pattern.permute.xlu0 0
        %2102 = vperm.xlu0 %2101, %v499
        %v2103 = vpop.permute.xlu0 %2102
        %2106 = vset.pattern.permute.xlu0 0
        %2107 = vperm.xlu0 %2106, %v500
        %v2108 = vpop.permute.xlu0 %2107
        %2111 = vset.pattern.permute.xlu0 0
        %2112 = vperm.xlu0 %2111, %v501
        %v2113 = vpop.permute.xlu0 %2112
        %2116 = vset.pattern.permute.xlu0 0
        %2117 = vperm.xlu0 %2116, %v502
        %v2118 = vpop.permute.xlu0 %2117
        %2121 = vset.pattern.permute.xlu0 0
        %2122 = vperm.xlu0 %2121, %v503
        %v2123 = vpop.permute.xlu0 %2122
        %2126 = vset.pattern.permute.xlu0 0
        %2127 = vperm.xlu0 %2126, %v504
        %v2128 = vpop.permute.xlu0 %2127
        %2131 = vset.pattern.permute.xlu0 0
        %2132 = vperm.xlu0 %2131, %v505
        %v2133 = vpop.permute.xlu0 %2132
        %2136 = vset.pattern.permute.xlu0 0
        %2137 = vperm.xlu0 %2136, %v506
        %v2138 = vpop.permute.xlu0 %2137
        %2141 = vset.pattern.permute.xlu0 0
        %2142 = vperm.xlu0 %2141, %v507
        %v2143 = vpop.permute.xlu0 %2142
        %2146 = vset.pattern.permute.xlu0 0
        %2147 = vperm.xlu0 %2146, %v508
        %v2148 = vpop.permute.xlu0 %2147
        %2151 = vset.pattern.permute.xlu0 0
        %2152 = vperm.xlu0 %2151, %v509
        %v2153 = vpop.permute.xlu0 %2152
        %2156 = vset.pattern.permute.xlu0 0
        %2157 = vperm.xlu0 %2156, %v510
        %v2158 = vpop.permute.xlu0 %2157
        %2161 = vset.pattern.permute.xlu0 0
        %2162 = vperm.xlu0 %2161, %v511
        %v2163 = vpop.permute.xlu0 %2162
        %2166 = vset.pattern.permute.xlu0 0
        %2167 = vperm.xlu0 %2166, %v512
        %v2168 = vpop.permute.xlu0 %2167
        %2171 = vset.pattern.permute.xlu0 0
        %2172 = vperm.xlu0 %2171, %v513
        %v2173 = vpop.permute.xlu0 %2172
        %2176 = vset.pattern.permute.xlu0 0
        %2177 = vperm.xlu0 %2176, %v514
        %v2178 = vpop.permute.xlu0 %2177
        %2181 = vset.pattern.permute.xlu0 0
        %2182 = vperm.xlu0 %2181, %v515
        %v2183 = vpop.permute.xlu0 %2182
        %2186 = vset.pattern.permute.xlu0 0
        %2187 = vperm.xlu0 %2186, %v516
        %v2188 = vpop.permute.xlu0 %2187
        %2191 = vset.pattern.permute.xlu0 0
        %2192 = vperm.xlu0 %2191, %v517
        %v2193 = vpop.permute.xlu0 %2192
        %2196 = vset.pattern.permute.xlu0 0
        %2197 = vperm.xlu0 %2196, %v518
        %v2198 = vpop.permute.xlu0 %2197
        %2201 = vset.pattern.permute.xlu0 0
        %2202 = vperm.xlu0 %2201, %v519
        %v2203 = vpop.permute.xlu0 %2202
        %2206 = vset.pattern.permute.xlu0 0
        %2207 = vperm.xlu0 %2206, %v520
        %v2208 = vpop.permute.xlu0 %2207
        %2211 = vset.pattern.permute.xlu0 0
        %2212 = vperm.xlu0 %2211, %v521
        %v2213 = vpop.permute.xlu0 %2212
        %2216 = vset.pattern.permute.xlu0 0
        %2217 = vperm.xlu0 %2216, %v522
        %v2218 = vpop.permute.xlu0 %2217
        %2221 = vset.pattern.permute.xlu0 0
        %2222 = vperm.xlu0 %2221, %v523
        %v2223 = vpop.permute.xlu0 %2222
        %2226 = vset.pattern.permute.xlu0 0
        %2227 = vperm.xlu0 %2226, %v524
        %v2228 = vpop.permute.xlu0 %2227
        %2231 = vset.pattern.permute.xlu0 0
        %2232 = vperm.xlu0 %2231, %v525
        %v2233 = vpop.permute.xlu0 %2232
        %2236 = vset.pattern.permute.xlu0 0
        %2237 = vperm.xlu0 %2236, %v526
        %v2238 = vpop.permute.xlu0 %2237
        %2241 = vset.pattern.permute.xlu0 0
        %2242 = vperm.xlu0 %2241, %v527
        %v2243 = vpop.permute.xlu0 %2242
        %2246 = vset.pattern.permute.xlu0 0
        %2247 = vperm.xlu0 %2246, %v528
        %v2248 = vpop.permute.xlu0 %2247
        %2251 = vset.pattern.permute.xlu0 0
        %2252 = vperm.xlu0 %2251, %v529
        %v2253 = vpop.permute.xlu0 %2252
        %2256 = vset.pattern.permute.xlu0 0
        %2257 = vperm.xlu0 %2256, %v530
        %v2258 = vpop.permute.xlu0 %2257
        %2261 = vset.pattern.permute.xlu0 0
        %2262 = vperm.xlu0 %2261, %v531
        %v2263 = vpop.permute.xlu0 %2262
        %2266 = vset.pattern.permute.xlu0 0
        %2267 = vperm.xlu0 %2266, %v532
        %v2268 = vpop.permute.xlu0 %2267
        %2271 = vset.pattern.permute.xlu0 0
        %2272 = vperm.xlu0 %2271, %v533
        %v2273 = vpop.permute.xlu0 %2272
        %2276 = vset.pattern.permute.xlu0 0
        %2277 = vperm.xlu0 %2276, %v534
        %v2278 = vpop.permute.xlu0 %2277
        %2281 = vset.pattern.permute.xlu0 0
        %2282 = vperm.xlu0 %2281, %v535
        %v2283 = vpop.permute.xlu0 %2282
        %2286 = vset.pattern.permute.xlu0 0
        %2287 = vperm.xlu0 %2286, %v536
        %v2288 = vpop.permute.xlu0 %2287
        %2291 = vset.pattern.permute.xlu0 0
        %2292 = vperm.xlu0 %2291, %v537
        %v2293 = vpop.permute.xlu0 %2292
        %2296 = vset.pattern.permute.xlu0 0
        %2297 = vperm.xlu0 %2296, %v538
        %v2298 = vpop.permute.xlu0 %2297
        %2301 = vset.pattern.permute.xlu0 0
        %2302 = vperm.xlu0 %2301, %v539
        %v2303 = vpop.permute.xlu0 %2302
        %2306 = vset.pattern.permute.xlu0 0
        %2307 = vperm.xlu0 %2306, %v540
        %v2308 = vpop.permute.xlu0 %2307
        %2311 = vset.pattern.permute.xlu0 0
        %2312 = vperm.xlu0 %2311, %v541
        %v2313 = vpop.permute.xlu0 %2312
        %2316 = vset.pattern.permute.xlu0 0
        %2317 = vperm.xlu0 %2316, %v542
        %v2318 = vpop.permute.xlu0 %2317
        %2321 = vset.pattern.permute.xlu0 0
        %2322 = vperm.xlu0 %2321, %v543
        %v2323 = vpop.permute.xlu0 %2322
        %2326 = vset.pattern.permute.xlu0 0
        %2327 = vperm.xlu0 %2326, %v544
        %v2328 = vpop.permute.xlu0 %2327
        %2331 = vset.pattern.permute.xlu0 0
        %2332 = vperm.xlu0 %2331, %v545
        %v2333 = vpop.permute.xlu0 %2332
        %2336 = vset.pattern.permute.xlu0 0
        %2337 = vperm.xlu0 %2336, %v546
        %v2338 = vpop.permute.xlu0 %2337
        %2341 = vset.pattern.permute.xlu0 0
        %2342 = vperm.xlu0 %2341, %v547
        %v2343 = vpop.permute.xlu0 %2342
        %2346 = vset.pattern.permute.xlu0 0
        %2347 = vperm.xlu0 %2346, %v548
        %v2348 = vpop.permute.xlu0 %2347
        %2351 = vset.pattern.permute.xlu0 0
        %2352 = vperm.xlu0 %2351, %v549
        %v2353 = vpop.permute.xlu0 %2352
        %2356 = vset.pattern.permute.xlu0 0
        %2357 = vperm.xlu0 %2356, %v550
        %v2358 = vpop.permute.xlu0 %2357
        %2361 = vset.pattern.permute.xlu0 0
        %2362 = vperm.xlu0 %2361, %v551
        %v2363 = vpop.permute.xlu0 %2362
        %2366 = vset.pattern.permute.xlu0 0
        %2367 = vperm.xlu0 %2366, %v552
        %v2368 = vpop.permute.xlu0 %2367
        %2371 = vset.pattern.permute.xlu0 0
        %2372 = vperm.xlu0 %2371, %v553
        %v2373 = vpop.permute.xlu0 %2372
        %2376 = vset.pattern.permute.xlu0 0
        %2377 = vperm.xlu0 %2376, %v554
        %v2378 = vpop.permute.xlu0 %2377
        %2381 = vset.pattern.permute.xlu0 0
        %2382 = vperm.xlu0 %2381, %v555
        %v2383 = vpop.permute.xlu0 %2382
        %2386 = vset.pattern.permute.xlu0 0
        %2387 = vperm.xlu0 %2386, %v556
        %v2388 = vpop.permute.xlu0 %2387
        %2391 = vset.pattern.permute.xlu0 0
        %2392 = vperm.xlu0 %2391, %v557
        %v2393 = vpop.permute.xlu0 %2392
        %2396 = vset.pattern.permute.xlu0 0
        %2397 = vperm.xlu0 %2396, %v558
        %v2398 = vpop.permute.xlu0 %2397
        %2401 = vset.pattern.permute.xlu0 0
        %2402 = vperm.xlu0 %2401, %v559
        %v2403 = vpop.permute.xlu0 %2402
        %2406 = vset.pattern.permute.xlu0 0
        %2407 = vperm.xlu0 %2406, %v560
        %v2408 = vpop.permute.xlu0 %2407
        %2411 = vset.pattern.permute.xlu0 0
        %2412 = vperm.xlu0 %2411, %v561
        %v2413 = vpop.permute.xlu0 %2412
        %2416 = vset.pattern.permute.xlu0 0
        %2417 = vperm.xlu0 %2416, %v562
        %v2418 = vpop.permute.xlu0 %2417
        %2421 = vset.pattern.permute.xlu0 0
        %2422 = vperm.xlu0 %2421, %v563
        %v2423 = vpop.permute.xlu0 %2422
        %2426 = vset.pattern.permute.xlu0 0
        %2427 = vperm.xlu0 %2426, %v564
        %v2428 = vpop.permute.xlu0 %2427
        %2431 = vset.pattern.permute.xlu0 0
        %2432 = vperm.xlu0 %2431, %v565
        %v2433 = vpop.permute.xlu0 %2432
        %2436 = vset.pattern.permute.xlu0 0
        %2437 = vperm.xlu0 %2436, %v566
        %v2438 = vpop.permute.xlu0 %2437
        %2441 = vset.pattern.permute.xlu0 0
        %2442 = vperm.xlu0 %2441, %v567
        %v2443 = vpop.permute.xlu0 %2442
        %2446 = vset.pattern.permute.xlu0 0
        %2447 = vperm.xlu0 %2446, %v568
        %v2448 = vpop.permute.xlu0 %2447
        %v2451 = vlaneseq
        %v2452 = vshrl.u32 %v2451, 7
        %v2453 = vsub.s32 0, %v2452
        %v2454 = vrot.slane %v569, %v2453
        %v2456 = vsub.f32 %v573, %v2454
        %v2457 = vsub.f32 %v578, %v2454
        %v2458 = vsub.f32 %v583, %v2454
        %v2459 = vsub.f32 %v588, %v2454
        %v2460 = vsub.f32 %v593, %v2454
        %v2461 = vsub.f32 %v598, %v2454
        %v2462 = vsub.f32 %v603, %v2454
        %v2463 = vsub.f32 %v608, %v2454
        %v2464 = vsub.f32 %v613, %v2454
        %v2465 = vsub.f32 %v618, %v2454
        %v2466 = vsub.f32 %v623, %v2454
        %v2467 = vsub.f32 %v628, %v2454
        %v2468 = vsub.f32 %v633, %v2454
        %v2469 = vsub.f32 %v638, %v2454
        %v2470 = vsub.f32 %v643, %v2454
        %v2471 = vsub.f32 %v648, %v2454
        %v2472 = vsub.f32 %v653, %v2454
        %v2473 = vsub.f32 %v658, %v2454
        %v2474 = vsub.f32 %v663, %v2454
        %v2475 = vsub.f32 %v668, %v2454
        %v2476 = vsub.f32 %v673, %v2454
        %v2477 = vsub.f32 %v678, %v2454
        %v2478 = vsub.f32 %v683, %v2454
        %v2479 = vsub.f32 %v688, %v2454
        %v2480 = vsub.f32 %v693, %v2454
        %v2481 = vsub.f32 %v698, %v2454
        %v2482 = vsub.f32 %v703, %v2454
        %v2483 = vsub.f32 %v708, %v2454
        %v2484 = vsub.f32 %v713, %v2454
        %v2485 = vsub.f32 %v718, %v2454
        %v2486 = vsub.f32 %v723, %v2454
        %v2487 = vsub.f32 %v728, %v2454
        %v2488 = vsub.f32 %v733, %v2454
        %v2489 = vsub.f32 %v738, %v2454
        %v2490 = vsub.f32 %v743, %v2454
        %v2491 = vsub.f32 %v748, %v2454
        %v2492 = vsub.f32 %v753, %v2454
        %v2493 = vsub.f32 %v758, %v2454
        %v2494 = vsub.f32 %v763, %v2454
        %v2495 = vsub.f32 %v768, %v2454
        %v2496 = vsub.f32 %v773, %v2454
        %v2497 = vsub.f32 %v778, %v2454
        %v2498 = vsub.f32 %v783, %v2454
        %v2499 = vsub.f32 %v788, %v2454
        %v2500 = vsub.f32 %v793, %v2454
        %v2501 = vsub.f32 %v798, %v2454
        %v2502 = vsub.f32 %v803, %v2454
        %v2503 = vsub.f32 %v808, %v2454
        %v2504 = vsub.f32 %v813, %v2454
        %v2505 = vsub.f32 %v818, %v2454
        %v2506 = vsub.f32 %v823, %v2454
        %v2507 = vsub.f32 %v828, %v2454
        %v2508 = vsub.f32 %v833, %v2454
        %v2509 = vsub.f32 %v838, %v2454
        %v2510 = vsub.f32 %v843, %v2454
        %v2511 = vsub.f32 %v848, %v2454
        %v2512 = vsub.f32 %v853, %v2454
        %v2513 = vsub.f32 %v858, %v2454
        %v2514 = vsub.f32 %v863, %v2454
        %v2515 = vsub.f32 %v868, %v2454
        %v2516 = vsub.f32 %v873, %v2454
        %v2517 = vsub.f32 %v878, %v2454
        %v2518 = vsub.f32 %v883, %v2454
        %v2519 = vsub.f32 %v888, %v2454
        %v2520 = vsub.f32 %v893, %v2454
        %v2521 = vsub.f32 %v898, %v2454
        %v2522 = vsub.f32 %v903, %v2454
        %v2523 = vsub.f32 %v908, %v2454
        %v2524 = vsub.f32 %v913, %v2454
        %v2525 = vsub.f32 %v918, %v2454
        %v2526 = vsub.f32 %v923, %v2454
        %v2527 = vsub.f32 %v928, %v2454
        %v2528 = vsub.f32 %v933, %v2454
        %v2529 = vsub.f32 %v938, %v2454
        %v2530 = vsub.f32 %v943, %v2454
        %v2531 = vsub.f32 %v948, %v2454
        %v2532 = vsub.f32 %v953, %v2454
        %v2533 = vsub.f32 %v958, %v2454
        %v2534 = vsub.f32 %v963, %v2454
        %v2535 = vsub.f32 %v968, %v2454
        %v2536 = vsub.f32 %v973, %v2454
        %v2537 = vsub.f32 %v978, %v2454
        %v2538 = vsub.f32 %v983, %v2454
        %v2539 = vsub.f32 %v988, %v2454
        %v2540 = vsub.f32 %v993, %v2454
        %v2541 = vsub.f32 %v998, %v2454
        %v2542 = vsub.f32 %v1003, %v2454
        %v2543 = vsub.f32 %v1008, %v2454
        %v2544 = vsub.f32 %v1013, %v2454
        %v2545 = vsub.f32 %v1018, %v2454
        %v2546 = vsub.f32 %v1023, %v2454
        %v2547 = vsub.f32 %v1028, %v2454
        %v2548 = vsub.f32 %v1033, %v2454
        %v2549 = vsub.f32 %v1038, %v2454
        %v2550 = vsub.f32 %v1043, %v2454
        %v2551 = vsub.f32 %v1048, %v2454
        %v2552 = vsub.f32 %v1053, %v2454
        %v2553 = vsub.f32 %v1058, %v2454
        %v2554 = vsub.f32 %v1063, %v2454
        %v2555 = vsub.f32 %v1068, %v2454
        %v2556 = vsub.f32 %v1073, %v2454
        %v2557 = vsub.f32 %v1078, %v2454
        %v2558 = vsub.f32 %v1083, %v2454
        %v2559 = vsub.f32 %v1088, %v2454
        %v2560 = vsub.f32 %v1093, %v2454
        %v2561 = vsub.f32 %v1098, %v2454
        %v2562 = vsub.f32 %v1103, %v2454
        %v2563 = vsub.f32 %v1108, %v2454
        %v2564 = vsub.f32 %v1113, %v2454
        %v2565 = vsub.f32 %v1118, %v2454
        %v2566 = vsub.f32 %v1123, %v2454
        %v2567 = vsub.f32 %v1128, %v2454
        %v2568 = vsub.f32 %v1133, %v2454
        %v2569 = vsub.f32 %v1138, %v2454
        %v2570 = vsub.f32 %v1143, %v2454
        %v2571 = vsub.f32 %v1148, %v2454
        %v2572 = vsub.f32 %v1153, %v2454
        %v2573 = vsub.f32 %v1158, %v2454
        %v2574 = vsub.f32 %v1163, %v2454
        %v2575 = vsub.f32 %v1168, %v2454
        %v2576 = vsub.f32 %v1173, %v2454
        %v2577 = vsub.f32 %v1178, %v2454
        %v2578 = vsub.f32 %v1183, %v2454
        %v2579 = vsub.f32 %v1188, %v2454
        %v2580 = vsub.f32 %v1193, %v2454
        %v2581 = vsub.f32 %v1198, %v2454
        %v2582 = vsub.f32 %v1203, %v2454
        %v2583 = vsub.f32 %v1208, %v2454
        %v2584 = vsub.f32 %v1213, %v2454
        %v2585 = vsub.f32 %v1218, %v2454
        %v2586 = vsub.f32 %v1223, %v2454
        %v2587 = vsub.f32 %v1228, %v2454
        %v2588 = vsub.f32 %v1233, %v2454
        %v2589 = vsub.f32 %v1238, %v2454
        %v2590 = vsub.f32 %v1243, %v2454
        %v2591 = vsub.f32 %v1248, %v2454
        %v2592 = vsub.f32 %v1253, %v2454
        %v2593 = vsub.f32 %v1258, %v2454
        %v2594 = vsub.f32 %v1263, %v2454
        %v2595 = vsub.f32 %v1268, %v2454
        %v2596 = vsub.f32 %v1273, %v2454
        %v2597 = vsub.f32 %v1278, %v2454
        %v2598 = vsub.f32 %v1283, %v2454
        %v2599 = vsub.f32 %v1288, %v2454
        %v2600 = vsub.f32 %v1293, %v2454
        %v2601 = vsub.f32 %v1298, %v2454
        %v2602 = vsub.f32 %v1303, %v2454
        %v2603 = vsub.f32 %v1308, %v2454
        %v2604 = vsub.f32 %v1313, %v2454
        %v2605 = vsub.f32 %v1318, %v2454
        %v2606 = vsub.f32 %v1323, %v2454
        %v2607 = vsub.f32 %v1328, %v2454
        %v2608 = vsub.f32 %v1333, %v2454
        %v2609 = vsub.f32 %v1338, %v2454
        %v2610 = vsub.f32 %v1343, %v2454
        %v2611 = vsub.f32 %v1348, %v2454
        %v2612 = vsub.f32 %v1353, %v2454
        %v2613 = vsub.f32 %v1358, %v2454
        %v2614 = vsub.f32 %v1363, %v2454
        %v2615 = vsub.f32 %v1368, %v2454
        %v2616 = vsub.f32 %v1373, %v2454
        %v2617 = vsub.f32 %v1378, %v2454
        %v2618 = vsub.f32 %v1383, %v2454
        %v2619 = vsub.f32 %v1388, %v2454
        %v2620 = vsub.f32 %v1393, %v2454
        %v2621 = vsub.f32 %v1398, %v2454
        %v2622 = vsub.f32 %v1403, %v2454
        %v2623 = vsub.f32 %v1408, %v2454
        %v2624 = vsub.f32 %v1413, %v2454
        %v2625 = vsub.f32 %v1418, %v2454
        %v2626 = vsub.f32 %v1423, %v2454
        %v2627 = vsub.f32 %v1428, %v2454
        %v2628 = vsub.f32 %v1433, %v2454
        %v2629 = vsub.f32 %v1438, %v2454
        %v2630 = vsub.f32 %v1443, %v2454
        %v2631 = vsub.f32 %v1448, %v2454
        %v2632 = vsub.f32 %v1453, %v2454
        %v2633 = vsub.f32 %v1458, %v2454
        %v2634 = vsub.f32 %v1463, %v2454
        %v2635 = vsub.f32 %v1468, %v2454
        %v2636 = vsub.f32 %v1473, %v2454
        %v2637 = vsub.f32 %v1478, %v2454
        %v2638 = vsub.f32 %v1483, %v2454
        %v2639 = vsub.f32 %v1488, %v2454
        %v2640 = vsub.f32 %v1493, %v2454
        %v2641 = vsub.f32 %v1498, %v2454
        %v2642 = vsub.f32 %v1503, %v2454
        %v2643 = vsub.f32 %v1508, %v2454
        %v2644 = vsub.f32 %v1513, %v2454
        %v2645 = vsub.f32 %v1518, %v2454
        %v2646 = vsub.f32 %v1523, %v2454
        %v2647 = vsub.f32 %v1528, %v2454
        %v2648 = vsub.f32 %v1533, %v2454
        %v2649 = vsub.f32 %v1538, %v2454
        %v2650 = vsub.f32 %v1543, %v2454
        %v2651 = vsub.f32 %v1548, %v2454
        %v2652 = vsub.f32 %v1553, %v2454
        %v2653 = vsub.f32 %v1558, %v2454
        %v2654 = vsub.f32 %v1563, %v2454
        %v2655 = vsub.f32 %v1568, %v2454
        %v2656 = vsub.f32 %v1573, %v2454
        %v2657 = vsub.f32 %v1578, %v2454
        %v2658 = vsub.f32 %v1583, %v2454
        %v2659 = vsub.f32 %v1588, %v2454
        %v2660 = vsub.f32 %v1593, %v2454
        %v2661 = vsub.f32 %v1598, %v2454
        %v2662 = vsub.f32 %v1603, %v2454
        %v2663 = vsub.f32 %v1608, %v2454
        %v2664 = vsub.f32 %v1613, %v2454
        %v2665 = vsub.f32 %v1618, %v2454
        %v2666 = vsub.f32 %v1623, %v2454
        %v2667 = vsub.f32 %v1628, %v2454
        %v2668 = vsub.f32 %v1633, %v2454
        %v2669 = vsub.f32 %v1638, %v2454
        %v2670 = vsub.f32 %v1643, %v2454
        %v2671 = vsub.f32 %v1648, %v2454
        %v2672 = vsub.f32 %v1653, %v2454
        %v2673 = vsub.f32 %v1658, %v2454
        %v2674 = vsub.f32 %v1663, %v2454
        %v2675 = vsub.f32 %v1668, %v2454
        %v2676 = vsub.f32 %v1673, %v2454
        %v2677 = vsub.f32 %v1678, %v2454
        %v2678 = vsub.f32 %v1683, %v2454
        %v2679 = vsub.f32 %v1688, %v2454
        %v2680 = vsub.f32 %v1693, %v2454
        %v2681 = vsub.f32 %v1698, %v2454
        %v2682 = vsub.f32 %v1703, %v2454
        %v2683 = vsub.f32 %v1708, %v2454
        %v2684 = vsub.f32 %v1713, %v2454
        %v2685 = vsub.f32 %v1718, %v2454
        %v2686 = vsub.f32 %v1723, %v2454
        %v2687 = vsub.f32 %v1728, %v2454
        %v2688 = vsub.f32 %v1733, %v2454
        %v2689 = vsub.f32 %v1738, %v2454
        %v2690 = vsub.f32 %v1743, %v2454
        %v2691 = vsub.f32 %v1748, %v2454
        %v2692 = vsub.f32 %v1753, %v2454
        %v2693 = vsub.f32 %v1758, %v2454
        %v2694 = vsub.f32 %v1763, %v2454
        %v2695 = vsub.f32 %v1768, %v2454
        %v2696 = vsub.f32 %v1773, %v2454
        %v2697 = vsub.f32 %v1778, %v2454
        %v2698 = vsub.f32 %v1783, %v2454
        %v2699 = vsub.f32 %v1788, %v2454
        %v2700 = vsub.f32 %v1793, %v2454
        %v2701 = vsub.f32 %v1798, %v2454
        %v2702 = vsub.f32 %v1803, %v2454
        %v2703 = vsub.f32 %v1808, %v2454
        %v2704 = vsub.f32 %v1813, %v2454
        %v2705 = vsub.f32 %v1818, %v2454
        %v2706 = vsub.f32 %v1823, %v2454
        %v2707 = vsub.f32 %v1828, %v2454
        %v2708 = vsub.f32 %v1833, %v2454
        %v2709 = vsub.f32 %v1838, %v2454
        %v2710 = vsub.f32 %v1843, %v2454
        %v2711 = vsub.f32 %v1848, %v2454
        %v2712 = vsub.f32 %v1853, %v2454
        %v2713 = vsub.f32 %v1858, %v2454
        %v2714 = vsub.f32 %v1863, %v2454
        %v2715 = vsub.f32 %v1868, %v2454
        %v2716 = vsub.f32 %v1873, %v2454
        %v2717 = vsub.f32 %v1878, %v2454
        %v2718 = vsub.f32 %v1883, %v2454
        %v2719 = vsub.f32 %v1888, %v2454
        %v2720 = vsub.f32 %v1893, %v2454
        %v2721 = vsub.f32 %v1898, %v2454
        %v2722 = vsub.f32 %v1903, %v2454
        %v2723 = vsub.f32 %v1908, %v2454
        %v2724 = vsub.f32 %v1913, %v2454
        %v2725 = vsub.f32 %v1918, %v2454
        %v2726 = vsub.f32 %v1923, %v2454
        %v2727 = vsub.f32 %v1928, %v2454
        %v2728 = vsub.f32 %v1933, %v2454
        %v2729 = vsub.f32 %v1938, %v2454
        %v2730 = vsub.f32 %v1943, %v2454
        %v2731 = vsub.f32 %v1948, %v2454
        %v2732 = vsub.f32 %v1953, %v2454
        %v2733 = vsub.f32 %v1958, %v2454
        %v2734 = vsub.f32 %v1963, %v2454
        %v2735 = vsub.f32 %v1968, %v2454
        %v2736 = vsub.f32 %v1973, %v2454
        %v2737 = vsub.f32 %v1978, %v2454
        %v2738 = vsub.f32 %v1983, %v2454
        %v2739 = vsub.f32 %v1988, %v2454
        %v2740 = vsub.f32 %v1993, %v2454
        %v2741 = vsub.f32 %v1998, %v2454
        %v2742 = vsub.f32 %v2003, %v2454
        %v2743 = vsub.f32 %v2008, %v2454
        %v2744 = vsub.f32 %v2013, %v2454
        %v2745 = vsub.f32 %v2018, %v2454
        %v2746 = vsub.f32 %v2023, %v2454
        %v2747 = vsub.f32 %v2028, %v2454
        %v2748 = vsub.f32 %v2033, %v2454
        %v2749 = vsub.f32 %v2038, %v2454
        %v2750 = vsub.f32 %v2043, %v2454
        %v2751 = vsub.f32 %v2048, %v2454
        %v2752 = vsub.f32 %v2053, %v2454
        %v2753 = vsub.f32 %v2058, %v2454
        %v2754 = vsub.f32 %v2063, %v2454
        %v2755 = vsub.f32 %v2068, %v2454
        %v2756 = vsub.f32 %v2073, %v2454
        %v2757 = vsub.f32 %v2078, %v2454
        %v2758 = vsub.f32 %v2083, %v2454
        %v2759 = vsub.f32 %v2088, %v2454
        %v2760 = vsub.f32 %v2093, %v2454
        %v2761 = vsub.f32 %v2098, %v2454
        %v2762 = vsub.f32 %v2103, %v2454
        %v2763 = vsub.f32 %v2108, %v2454
        %v2764 = vsub.f32 %v2113, %v2454
        %v2765 = vsub.f32 %v2118, %v2454
        %v2766 = vsub.f32 %v2123, %v2454
        %v2767 = vsub.f32 %v2128, %v2454
        %v2768 = vsub.f32 %v2133, %v2454
        %v2769 = vsub.f32 %v2138, %v2454
        %v2770 = vsub.f32 %v2143, %v2454
        %v2771 = vsub.f32 %v2148, %v2454
        %v2772 = vsub.f32 %v2153, %v2454
        %v2773 = vsub.f32 %v2158, %v2454
        %v2774 = vsub.f32 %v2163, %v2454
        %v2775 = vsub.f32 %v2168, %v2454
        %v2776 = vsub.f32 %v2173, %v2454
        %v2777 = vsub.f32 %v2178, %v2454
        %v2778 = vsub.f32 %v2183, %v2454
        %v2779 = vsub.f32 %v2188, %v2454
        %v2780 = vsub.f32 %v2193, %v2454
        %v2781 = vsub.f32 %v2198, %v2454
        %v2782 = vsub.f32 %v2203, %v2454
        %v2783 = vsub.f32 %v2208, %v2454
        %v2784 = vsub.f32 %v2213, %v2454
        %v2785 = vsub.f32 %v2218, %v2454
        %v2786 = vsub.f32 %v2223, %v2454
        %v2787 = vsub.f32 %v2228, %v2454
        %v2788 = vsub.f32 %v2233, %v2454
        %v2789 = vsub.f32 %v2238, %v2454
        %v2790 = vsub.f32 %v2243, %v2454
        %v2791 = vsub.f32 %v2248, %v2454
        %v2792 = vsub.f32 %v2253, %v2454
        %v2793 = vsub.f32 %v2258, %v2454
        %v2794 = vsub.f32 %v2263, %v2454
        %v2795 = vsub.f32 %v2268, %v2454
        %v2796 = vsub.f32 %v2273, %v2454
        %v2797 = vsub.f32 %v2278, %v2454
        %v2798 = vsub.f32 %v2283, %v2454
        %v2799 = vsub.f32 %v2288, %v2454
        %v2800 = vsub.f32 %v2293, %v2454
        %v2801 = vsub.f32 %v2298, %v2454
        %v2802 = vsub.f32 %v2303, %v2454
        %v2803 = vsub.f32 %v2308, %v2454
        %v2804 = vsub.f32 %v2313, %v2454
        %v2805 = vsub.f32 %v2318, %v2454
        %v2806 = vsub.f32 %v2323, %v2454
        %v2807 = vsub.f32 %v2328, %v2454
        %v2808 = vsub.f32 %v2333, %v2454
        %v2809 = vsub.f32 %v2338, %v2454
        %v2810 = vsub.f32 %v2343, %v2454
        %v2811 = vsub.f32 %v2348, %v2454
        %v2812 = vsub.f32 %v2353, %v2454
        %v2813 = vsub.f32 %v2358, %v2454
        %v2814 = vsub.f32 %v2363, %v2454
        %v2815 = vsub.f32 %v2368, %v2454
        %v2816 = vsub.f32 %v2373, %v2454
        %v2817 = vsub.f32 %v2378, %v2454
        %v2818 = vsub.f32 %v2383, %v2454
        %v2819 = vsub.f32 %v2388, %v2454
        %v2820 = vsub.f32 %v2393, %v2454
        %v2821 = vsub.f32 %v2398, %v2454
        %v2822 = vsub.f32 %v2403, %v2454
        %v2823 = vsub.f32 %v2408, %v2454
        %v2824 = vsub.f32 %v2413, %v2454
        %v2825 = vsub.f32 %v2418, %v2454
        %v2826 = vsub.f32 %v2423, %v2454
        %v2827 = vsub.f32 %v2428, %v2454
        %v2828 = vsub.f32 %v2433, %v2454
        %v2829 = vsub.f32 %v2438, %v2454
        %v2830 = vsub.f32 %v2443, %v2454
        %v2831 = vsub.f32 %v2448, %v2454
        %s2832 = sld [smem:[#allocation2]]
        %v2833 = vstv %s2832
        %v2834 = vmul.f32 %v2833, %v2456
        %v2835 = vmul.f32 %v2833, %v2457
        %v2836 = vmul.f32 %v2833, %v2458
        %v2837 = vmul.f32 %v2833, %v2459
        %v2838 = vmul.f32 %v2833, %v2460
        %v2839 = vmul.f32 %v2833, %v2461
        %v2840 = vmul.f32 %v2833, %v2462
        %v2841 = vmul.f32 %v2833, %v2463
        %v2842 = vmul.f32 %v2833, %v2464
        %v2843 = vmul.f32 %v2833, %v2465
        %v2844 = vmul.f32 %v2833, %v2466
        %v2845 = vmul.f32 %v2833, %v2467
        %v2846 = vmul.f32 %v2833, %v2468
        %v2847 = vmul.f32 %v2833, %v2469
        %v2848 = vmul.f32 %v2833, %v2470
        %v2849 = vmul.f32 %v2833, %v2471
        %v2850 = vmul.f32 %v2833, %v2472
        %v2851 = vmul.f32 %v2833, %v2473
        %v2852 = vmul.f32 %v2833, %v2474
        %v2853 = vmul.f32 %v2833, %v2475
        %v2854 = vmul.f32 %v2833, %v2476
        %v2855 = vmul.f32 %v2833, %v2477
        %v2856 = vmul.f32 %v2833, %v2478
        %v2857 = vmul.f32 %v2833, %v2479
        %v2858 = vmul.f32 %v2833, %v2480
        %v2859 = vmul.f32 %v2833, %v2481
        %v2860 = vmul.f32 %v2833, %v2482
        %v2861 = vmul.f32 %v2833, %v2483
        %v2862 = vmul.f32 %v2833, %v2484
        %v2863 = vmul.f32 %v2833, %v2485
        %v2864 = vmul.f32 %v2833, %v2486
        %v2865 = vmul.f32 %v2833, %v2487
        %v2866 = vmul.f32 %v2833, %v2488
        %v2867 = vmul.f32 %v2833, %v2489
        %v2868 = vmul.f32 %v2833, %v2490
        %v2869 = vmul.f32 %v2833, %v2491
        %v2870 = vmul.f32 %v2833, %v2492
        %v2871 = vmul.f32 %v2833, %v2493
        %v2872 = vmul.f32 %v2833, %v2494
        %v2873 = vmul.f32 %v2833, %v2495
        %v2874 = vmul.f32 %v2833, %v2496
        %v2875 = vmul.f32 %v2833, %v2497
        %v2876 = vmul.f32 %v2833, %v2498
        %v2877 = vmul.f32 %v2833, %v2499
        %v2878 = vmul.f32 %v2833, %v2500
        %v2879 = vmul.f32 %v2833, %v2501
        %v2880 = vmul.f32 %v2833, %v2502
        %v2881 = vmul.f32 %v2833, %v2503
        %v2882 = vmul.f32 %v2833, %v2504
        %v2883 = vmul.f32 %v2833, %v2505
        %v2884 = vmul.f32 %v2833, %v2506
        %v2885 = vmul.f32 %v2833, %v2507
        %v2886 = vmul.f32 %v2833, %v2508
        %v2887 = vmul.f32 %v2833, %v2509
        %v2888 = vmul.f32 %v2833, %v2510
        %v2889 = vmul.f32 %v2833, %v2511
        %v2890 = vmul.f32 %v2833, %v2512
        %v2891 = vmul.f32 %v2833, %v2513
        %v2892 = vmul.f32 %v2833, %v2514
        %v2893 = vmul.f32 %v2833, %v2515
        %v2894 = vmul.f32 %v2833, %v2516
        %v2895 = vmul.f32 %v2833, %v2517
        %v2896 = vmul.f32 %v2833, %v2518
        %v2897 = vmul.f32 %v2833, %v2519
        %v2898 = vmul.f32 %v2833, %v2520
        %v2899 = vmul.f32 %v2833, %v2521
        %v2900 = vmul.f32 %v2833, %v2522
        %v2901 = vmul.f32 %v2833, %v2523
        %v2902 = vmul.f32 %v2833, %v2524
        %v2903 = vmul.f32 %v2833, %v2525
        %v2904 = vmul.f32 %v2833, %v2526
        %v2905 = vmul.f32 %v2833, %v2527
        %v2906 = vmul.f32 %v2833, %v2528
        %v2907 = vmul.f32 %v2833, %v2529
        %v2908 = vmul.f32 %v2833, %v2530
        %v2909 = vmul.f32 %v2833, %v2531
        %v2910 = vmul.f32 %v2833, %v2532
        %v2911 = vmul.f32 %v2833, %v2533
        %v2912 = vmul.f32 %v2833, %v2534
        %v2913 = vmul.f32 %v2833, %v2535
        %v2914 = vmul.f32 %v2833, %v2536
        %v2915 = vmul.f32 %v2833, %v2537
        %v2916 = vmul.f32 %v2833, %v2538
        %v2917 = vmul.f32 %v2833, %v2539
        %v2918 = vmul.f32 %v2833, %v2540
        %v2919 = vmul.f32 %v2833, %v2541
        %v2920 = vmul.f32 %v2833, %v2542
        %v2921 = vmul.f32 %v2833, %v2543
        %v2922 = vmul.f32 %v2833, %v2544
        %v2923 = vmul.f32 %v2833, %v2545
        %v2924 = vmul.f32 %v2833, %v2546
        %v2925 = vmul.f32 %v2833, %v2547
        %v2926 = vmul.f32 %v2833, %v2548
        %v2927 = vmul.f32 %v2833, %v2549
        %v2928 = vmul.f32 %v2833, %v2550
        %v2929 = vmul.f32 %v2833, %v2551
        %v2930 = vmul.f32 %v2833, %v2552
        %v2931 = vmul.f32 %v2833, %v2553
        %v2932 = vmul.f32 %v2833, %v2554
        %v2933 = vmul.f32 %v2833, %v2555
        %v2934 = vmul.f32 %v2833, %v2556
        %v2935 = vmul.f32 %v2833, %v2557
        %v2936 = vmul.f32 %v2833, %v2558
        %v2937 = vmul.f32 %v2833, %v2559
        %v2938 = vmul.f32 %v2833, %v2560
        %v2939 = vmul.f32 %v2833, %v2561
        %v2940 = vmul.f32 %v2833, %v2562
        %v2941 = vmul.f32 %v2833, %v2563
        %v2942 = vmul.f32 %v2833, %v2564
        %v2943 = vmul.f32 %v2833, %v2565
        %v2944 = vmul.f32 %v2833, %v2566
        %v2945 = vmul.f32 %v2833, %v2567
        %v2946 = vmul.f32 %v2833, %v2568
        %v2947 = vmul.f32 %v2833, %v2569
        %v2948 = vmul.f32 %v2833, %v2570
        %v2949 = vmul.f32 %v2833, %v2571
        %v2950 = vmul.f32 %v2833, %v2572
        %v2951 = vmul.f32 %v2833, %v2573
        %v2952 = vmul.f32 %v2833, %v2574
        %v2953 = vmul.f32 %v2833, %v2575
        %v2954 = vmul.f32 %v2833, %v2576
        %v2955 = vmul.f32 %v2833, %v2577
        %v2956 = vmul.f32 %v2833, %v2578
        %v2957 = vmul.f32 %v2833, %v2579
        %v2958 = vmul.f32 %v2833, %v2580
        %v2959 = vmul.f32 %v2833, %v2581
        %v2960 = vmul.f32 %v2833, %v2582
        %v2961 = vmul.f32 %v2833, %v2583
        %v2962 = vmul.f32 %v2833, %v2584
        %v2963 = vmul.f32 %v2833, %v2585
        %v2964 = vmul.f32 %v2833, %v2586
        %v2965 = vmul.f32 %v2833, %v2587
        %v2966 = vmul.f32 %v2833, %v2588
        %v2967 = vmul.f32 %v2833, %v2589
        %v2968 = vmul.f32 %v2833, %v2590
        %v2969 = vmul.f32 %v2833, %v2591
        %v2970 = vmul.f32 %v2833, %v2592
        %v2971 = vmul.f32 %v2833, %v2593
        %v2972 = vmul.f32 %v2833, %v2594
        %v2973 = vmul.f32 %v2833, %v2595
        %v2974 = vmul.f32 %v2833, %v2596
        %v2975 = vmul.f32 %v2833, %v2597
        %v2976 = vmul.f32 %v2833, %v2598
        %v2977 = vmul.f32 %v2833, %v2599
        %v2978 = vmul.f32 %v2833, %v2600
        %v2979 = vmul.f32 %v2833, %v2601
        %v2980 = vmul.f32 %v2833, %v2602
        %v2981 = vmul.f32 %v2833, %v2603
        %v2982 = vmul.f32 %v2833, %v2604
        %v2983 = vmul.f32 %v2833, %v2605
        %v2984 = vmul.f32 %v2833, %v2606
        %v2985 = vmul.f32 %v2833, %v2607
        %v2986 = vmul.f32 %v2833, %v2608
        %v2987 = vmul.f32 %v2833, %v2609
        %v2988 = vmul.f32 %v2833, %v2610
        %v2989 = vmul.f32 %v2833, %v2611
        %v2990 = vmul.f32 %v2833, %v2612
        %v2991 = vmul.f32 %v2833, %v2613
        %v2992 = vmul.f32 %v2833, %v2614
        %v2993 = vmul.f32 %v2833, %v2615
        %v2994 = vmul.f32 %v2833, %v2616
        %v2995 = vmul.f32 %v2833, %v2617
        %v2996 = vmul.f32 %v2833, %v2618
        %v2997 = vmul.f32 %v2833, %v2619
        %v2998 = vmul.f32 %v2833, %v2620
        %v2999 = vmul.f32 %v2833, %v2621
        %v3000 = vmul.f32 %v2833, %v2622
        %v3001 = vmul.f32 %v2833, %v2623
        %v3002 = vmul.f32 %v2833, %v2624
        %v3003 = vmul.f32 %v2833, %v2625
        %v3004 = vmul.f32 %v2833, %v2626
        %v3005 = vmul.f32 %v2833, %v2627
        %v3006 = vmul.f32 %v2833, %v2628
        %v3007 = vmul.f32 %v2833, %v2629
        %v3008 = vmul.f32 %v2833, %v2630
        %v3009 = vmul.f32 %v2833, %v2631
        %v3010 = vmul.f32 %v2833, %v2632
        %v3011 = vmul.f32 %v2833, %v2633
        %v3012 = vmul.f32 %v2833, %v2634
        %v3013 = vmul.f32 %v2833, %v2635
        %v3014 = vmul.f32 %v2833, %v2636
        %v3015 = vmul.f32 %v2833, %v2637
        %v3016 = vmul.f32 %v2833, %v2638
        %v3017 = vmul.f32 %v2833, %v2639
        %v3018 = vmul.f32 %v2833, %v2640
        %v3019 = vmul.f32 %v2833, %v2641
        %v3020 = vmul.f32 %v2833, %v2642
        %v3021 = vmul.f32 %v2833, %v2643
        %v3022 = vmul.f32 %v2833, %v2644
        %v3023 = vmul.f32 %v2833, %v2645
        %v3024 = vmul.f32 %v2833, %v2646
        %v3025 = vmul.f32 %v2833, %v2647
        %v3026 = vmul.f32 %v2833, %v2648
        %v3027 = vmul.f32 %v2833, %v2649
        %v3028 = vmul.f32 %v2833, %v2650
        %v3029 = vmul.f32 %v2833, %v2651
        %v3030 = vmul.f32 %v2833, %v2652
        %v3031 = vmul.f32 %v2833, %v2653
        %v3032 = vmul.f32 %v2833, %v2654
        %v3033 = vmul.f32 %v2833, %v2655
        %v3034 = vmul.f32 %v2833, %v2656
        %v3035 = vmul.f32 %v2833, %v2657
        %v3036 = vmul.f32 %v2833, %v2658
        %v3037 = vmul.f32 %v2833, %v2659
        %v3038 = vmul.f32 %v2833, %v2660
        %v3039 = vmul.f32 %v2833, %v2661
        %v3040 = vmul.f32 %v2833, %v2662
        %v3041 = vmul.f32 %v2833, %v2663
        %v3042 = vmul.f32 %v2833, %v2664
        %v3043 = vmul.f32 %v2833, %v2665
        %v3044 = vmul.f32 %v2833, %v2666
        %v3045 = vmul.f32 %v2833, %v2667
        %v3046 = vmul.f32 %v2833, %v2668
        %v3047 = vmul.f32 %v2833, %v2669
        %v3048 = vmul.f32 %v2833, %v2670
        %v3049 = vmul.f32 %v2833, %v2671
        %v3050 = vmul.f32 %v2833, %v2672
        %v3051 = vmul.f32 %v2833, %v2673
        %v3052 = vmul.f32 %v2833, %v2674
        %v3053 = vmul.f32 %v2833, %v2675
        %v3054 = vmul.f32 %v2833, %v2676
        %v3055 = vmul.f32 %v2833, %v2677
        %v3056 = vmul.f32 %v2833, %v2678
        %v3057 = vmul.f32 %v2833, %v2679
        %v3058 = vmul.f32 %v2833, %v2680
        %v3059 = vmul.f32 %v2833, %v2681
        %v3060 = vmul.f32 %v2833, %v2682
        %v3061 = vmul.f32 %v2833, %v2683
        %v3062 = vmul.f32 %v2833, %v2684
        %v3063 = vmul.f32 %v2833, %v2685
        %v3064 = vmul.f32 %v2833, %v2686
        %v3065 = vmul.f32 %v2833, %v2687
        %v3066 = vmul.f32 %v2833, %v2688
        %v3067 = vmul.f32 %v2833, %v2689
        %v3068 = vmul.f32 %v2833, %v2690
        %v3069 = vmul.f32 %v2833, %v2691
        %v3070 = vmul.f32 %v2833, %v2692
        %v3071 = vmul.f32 %v2833, %v2693
        %v3072 = vmul.f32 %v2833, %v2694
        %v3073 = vmul.f32 %v2833, %v2695
        %v3074 = vmul.f32 %v2833, %v2696
        %v3075 = vmul.f32 %v2833, %v2697
        %v3076 = vmul.f32 %v2833, %v2698
        %v3077 = vmul.f32 %v2833, %v2699
        %v3078 = vmul.f32 %v2833, %v2700
        %v3079 = vmul.f32 %v2833, %v2701
        %v3080 = vmul.f32 %v2833, %v2702
        %v3081 = vmul.f32 %v2833, %v2703
        %v3082 = vmul.f32 %v2833, %v2704
        %v3083 = vmul.f32 %v2833, %v2705
        %v3084 = vmul.f32 %v2833, %v2706
        %v3085 = vmul.f32 %v2833, %v2707
        %v3086 = vmul.f32 %v2833, %v2708
        %v3087 = vmul.f32 %v2833, %v2709
        %v3088 = vmul.f32 %v2833, %v2710
        %v3089 = vmul.f32 %v2833, %v2711
        %v3090 = vmul.f32 %v2833, %v2712
        %v3091 = vmul.f32 %v2833, %v2713
        %v3092 = vmul.f32 %v2833, %v2714
        %v3093 = vmul.f32 %v2833, %v2715
        %v3094 = vmul.f32 %v2833, %v2716
        %v3095 = vmul.f32 %v2833, %v2717
        %v3096 = vmul.f32 %v2833, %v2718
        %v3097 = vmul.f32 %v2833, %v2719
        %v3098 = vmul.f32 %v2833, %v2720
        %v3099 = vmul.f32 %v2833, %v2721
        %v3100 = vmul.f32 %v2833, %v2722
        %v3101 = vmul.f32 %v2833, %v2723
        %v3102 = vmul.f32 %v2833, %v2724
        %v3103 = vmul.f32 %v2833, %v2725
        %v3104 = vmul.f32 %v2833, %v2726
        %v3105 = vmul.f32 %v2833, %v2727
        %v3106 = vmul.f32 %v2833, %v2728
        %v3107 = vmul.f32 %v2833, %v2729
        %v3108 = vmul.f32 %v2833, %v2730
        %v3109 = vmul.f32 %v2833, %v2731
        %v3110 = vmul.f32 %v2833, %v2732
        %v3111 = vmul.f32 %v2833, %v2733
        %v3112 = vmul.f32 %v2833, %v2734
        %v3113 = vmul.f32 %v2833, %v2735
        %v3114 = vmul.f32 %v2833, %v2736
        %v3115 = vmul.f32 %v2833, %v2737
        %v3116 = vmul.f32 %v2833, %v2738
        %v3117 = vmul.f32 %v2833, %v2739
        %v3118 = vmul.f32 %v2833, %v2740
        %v3119 = vmul.f32 %v2833, %v2741
        %v3120 = vmul.f32 %v2833, %v2742
        %v3121 = vmul.f32 %v2833, %v2743
        %v3122 = vmul.f32 %v2833, %v2744
        %v3123 = vmul.f32 %v2833, %v2745
        %v3124 = vmul.f32 %v2833, %v2746
        %v3125 = vmul.f32 %v2833, %v2747
        %v3126 = vmul.f32 %v2833, %v2748
        %v3127 = vmul.f32 %v2833, %v2749
        %v3128 = vmul.f32 %v2833, %v2750
        %v3129 = vmul.f32 %v2833, %v2751
        %v3130 = vmul.f32 %v2833, %v2752
        %v3131 = vmul.f32 %v2833, %v2753
        %v3132 = vmul.f32 %v2833, %v2754
        %v3133 = vmul.f32 %v2833, %v2755
        %v3134 = vmul.f32 %v2833, %v2756
        %v3135 = vmul.f32 %v2833, %v2757
        %v3136 = vmul.f32 %v2833, %v2758
        %v3137 = vmul.f32 %v2833, %v2759
        %v3138 = vmul.f32 %v2833, %v2760
        %v3139 = vmul.f32 %v2833, %v2761
        %v3140 = vmul.f32 %v2833, %v2762
        %v3141 = vmul.f32 %v2833, %v2763
        %v3142 = vmul.f32 %v2833, %v2764
        %v3143 = vmul.f32 %v2833, %v2765
        %v3144 = vmul.f32 %v2833, %v2766
        %v3145 = vmul.f32 %v2833, %v2767
        %v3146 = vmul.f32 %v2833, %v2768
        %v3147 = vmul.f32 %v2833, %v2769
        %v3148 = vmul.f32 %v2833, %v2770
        %v3149 = vmul.f32 %v2833, %v2771
        %v3150 = vmul.f32 %v2833, %v2772
        %v3151 = vmul.f32 %v2833, %v2773
        %v3152 = vmul.f32 %v2833, %v2774
        %v3153 = vmul.f32 %v2833, %v2775
        %v3154 = vmul.f32 %v2833, %v2776
        %v3155 = vmul.f32 %v2833, %v2777
        %v3156 = vmul.f32 %v2833, %v2778
        %v3157 = vmul.f32 %v2833, %v2779
        %v3158 = vmul.f32 %v2833, %v2780
        %v3159 = vmul.f32 %v2833, %v2781
        %v3160 = vmul.f32 %v2833, %v2782
        %v3161 = vmul.f32 %v2833, %v2783
        %v3162 = vmul.f32 %v2833, %v2784
        %v3163 = vmul.f32 %v2833, %v2785
        %v3164 = vmul.f32 %v2833, %v2786
        %v3165 = vmul.f32 %v2833, %v2787
        %v3166 = vmul.f32 %v2833, %v2788
        %v3167 = vmul.f32 %v2833, %v2789
        %v3168 = vmul.f32 %v2833, %v2790
        %v3169 = vmul.f32 %v2833, %v2791
        %v3170 = vmul.f32 %v2833, %v2792
        %v3171 = vmul.f32 %v2833, %v2793
        %v3172 = vmul.f32 %v2833, %v2794
        %v3173 = vmul.f32 %v2833, %v2795
        %v3174 = vmul.f32 %v2833, %v2796
        %v3175 = vmul.f32 %v2833, %v2797
        %v3176 = vmul.f32 %v2833, %v2798
        %v3177 = vmul.f32 %v2833, %v2799
        %v3178 = vmul.f32 %v2833, %v2800
        %v3179 = vmul.f32 %v2833, %v2801
        %v3180 = vmul.f32 %v2833, %v2802
        %v3181 = vmul.f32 %v2833, %v2803
        %v3182 = vmul.f32 %v2833, %v2804
        %v3183 = vmul.f32 %v2833, %v2805
        %v3184 = vmul.f32 %v2833, %v2806
        %v3185 = vmul.f32 %v2833, %v2807
        %v3186 = vmul.f32 %v2833, %v2808
        %v3187 = vmul.f32 %v2833, %v2809
        %v3188 = vmul.f32 %v2833, %v2810
        %v3189 = vmul.f32 %v2833, %v2811
        %v3190 = vmul.f32 %v2833, %v2812
        %v3191 = vmul.f32 %v2833, %v2813
        %v3192 = vmul.f32 %v2833, %v2814
        %v3193 = vmul.f32 %v2833, %v2815
        %v3194 = vmul.f32 %v2833, %v2816
        %v3195 = vmul.f32 %v2833, %v2817
        %v3196 = vmul.f32 %v2833, %v2818
        %v3197 = vmul.f32 %v2833, %v2819
        %v3198 = vmul.f32 %v2833, %v2820
        %v3199 = vmul.f32 %v2833, %v2821
        %v3200 = vmul.f32 %v2833, %v2822
        %v3201 = vmul.f32 %v2833, %v2823
        %v3202 = vmul.f32 %v2833, %v2824
        %v3203 = vmul.f32 %v2833, %v2825
        %v3204 = vmul.f32 %v2833, %v2826
        %v3205 = vmul.f32 %v2833, %v2827
        %v3206 = vmul.f32 %v2833, %v2828
        %v3207 = vmul.f32 %v2833, %v2829
        %v3208 = vmul.f32 %v2833, %v2830
        %v3209 = vmul.f32 %v2833, %v2831
        %v3210 = vmul.f32 %v2834, %v2456
        %v3211 = vmul.f32 %v2835, %v2457
        %v3212 = vmul.f32 %v2836, %v2458
        %v3213 = vmul.f32 %v2837, %v2459
        %v3214 = vmul.f32 %v2838, %v2460
        %v3215 = vmul.f32 %v2839, %v2461
        %v3216 = vmul.f32 %v2840, %v2462
        %v3217 = vmul.f32 %v2841, %v2463
        %v3218 = vmul.f32 %v2842, %v2464
        %v3219 = vmul.f32 %v2843, %v2465
        %v3220 = vmul.f32 %v2844, %v2466
        %v3221 = vmul.f32 %v2845, %v2467
        %v3222 = vmul.f32 %v2846, %v2468
        %v3223 = vmul.f32 %v2847, %v2469
        %v3224 = vmul.f32 %v2848, %v2470
        %v3225 = vmul.f32 %v2849, %v2471
        %v3226 = vmul.f32 %v2850, %v2472
        %v3227 = vmul.f32 %v2851, %v2473
        %v3228 = vmul.f32 %v2852, %v2474
        %v3229 = vmul.f32 %v2853, %v2475
        %v3230 = vmul.f32 %v2854, %v2476
        %v3231 = vmul.f32 %v2855, %v2477
        %v3232 = vmul.f32 %v2856, %v2478
        %v3233 = vmul.f32 %v2857, %v2479
        %v3234 = vmul.f32 %v2858, %v2480
        %v3235 = vmul.f32 %v2859, %v2481
        %v3236 = vmul.f32 %v2860, %v2482
        %v3237 = vmul.f32 %v2861, %v2483
        %v3238 = vmul.f32 %v2862, %v2484
        %v3239 = vmul.f32 %v2863, %v2485
        %v3240 = vmul.f32 %v2864, %v2486
        %v3241 = vmul.f32 %v2865, %v2487
        %v3242 = vmul.f32 %v2866, %v2488
        %v3243 = vmul.f32 %v2867, %v2489
        %v3244 = vmul.f32 %v2868, %v2490
        %v3245 = vmul.f32 %v2869, %v2491
        %v3246 = vmul.f32 %v2870, %v2492
        %v3247 = vmul.f32 %v2871, %v2493
        %v3248 = vmul.f32 %v2872, %v2494
        %v3249 = vmul.f32 %v2873, %v2495
        %v3250 = vmul.f32 %v2874, %v2496
        %v3251 = vmul.f32 %v2875, %v2497
        %v3252 = vmul.f32 %v2876, %v2498
        %v3253 = vmul.f32 %v2877, %v2499
        %v3254 = vmul.f32 %v2878, %v2500
        %v3255 = vmul.f32 %v2879, %v2501
        %v3256 = vmul.f32 %v2880, %v2502
        %v3257 = vmul.f32 %v2881, %v2503
        %v3258 = vmul.f32 %v2882, %v2504
        %v3259 = vmul.f32 %v2883, %v2505
        %v3260 = vmul.f32 %v2884, %v2506
        %v3261 = vmul.f32 %v2885, %v2507
        %v3262 = vmul.f32 %v2886, %v2508
        %v3263 = vmul.f32 %v2887, %v2509
        %v3264 = vmul.f32 %v2888, %v2510
        %v3265 = vmul.f32 %v2889, %v2511
        %v3266 = vmul.f32 %v2890, %v2512
        %v3267 = vmul.f32 %v2891, %v2513
        %v3268 = vmul.f32 %v2892, %v2514
        %v3269 = vmul.f32 %v2893, %v2515
        %v3270 = vmul.f32 %v2894, %v2516
        %v3271 = vmul.f32 %v2895, %v2517
        %v3272 = vmul.f32 %v2896, %v2518
        %v3273 = vmul.f32 %v2897, %v2519
        %v3274 = vmul.f32 %v2898, %v2520
        %v3275 = vmul.f32 %v2899, %v2521
        %v3276 = vmul.f32 %v2900, %v2522
        %v3277 = vmul.f32 %v2901, %v2523
        %v3278 = vmul.f32 %v2902, %v2524
        %v3279 = vmul.f32 %v2903, %v2525
        %v3280 = vmul.f32 %v2904, %v2526
        %v3281 = vmul.f32 %v2905, %v2527
        %v3282 = vmul.f32 %v2906, %v2528
        %v3283 = vmul.f32 %v2907, %v2529
        %v3284 = vmul.f32 %v2908, %v2530
        %v3285 = vmul.f32 %v2909, %v2531
        %v3286 = vmul.f32 %v2910, %v2532
        %v3287 = vmul.f32 %v2911, %v2533
        %v3288 = vmul.f32 %v2912, %v2534
        %v3289 = vmul.f32 %v2913, %v2535
        %v3290 = vmul.f32 %v2914, %v2536
        %v3291 = vmul.f32 %v2915, %v2537
        %v3292 = vmul.f32 %v2916, %v2538
        %v3293 = vmul.f32 %v2917, %v2539
        %v3294 = vmul.f32 %v2918, %v2540
        %v3295 = vmul.f32 %v2919, %v2541
        %v3296 = vmul.f32 %v2920, %v2542
        %v3297 = vmul.f32 %v2921, %v2543
        %v3298 = vmul.f32 %v2922, %v2544
        %v3299 = vmul.f32 %v2923, %v2545
        %v3300 = vmul.f32 %v2924, %v2546
        %v3301 = vmul.f32 %v2925, %v2547
        %v3302 = vmul.f32 %v2926, %v2548
        %v3303 = vmul.f32 %v2927, %v2549
        %v3304 = vmul.f32 %v2928, %v2550
        %v3305 = vmul.f32 %v2929, %v2551
        %v3306 = vmul.f32 %v2930, %v2552
        %v3307 = vmul.f32 %v2931, %v2553
        %v3308 = vmul.f32 %v2932, %v2554
        %v3309 = vmul.f32 %v2933, %v2555
        %v3310 = vmul.f32 %v2934, %v2556
        %v3311 = vmul.f32 %v2935, %v2557
        %v3312 = vmul.f32 %v2936, %v2558
        %v3313 = vmul.f32 %v2937, %v2559
        %v3314 = vmul.f32 %v2938, %v2560
        %v3315 = vmul.f32 %v2939, %v2561
        %v3316 = vmul.f32 %v2940, %v2562
        %v3317 = vmul.f32 %v2941, %v2563
        %v3318 = vmul.f32 %v2942, %v2564
        %v3319 = vmul.f32 %v2943, %v2565
        %v3320 = vmul.f32 %v2944, %v2566
        %v3321 = vmul.f32 %v2945, %v2567
        %v3322 = vmul.f32 %v2946, %v2568
        %v3323 = vmul.f32 %v2947, %v2569
        %v3324 = vmul.f32 %v2948, %v2570
        %v3325 = vmul.f32 %v2949, %v2571
        %v3326 = vmul.f32 %v2950, %v2572
        %v3327 = vmul.f32 %v2951, %v2573
        %v3328 = vmul.f32 %v2952, %v2574
        %v3329 = vmul.f32 %v2953, %v2575
        %v3330 = vmul.f32 %v2954, %v2576
        %v3331 = vmul.f32 %v2955, %v2577
        %v3332 = vmul.f32 %v2956, %v2578
        %v3333 = vmul.f32 %v2957, %v2579
        %v3334 = vmul.f32 %v2958, %v2580
        %v3335 = vmul.f32 %v2959, %v2581
        %v3336 = vmul.f32 %v2960, %v2582
        %v3337 = vmul.f32 %v2961, %v2583
        %v3338 = vmul.f32 %v2962, %v2584
        %v3339 = vmul.f32 %v2963, %v2585
        %v3340 = vmul.f32 %v2964, %v2586
        %v3341 = vmul.f32 %v2965, %v2587
        %v3342 = vmul.f32 %v2966, %v2588
        %v3343 = vmul.f32 %v2967, %v2589
        %v3344 = vmul.f32 %v2968, %v2590
        %v3345 = vmul.f32 %v2969, %v2591
        %v3346 = vmul.f32 %v2970, %v2592
        %v3347 = vmul.f32 %v2971, %v2593
        %v3348 = vmul.f32 %v2972, %v2594
        %v3349 = vmul.f32 %v2973, %v2595
        %v3350 = vmul.f32 %v2974, %v2596
        %v3351 = vmul.f32 %v2975, %v2597
        %v3352 = vmul.f32 %v2976, %v2598
        %v3353 = vmul.f32 %v2977, %v2599
        %v3354 = vmul.f32 %v2978, %v2600
        %v3355 = vmul.f32 %v2979, %v2601
        %v3356 = vmul.f32 %v2980, %v2602
        %v3357 = vmul.f32 %v2981, %v2603
        %v3358 = vmul.f32 %v2982, %v2604
        %v3359 = vmul.f32 %v2983, %v2605
        %v3360 = vmul.f32 %v2984, %v2606
        %v3361 = vmul.f32 %v2985, %v2607
        %v3362 = vmul.f32 %v2986, %v2608
        %v3363 = vmul.f32 %v2987, %v2609
        %v3364 = vmul.f32 %v2988, %v2610
        %v3365 = vmul.f32 %v2989, %v2611
        %v3366 = vmul.f32 %v2990, %v2612
        %v3367 = vmul.f32 %v2991, %v2613
        %v3368 = vmul.f32 %v2992, %v2614
        %v3369 = vmul.f32 %v2993, %v2615
        %v3370 = vmul.f32 %v2994, %v2616
        %v3371 = vmul.f32 %v2995, %v2617
        %v3372 = vmul.f32 %v2996, %v2618
        %v3373 = vmul.f32 %v2997, %v2619
        %v3374 = vmul.f32 %v2998, %v2620
        %v3375 = vmul.f32 %v2999, %v2621
        %v3376 = vmul.f32 %v3000, %v2622
        %v3377 = vmul.f32 %v3001, %v2623
        %v3378 = vmul.f32 %v3002, %v2624
        %v3379 = vmul.f32 %v3003, %v2625
        %v3380 = vmul.f32 %v3004, %v2626
        %v3381 = vmul.f32 %v3005, %v2627
        %v3382 = vmul.f32 %v3006, %v2628
        %v3383 = vmul.f32 %v3007, %v2629
        %v3384 = vmul.f32 %v3008, %v2630
        %v3385 = vmul.f32 %v3009, %v2631
        %v3386 = vmul.f32 %v3010, %v2632
        %v3387 = vmul.f32 %v3011, %v2633
        %v3388 = vmul.f32 %v3012, %v2634
        %v3389 = vmul.f32 %v3013, %v2635
        %v3390 = vmul.f32 %v3014, %v2636
        %v3391 = vmul.f32 %v3015, %v2637
        %v3392 = vmul.f32 %v3016, %v2638
        %v3393 = vmul.f32 %v3017, %v2639
        %v3394 = vmul.f32 %v3018, %v2640
        %v3395 = vmul.f32 %v3019, %v2641
        %v3396 = vmul.f32 %v3020, %v2642
        %v3397 = vmul.f32 %v3021, %v2643
        %v3398 = vmul.f32 %v3022, %v2644
        %v3399 = vmul.f32 %v3023, %v2645
        %v3400 = vmul.f32 %v3024, %v2646
        %v3401 = vmul.f32 %v3025, %v2647
        %v3402 = vmul.f32 %v3026, %v2648
        %v3403 = vmul.f32 %v3027, %v2649
        %v3404 = vmul.f32 %v3028, %v2650
        %v3405 = vmul.f32 %v3029, %v2651
        %v3406 = vmul.f32 %v3030, %v2652
        %v3407 = vmul.f32 %v3031, %v2653
        %v3408 = vmul.f32 %v3032, %v2654
        %v3409 = vmul.f32 %v3033, %v2655
        %v3410 = vmul.f32 %v3034, %v2656
        %v3411 = vmul.f32 %v3035, %v2657
        %v3412 = vmul.f32 %v3036, %v2658
        %v3413 = vmul.f32 %v3037, %v2659
        %v3414 = vmul.f32 %v3038, %v2660
        %v3415 = vmul.f32 %v3039, %v2661
        %v3416 = vmul.f32 %v3040, %v2662
        %v3417 = vmul.f32 %v3041, %v2663
        %v3418 = vmul.f32 %v3042, %v2664
        %v3419 = vmul.f32 %v3043, %v2665
        %v3420 = vmul.f32 %v3044, %v2666
        %v3421 = vmul.f32 %v3045, %v2667
        %v3422 = vmul.f32 %v3046, %v2668
        %v3423 = vmul.f32 %v3047, %v2669
        %v3424 = vmul.f32 %v3048, %v2670
        %v3425 = vmul.f32 %v3049, %v2671
        %v3426 = vmul.f32 %v3050, %v2672
        %v3427 = vmul.f32 %v3051, %v2673
        %v3428 = vmul.f32 %v3052, %v2674
        %v3429 = vmul.f32 %v3053, %v2675
        %v3430 = vmul.f32 %v3054, %v2676
        %v3431 = vmul.f32 %v3055, %v2677
        %v3432 = vmul.f32 %v3056, %v2678
        %v3433 = vmul.f32 %v3057, %v2679
        %v3434 = vmul.f32 %v3058, %v2680
        %v3435 = vmul.f32 %v3059, %v2681
        %v3436 = vmul.f32 %v3060, %v2682
        %v3437 = vmul.f32 %v3061, %v2683
        %v3438 = vmul.f32 %v3062, %v2684
        %v3439 = vmul.f32 %v3063, %v2685
        %v3440 = vmul.f32 %v3064, %v2686
        %v3441 = vmul.f32 %v3065, %v2687
        %v3442 = vmul.f32 %v3066, %v2688
        %v3443 = vmul.f32 %v3067, %v2689
        %v3444 = vmul.f32 %v3068, %v2690
        %v3445 = vmul.f32 %v3069, %v2691
        %v3446 = vmul.f32 %v3070, %v2692
        %v3447 = vmul.f32 %v3071, %v2693
        %v3448 = vmul.f32 %v3072, %v2694
        %v3449 = vmul.f32 %v3073, %v2695
        %v3450 = vmul.f32 %v3074, %v2696
        %v3451 = vmul.f32 %v3075, %v2697
        %v3452 = vmul.f32 %v3076, %v2698
        %v3453 = vmul.f32 %v3077, %v2699
        %v3454 = vmul.f32 %v3078, %v2700
        %v3455 = vmul.f32 %v3079, %v2701
        %v3456 = vmul.f32 %v3080, %v2702
        %v3457 = vmul.f32 %v3081, %v2703
        %v3458 = vmul.f32 %v3082, %v2704
        %v3459 = vmul.f32 %v3083, %v2705
        %v3460 = vmul.f32 %v3084, %v2706
        %v3461 = vmul.f32 %v3085, %v2707
        %v3462 = vmul.f32 %v3086, %v2708
        %v3463 = vmul.f32 %v3087, %v2709
        %v3464 = vmul.f32 %v3088, %v2710
        %v3465 = vmul.f32 %v3089, %v2711
        %v3466 = vmul.f32 %v3090, %v2712
        %v3467 = vmul.f32 %v3091, %v2713
        %v3468 = vmul.f32 %v3092, %v2714
        %v3469 = vmul.f32 %v3093, %v2715
        %v3470 = vmul.f32 %v3094, %v2716
        %v3471 = vmul.f32 %v3095, %v2717
        %v3472 = vmul.f32 %v3096, %v2718
        %v3473 = vmul.f32 %v3097, %v2719
        %v3474 = vmul.f32 %v3098, %v2720
        %v3475 = vmul.f32 %v3099, %v2721
        %v3476 = vmul.f32 %v3100, %v2722
        %v3477 = vmul.f32 %v3101, %v2723
        %v3478 = vmul.f32 %v3102, %v2724
        %v3479 = vmul.f32 %v3103, %v2725
        %v3480 = vmul.f32 %v3104, %v2726
        %v3481 = vmul.f32 %v3105, %v2727
        %v3482 = vmul.f32 %v3106, %v2728
        %v3483 = vmul.f32 %v3107, %v2729
        %v3484 = vmul.f32 %v3108, %v2730
        %v3485 = vmul.f32 %v3109, %v2731
        %v3486 = vmul.f32 %v3110, %v2732
        %v3487 = vmul.f32 %v3111, %v2733
        %v3488 = vmul.f32 %v3112, %v2734
        %v3489 = vmul.f32 %v3113, %v2735
        %v3490 = vmul.f32 %v3114, %v2736
        %v3491 = vmul.f32 %v3115, %v2737
        %v3492 = vmul.f32 %v3116, %v2738
        %v3493 = vmul.f32 %v3117, %v2739
        %v3494 = vmul.f32 %v3118, %v2740
        %v3495 = vmul.f32 %v3119, %v2741
        %v3496 = vmul.f32 %v3120, %v2742
        %v3497 = vmul.f32 %v3121, %v2743
        %v3498 = vmul.f32 %v3122, %v2744
        %v3499 = vmul.f32 %v3123, %v2745
        %v3500 = vmul.f32 %v3124, %v2746
        %v3501 = vmul.f32 %v3125, %v2747
        %v3502 = vmul.f32 %v3126, %v2748
        %v3503 = vmul.f32 %v3127, %v2749
        %v3504 = vmul.f32 %v3128, %v2750
        %v3505 = vmul.f32 %v3129, %v2751
        %v3506 = vmul.f32 %v3130, %v2752
        %v3507 = vmul.f32 %v3131, %v2753
        %v3508 = vmul.f32 %v3132, %v2754
        %v3509 = vmul.f32 %v3133, %v2755
        %v3510 = vmul.f32 %v3134, %v2756
        %v3511 = vmul.f32 %v3135, %v2757
        %v3512 = vmul.f32 %v3136, %v2758
        %v3513 = vmul.f32 %v3137, %v2759
        %v3514 = vmul.f32 %v3138, %v2760
        %v3515 = vmul.f32 %v3139, %v2761
        %v3516 = vmul.f32 %v3140, %v2762
        %v3517 = vmul.f32 %v3141, %v2763
        %v3518 = vmul.f32 %v3142, %v2764
        %v3519 = vmul.f32 %v3143, %v2765
        %v3520 = vmul.f32 %v3144, %v2766
        %v3521 = vmul.f32 %v3145, %v2767
        %v3522 = vmul.f32 %v3146, %v2768
        %v3523 = vmul.f32 %v3147, %v2769
        %v3524 = vmul.f32 %v3148, %v2770
        %v3525 = vmul.f32 %v3149, %v2771
        %v3526 = vmul.f32 %v3150, %v2772
        %v3527 = vmul.f32 %v3151, %v2773
        %v3528 = vmul.f32 %v3152, %v2774
        %v3529 = vmul.f32 %v3153, %v2775
        %v3530 = vmul.f32 %v3154, %v2776
        %v3531 = vmul.f32 %v3155, %v2777
        %v3532 = vmul.f32 %v3156, %v2778
        %v3533 = vmul.f32 %v3157, %v2779
        %v3534 = vmul.f32 %v3158, %v2780
        %v3535 = vmul.f32 %v3159, %v2781
        %v3536 = vmul.f32 %v3160, %v2782
        %v3537 = vmul.f32 %v3161, %v2783
        %v3538 = vmul.f32 %v3162, %v2784
        %v3539 = vmul.f32 %v3163, %v2785
        %v3540 = vmul.f32 %v3164, %v2786
        %v3541 = vmul.f32 %v3165, %v2787
        %v3542 = vmul.f32 %v3166, %v2788
        %v3543 = vmul.f32 %v3167, %v2789
        %v3544 = vmul.f32 %v3168, %v2790
        %v3545 = vmul.f32 %v3169, %v2791
        %v3546 = vmul.f32 %v3170, %v2792
        %v3547 = vmul.f32 %v3171, %v2793
        %v3548 = vmul.f32 %v3172, %v2794
        %v3549 = vmul.f32 %v3173, %v2795
        %v3550 = vmul.f32 %v3174, %v2796
        %v3551 = vmul.f32 %v3175, %v2797
        %v3552 = vmul.f32 %v3176, %v2798
        %v3553 = vmul.f32 %v3177, %v2799
        %v3554 = vmul.f32 %v3178, %v2800
        %v3555 = vmul.f32 %v3179, %v2801
        %v3556 = vmul.f32 %v3180, %v2802
        %v3557 = vmul.f32 %v3181, %v2803
        %v3558 = vmul.f32 %v3182, %v2804
        %v3559 = vmul.f32 %v3183, %v2805
        %v3560 = vmul.f32 %v3184, %v2806
        %v3561 = vmul.f32 %v3185, %v2807
        %v3562 = vmul.f32 %v3186, %v2808
        %v3563 = vmul.f32 %v3187, %v2809
        %v3564 = vmul.f32 %v3188, %v2810
        %v3565 = vmul.f32 %v3189, %v2811
        %v3566 = vmul.f32 %v3190, %v2812
        %v3567 = vmul.f32 %v3191, %v2813
        %v3568 = vmul.f32 %v3192, %v2814
        %v3569 = vmul.f32 %v3193, %v2815
        %v3570 = vmul.f32 %v3194, %v2816
        %v3571 = vmul.f32 %v3195, %v2817
        %v3572 = vmul.f32 %v3196, %v2818
        %v3573 = vmul.f32 %v3197, %v2819
        %v3574 = vmul.f32 %v3198, %v2820
        %v3575 = vmul.f32 %v3199, %v2821
        %v3576 = vmul.f32 %v3200, %v2822
        %v3577 = vmul.f32 %v3201, %v2823
        %v3578 = vmul.f32 %v3202, %v2824
        %v3579 = vmul.f32 %v3203, %v2825
        %v3580 = vmul.f32 %v3204, %v2826
        %v3581 = vmul.f32 %v3205, %v2827
        %v3582 = vmul.f32 %v3206, %v2828
        %v3583 = vmul.f32 %v3207, %v2829
        %v3584 = vmul.f32 %v3208, %v2830
        %v3585 = vmul.f32 %v3209, %v2831
        %v3586 = vmul.f32 %v3210, 1.442695
        %v3587 = vpow.pop %v3586
        %v3588 = vmul.f32 %v3211, 1.442695
        %v3589 = vpow.pop %v3588
        %v3590 = vmul.f32 %v3212, 1.442695
        %v3591 = vpow.pop %v3590
        %v3592 = vmul.f32 %v3213, 1.442695
        %v3593 = vpow.pop %v3592
        %v3594 = vmul.f32 %v3214, 1.442695
        %v3595 = vpow.pop %v3594
        %v3596 = vmul.f32 %v3215, 1.442695
        %v3597 = vpow.pop %v3596
        %v3598 = vmul.f32 %v3216, 1.442695
        %v3599 = vpow.pop %v3598
        %v3600 = vmul.f32 %v3217, 1.442695
        %v3601 = vpow.pop %v3600
        %v3602 = vmul.f32 %v3218, 1.442695
        %v3603 = vpow.pop %v3602
        %v3604 = vmul.f32 %v3219, 1.442695
        %v3605 = vpow.pop %v3604
        %v3606 = vmul.f32 %v3220, 1.442695
        %v3607 = vpow.pop %v3606
        %v3608 = vmul.f32 %v3221, 1.442695
        %v3609 = vpow.pop %v3608
        %v3610 = vmul.f32 %v3222, 1.442695
        %v3611 = vpow.pop %v3610
        %v3612 = vmul.f32 %v3223, 1.442695
        %v3613 = vpow.pop %v3612
        %v3614 = vmul.f32 %v3224, 1.442695
        %v3615 = vpow.pop %v3614
        %v3616 = vmul.f32 %v3225, 1.442695
        %v3617 = vpow.pop %v3616
        %v3618 = vmul.f32 %v3226, 1.442695
        %v3619 = vpow.pop %v3618
        %v3620 = vmul.f32 %v3227, 1.442695
        %v3621 = vpow.pop %v3620
        %v3622 = vmul.f32 %v3228, 1.442695
        %v3623 = vpow.pop %v3622
        %v3624 = vmul.f32 %v3229, 1.442695
        %v3625 = vpow.pop %v3624
        %v3626 = vmul.f32 %v3230, 1.442695
        %v3627 = vpow.pop %v3626
        %v3628 = vmul.f32 %v3231, 1.442695
        %v3629 = vpow.pop %v3628
        %v3630 = vmul.f32 %v3232, 1.442695
        %v3631 = vpow.pop %v3630
        %v3632 = vmul.f32 %v3233, 1.442695
        %v3633 = vpow.pop %v3632
        %v3634 = vmul.f32 %v3234, 1.442695
        %v3635 = vpow.pop %v3634
        %v3636 = vmul.f32 %v3235, 1.442695
        %v3637 = vpow.pop %v3636
        %v3638 = vmul.f32 %v3236, 1.442695
        %v3639 = vpow.pop %v3638
        %v3640 = vmul.f32 %v3237, 1.442695
        %v3641 = vpow.pop %v3640
        %v3642 = vmul.f32 %v3238, 1.442695
        %v3643 = vpow.pop %v3642
        %v3644 = vmul.f32 %v3239, 1.442695
        %v3645 = vpow.pop %v3644
        %v3646 = vmul.f32 %v3240, 1.442695
        %v3647 = vpow.pop %v3646
        %v3648 = vmul.f32 %v3241, 1.442695
        %v3649 = vpow.pop %v3648
        %v3650 = vmul.f32 %v3242, 1.442695
        %v3651 = vpow.pop %v3650
        %v3652 = vmul.f32 %v3243, 1.442695
        %v3653 = vpow.pop %v3652
        %v3654 = vmul.f32 %v3244, 1.442695
        %v3655 = vpow.pop %v3654
        %v3656 = vmul.f32 %v3245, 1.442695
        %v3657 = vpow.pop %v3656
        %v3658 = vmul.f32 %v3246, 1.442695
        %v3659 = vpow.pop %v3658
        %v3660 = vmul.f32 %v3247, 1.442695
        %v3661 = vpow.pop %v3660
        %v3662 = vmul.f32 %v3248, 1.442695
        %v3663 = vpow.pop %v3662
        %v3664 = vmul.f32 %v3249, 1.442695
        %v3665 = vpow.pop %v3664
        %v3666 = vmul.f32 %v3250, 1.442695
        %v3667 = vpow.pop %v3666
        %v3668 = vmul.f32 %v3251, 1.442695
        %v3669 = vpow.pop %v3668
        %v3670 = vmul.f32 %v3252, 1.442695
        %v3671 = vpow.pop %v3670
        %v3672 = vmul.f32 %v3253, 1.442695
        %v3673 = vpow.pop %v3672
        %v3674 = vmul.f32 %v3254, 1.442695
        %v3675 = vpow.pop %v3674
        %v3676 = vmul.f32 %v3255, 1.442695
        %v3677 = vpow.pop %v3676
        %v3678 = vmul.f32 %v3256, 1.442695
        %v3679 = vpow.pop %v3678
        %v3680 = vmul.f32 %v3257, 1.442695
        %v3681 = vpow.pop %v3680
        %v3682 = vmul.f32 %v3258, 1.442695
        %v3683 = vpow.pop %v3682
        %v3684 = vmul.f32 %v3259, 1.442695
        %v3685 = vpow.pop %v3684
        %v3686 = vmul.f32 %v3260, 1.442695
        %v3687 = vpow.pop %v3686
        %v3688 = vmul.f32 %v3261, 1.442695
        %v3689 = vpow.pop %v3688
        %v3690 = vmul.f32 %v3262, 1.442695
        %v3691 = vpow.pop %v3690
        %v3692 = vmul.f32 %v3263, 1.442695
        %v3693 = vpow.pop %v3692
        %v3694 = vmul.f32 %v3264, 1.442695
        %v3695 = vpow.pop %v3694
        %v3696 = vmul.f32 %v3265, 1.442695
        %v3697 = vpow.pop %v3696
        %v3698 = vmul.f32 %v3266, 1.442695
        %v3699 = vpow.pop %v3698
        %v3700 = vmul.f32 %v3267, 1.442695
        %v3701 = vpow.pop %v3700
        %v3702 = vmul.f32 %v3268, 1.442695
        %v3703 = vpow.pop %v3702
        %v3704 = vmul.f32 %v3269, 1.442695
        %v3705 = vpow.pop %v3704
        %v3706 = vmul.f32 %v3270, 1.442695
        %v3707 = vpow.pop %v3706
        %v3708 = vmul.f32 %v3271, 1.442695
        %v3709 = vpow.pop %v3708
        %v3710 = vmul.f32 %v3272, 1.442695
        %v3711 = vpow.pop %v3710
        %v3712 = vmul.f32 %v3273, 1.442695
        %v3713 = vpow.pop %v3712
        %v3714 = vmul.f32 %v3274, 1.442695
        %v3715 = vpow.pop %v3714
        %v3716 = vmul.f32 %v3275, 1.442695
        %v3717 = vpow.pop %v3716
        %v3718 = vmul.f32 %v3276, 1.442695
        %v3719 = vpow.pop %v3718
        %v3720 = vmul.f32 %v3277, 1.442695
        %v3721 = vpow.pop %v3720
        %v3722 = vmul.f32 %v3278, 1.442695
        %v3723 = vpow.pop %v3722
        %v3724 = vmul.f32 %v3279, 1.442695
        %v3725 = vpow.pop %v3724
        %v3726 = vmul.f32 %v3280, 1.442695
        %v3727 = vpow.pop %v3726
        %v3728 = vmul.f32 %v3281, 1.442695
        %v3729 = vpow.pop %v3728
        %v3730 = vmul.f32 %v3282, 1.442695
        %v3731 = vpow.pop %v3730
        %v3732 = vmul.f32 %v3283, 1.442695
        %v3733 = vpow.pop %v3732
        %v3734 = vmul.f32 %v3284, 1.442695
        %v3735 = vpow.pop %v3734
        %v3736 = vmul.f32 %v3285, 1.442695
        %v3737 = vpow.pop %v3736
        %v3738 = vmul.f32 %v3286, 1.442695
        %v3739 = vpow.pop %v3738
        %v3740 = vmul.f32 %v3287, 1.442695
        %v3741 = vpow.pop %v3740
        %v3742 = vmul.f32 %v3288, 1.442695
        %v3743 = vpow.pop %v3742
        %v3744 = vmul.f32 %v3289, 1.442695
        %v3745 = vpow.pop %v3744
        %v3746 = vmul.f32 %v3290, 1.442695
        %v3747 = vpow.pop %v3746
        %v3748 = vmul.f32 %v3291, 1.442695
        %v3749 = vpow.pop %v3748
        %v3750 = vmul.f32 %v3292, 1.442695
        %v3751 = vpow.pop %v3750
        %v3752 = vmul.f32 %v3293, 1.442695
        %v3753 = vpow.pop %v3752
        %v3754 = vmul.f32 %v3294, 1.442695
        %v3755 = vpow.pop %v3754
        %v3756 = vmul.f32 %v3295, 1.442695
        %v3757 = vpow.pop %v3756
        %v3758 = vmul.f32 %v3296, 1.442695
        %v3759 = vpow.pop %v3758
        %v3760 = vmul.f32 %v3297, 1.442695
        %v3761 = vpow.pop %v3760
        %v3762 = vmul.f32 %v3298, 1.442695
        %v3763 = vpow.pop %v3762
        %v3764 = vmul.f32 %v3299, 1.442695
        %v3765 = vpow.pop %v3764
        %v3766 = vmul.f32 %v3300, 1.442695
        %v3767 = vpow.pop %v3766
        %v3768 = vmul.f32 %v3301, 1.442695
        %v3769 = vpow.pop %v3768
        %v3770 = vmul.f32 %v3302, 1.442695
        %v3771 = vpow.pop %v3770
        %v3772 = vmul.f32 %v3303, 1.442695
        %v3773 = vpow.pop %v3772
        %v3774 = vmul.f32 %v3304, 1.442695
        %v3775 = vpow.pop %v3774
        %v3776 = vmul.f32 %v3305, 1.442695
        %v3777 = vpow.pop %v3776
        %v3778 = vmul.f32 %v3306, 1.442695
        %v3779 = vpow.pop %v3778
        %v3780 = vmul.f32 %v3307, 1.442695
        %v3781 = vpow.pop %v3780
        %v3782 = vmul.f32 %v3308, 1.442695
        %v3783 = vpow.pop %v3782
        %v3784 = vmul.f32 %v3309, 1.442695
        %v3785 = vpow.pop %v3784
        %v3786 = vmul.f32 %v3310, 1.442695
        %v3787 = vpow.pop %v3786
        %v3788 = vmul.f32 %v3311, 1.442695
        %v3789 = vpow.pop %v3788
        %v3790 = vmul.f32 %v3312, 1.442695
        %v3791 = vpow.pop %v3790
        %v3792 = vmul.f32 %v3313, 1.442695
        %v3793 = vpow.pop %v3792
        %v3794 = vmul.f32 %v3314, 1.442695
        %v3795 = vpow.pop %v3794
        %v3796 = vmul.f32 %v3315, 1.442695
        %v3797 = vpow.pop %v3796
        %v3798 = vmul.f32 %v3316, 1.442695
        %v3799 = vpow.pop %v3798
        %v3800 = vmul.f32 %v3317, 1.442695
        %v3801 = vpow.pop %v3800
        %v3802 = vmul.f32 %v3318, 1.442695
        %v3803 = vpow.pop %v3802
        %v3804 = vmul.f32 %v3319, 1.442695
        %v3805 = vpow.pop %v3804
        %v3806 = vmul.f32 %v3320, 1.442695
        %v3807 = vpow.pop %v3806
        %v3808 = vmul.f32 %v3321, 1.442695
        %v3809 = vpow.pop %v3808
        %v3810 = vmul.f32 %v3322, 1.442695
        %v3811 = vpow.pop %v3810
        %v3812 = vmul.f32 %v3323, 1.442695
        %v3813 = vpow.pop %v3812
        %v3814 = vmul.f32 %v3324, 1.442695
        %v3815 = vpow.pop %v3814
        %v3816 = vmul.f32 %v3325, 1.442695
        %v3817 = vpow.pop %v3816
        %v3818 = vmul.f32 %v3326, 1.442695
        %v3819 = vpow.pop %v3818
        %v3820 = vmul.f32 %v3327, 1.442695
        %v3821 = vpow.pop %v3820
        %v3822 = vmul.f32 %v3328, 1.442695
        %v3823 = vpow.pop %v3822
        %v3824 = vmul.f32 %v3329, 1.442695
        %v3825 = vpow.pop %v3824
        %v3826 = vmul.f32 %v3330, 1.442695
        %v3827 = vpow.pop %v3826
        %v3828 = vmul.f32 %v3331, 1.442695
        %v3829 = vpow.pop %v3828
        %v3830 = vmul.f32 %v3332, 1.442695
        %v3831 = vpow.pop %v3830
        %v3832 = vmul.f32 %v3333, 1.442695
        %v3833 = vpow.pop %v3832
        %v3834 = vmul.f32 %v3334, 1.442695
        %v3835 = vpow.pop %v3834
        %v3836 = vmul.f32 %v3335, 1.442695
        %v3837 = vpow.pop %v3836
        %v3838 = vmul.f32 %v3336, 1.442695
        %v3839 = vpow.pop %v3838
        %v3840 = vmul.f32 %v3337, 1.442695
        %v3841 = vpow.pop %v3840
        %v3842 = vmul.f32 %v3338, 1.442695
        %v3843 = vpow.pop %v3842
        %v3844 = vmul.f32 %v3339, 1.442695
        %v3845 = vpow.pop %v3844
        %v3846 = vmul.f32 %v3340, 1.442695
        %v3847 = vpow.pop %v3846
        %v3848 = vmul.f32 %v3341, 1.442695
        %v3849 = vpow.pop %v3848
        %v3850 = vmul.f32 %v3342, 1.442695
        %v3851 = vpow.pop %v3850
        %v3852 = vmul.f32 %v3343, 1.442695
        %v3853 = vpow.pop %v3852
        %v3854 = vmul.f32 %v3344, 1.442695
        %v3855 = vpow.pop %v3854
        %v3856 = vmul.f32 %v3345, 1.442695
        %v3857 = vpow.pop %v3856
        %v3858 = vmul.f32 %v3346, 1.442695
        %v3859 = vpow.pop %v3858
        %v3860 = vmul.f32 %v3347, 1.442695
        %v3861 = vpow.pop %v3860
        %v3862 = vmul.f32 %v3348, 1.442695
        %v3863 = vpow.pop %v3862
        %v3864 = vmul.f32 %v3349, 1.442695
        %v3865 = vpow.pop %v3864
        %v3866 = vmul.f32 %v3350, 1.442695
        %v3867 = vpow.pop %v3866
        %v3868 = vmul.f32 %v3351, 1.442695
        %v3869 = vpow.pop %v3868
        %v3870 = vmul.f32 %v3352, 1.442695
        %v3871 = vpow.pop %v3870
        %v3872 = vmul.f32 %v3353, 1.442695
        %v3873 = vpow.pop %v3872
        %v3874 = vmul.f32 %v3354, 1.442695
        %v3875 = vpow.pop %v3874
        %v3876 = vmul.f32 %v3355, 1.442695
        %v3877 = vpow.pop %v3876
        %v3878 = vmul.f32 %v3356, 1.442695
        %v3879 = vpow.pop %v3878
        %v3880 = vmul.f32 %v3357, 1.442695
        %v3881 = vpow.pop %v3880
        %v3882 = vmul.f32 %v3358, 1.442695
        %v3883 = vpow.pop %v3882
        %v3884 = vmul.f32 %v3359, 1.442695
        %v3885 = vpow.pop %v3884
        %v3886 = vmul.f32 %v3360, 1.442695
        %v3887 = vpow.pop %v3886
        %v3888 = vmul.f32 %v3361, 1.442695
        %v3889 = vpow.pop %v3888
        %v3890 = vmul.f32 %v3362, 1.442695
        %v3891 = vpow.pop %v3890
        %v3892 = vmul.f32 %v3363, 1.442695
        %v3893 = vpow.pop %v3892
        %v3894 = vmul.f32 %v3364, 1.442695
        %v3895 = vpow.pop %v3894
        %v3896 = vmul.f32 %v3365, 1.442695
        %v3897 = vpow.pop %v3896
        %v3898 = vmul.f32 %v3366, 1.442695
        %v3899 = vpow.pop %v3898
        %v3900 = vmul.f32 %v3367, 1.442695
        %v3901 = vpow.pop %v3900
        %v3902 = vmul.f32 %v3368, 1.442695
        %v3903 = vpow.pop %v3902
        %v3904 = vmul.f32 %v3369, 1.442695
        %v3905 = vpow.pop %v3904
        %v3906 = vmul.f32 %v3370, 1.442695
        %v3907 = vpow.pop %v3906
        %v3908 = vmul.f32 %v3371, 1.442695
        %v3909 = vpow.pop %v3908
        %v3910 = vmul.f32 %v3372, 1.442695
        %v3911 = vpow.pop %v3910
        %v3912 = vmul.f32 %v3373, 1.442695
        %v3913 = vpow.pop %v3912
        %v3914 = vmul.f32 %v3374, 1.442695
        %v3915 = vpow.pop %v3914
        %v3916 = vmul.f32 %v3375, 1.442695
        %v3917 = vpow.pop %v3916
        %v3918 = vmul.f32 %v3376, 1.442695
        %v3919 = vpow.pop %v3918
        %v3920 = vmul.f32 %v3377, 1.442695
        %v3921 = vpow.pop %v3920
        %v3922 = vmul.f32 %v3378, 1.442695
        %v3923 = vpow.pop %v3922
        %v3924 = vmul.f32 %v3379, 1.442695
        %v3925 = vpow.pop %v3924
        %v3926 = vmul.f32 %v3380, 1.442695
        %v3927 = vpow.pop %v3926
        %v3928 = vmul.f32 %v3381, 1.442695
        %v3929 = vpow.pop %v3928
        %v3930 = vmul.f32 %v3382, 1.442695
        %v3931 = vpow.pop %v3930
        %v3932 = vmul.f32 %v3383, 1.442695
        %v3933 = vpow.pop %v3932
        %v3934 = vmul.f32 %v3384, 1.442695
        %v3935 = vpow.pop %v3934
        %v3936 = vmul.f32 %v3385, 1.442695
        %v3937 = vpow.pop %v3936
        %v3938 = vmul.f32 %v3386, 1.442695
        %v3939 = vpow.pop %v3938
        %v3940 = vmul.f32 %v3387, 1.442695
        %v3941 = vpow.pop %v3940
        %v3942 = vmul.f32 %v3388, 1.442695
        %v3943 = vpow.pop %v3942
        %v3944 = vmul.f32 %v3389, 1.442695
        %v3945 = vpow.pop %v3944
        %v3946 = vmul.f32 %v3390, 1.442695
        %v3947 = vpow.pop %v3946
        %v3948 = vmul.f32 %v3391, 1.442695
        %v3949 = vpow.pop %v3948
        %v3950 = vmul.f32 %v3392, 1.442695
        %v3951 = vpow.pop %v3950
        %v3952 = vmul.f32 %v3393, 1.442695
        %v3953 = vpow.pop %v3952
        %v3954 = vmul.f32 %v3394, 1.442695
        %v3955 = vpow.pop %v3954
        %v3956 = vmul.f32 %v3395, 1.442695
        %v3957 = vpow.pop %v3956
        %v3958 = vmul.f32 %v3396, 1.442695
        %v3959 = vpow.pop %v3958
        %v3960 = vmul.f32 %v3397, 1.442695
        %v3961 = vpow.pop %v3960
        %v3962 = vmul.f32 %v3398, 1.442695
        %v3963 = vpow.pop %v3962
        %v3964 = vmul.f32 %v3399, 1.442695
        %v3965 = vpow.pop %v3964
        %v3966 = vmul.f32 %v3400, 1.442695
        %v3967 = vpow.pop %v3966
        %v3968 = vmul.f32 %v3401, 1.442695
        %v3969 = vpow.pop %v3968
        %v3970 = vmul.f32 %v3402, 1.442695
        %v3971 = vpow.pop %v3970
        %v3972 = vmul.f32 %v3403, 1.442695
        %v3973 = vpow.pop %v3972
        %v3974 = vmul.f32 %v3404, 1.442695
        %v3975 = vpow.pop %v3974
        %v3976 = vmul.f32 %v3405, 1.442695
        %v3977 = vpow.pop %v3976
        %v3978 = vmul.f32 %v3406, 1.442695
        %v3979 = vpow.pop %v3978
        %v3980 = vmul.f32 %v3407, 1.442695
        %v3981 = vpow.pop %v3980
        %v3982 = vmul.f32 %v3408, 1.442695
        %v3983 = vpow.pop %v3982
        %v3984 = vmul.f32 %v3409, 1.442695
        %v3985 = vpow.pop %v3984
        %v3986 = vmul.f32 %v3410, 1.442695
        %v3987 = vpow.pop %v3986
        %v3988 = vmul.f32 %v3411, 1.442695
        %v3989 = vpow.pop %v3988
        %v3990 = vmul.f32 %v3412, 1.442695
        %v3991 = vpow.pop %v3990
        %v3992 = vmul.f32 %v3413, 1.442695
        %v3993 = vpow.pop %v3992
        %v3994 = vmul.f32 %v3414, 1.442695
        %v3995 = vpow.pop %v3994
        %v3996 = vmul.f32 %v3415, 1.442695
        %v3997 = vpow.pop %v3996
        %v3998 = vmul.f32 %v3416, 1.442695
        %v3999 = vpow.pop %v3998
        %v4000 = vmul.f32 %v3417, 1.442695
        %v4001 = vpow.pop %v4000
        %v4002 = vmul.f32 %v3418, 1.442695
        %v4003 = vpow.pop %v4002
        %v4004 = vmul.f32 %v3419, 1.442695
        %v4005 = vpow.pop %v4004
        %v4006 = vmul.f32 %v3420, 1.442695
        %v4007 = vpow.pop %v4006
        %v4008 = vmul.f32 %v3421, 1.442695
        %v4009 = vpow.pop %v4008
        %v4010 = vmul.f32 %v3422, 1.442695
        %v4011 = vpow.pop %v4010
        %v4012 = vmul.f32 %v3423, 1.442695
        %v4013 = vpow.pop %v4012
        %v4014 = vmul.f32 %v3424, 1.442695
        %v4015 = vpow.pop %v4014
        %v4016 = vmul.f32 %v3425, 1.442695
        %v4017 = vpow.pop %v4016
        %v4018 = vmul.f32 %v3426, 1.442695
        %v4019 = vpow.pop %v4018
        %v4020 = vmul.f32 %v3427, 1.442695
        %v4021 = vpow.pop %v4020
        %v4022 = vmul.f32 %v3428, 1.442695
        %v4023 = vpow.pop %v4022
        %v4024 = vmul.f32 %v3429, 1.442695
        %v4025 = vpow.pop %v4024
        %v4026 = vmul.f32 %v3430, 1.442695
        %v4027 = vpow.pop %v4026
        %v4028 = vmul.f32 %v3431, 1.442695
        %v4029 = vpow.pop %v4028
        %v4030 = vmul.f32 %v3432, 1.442695
        %v4031 = vpow.pop %v4030
        %v4032 = vmul.f32 %v3433, 1.442695
        %v4033 = vpow.pop %v4032
        %v4034 = vmul.f32 %v3434, 1.442695
        %v4035 = vpow.pop %v4034
        %v4036 = vmul.f32 %v3435, 1.442695
        %v4037 = vpow.pop %v4036
        %v4038 = vmul.f32 %v3436, 1.442695
        %v4039 = vpow.pop %v4038
        %v4040 = vmul.f32 %v3437, 1.442695
        %v4041 = vpow.pop %v4040
        %v4042 = vmul.f32 %v3438, 1.442695
        %v4043 = vpow.pop %v4042
        %v4044 = vmul.f32 %v3439, 1.442695
        %v4045 = vpow.pop %v4044
        %v4046 = vmul.f32 %v3440, 1.442695
        %v4047 = vpow.pop %v4046
        %v4048 = vmul.f32 %v3441, 1.442695
        %v4049 = vpow.pop %v4048
        %v4050 = vmul.f32 %v3442, 1.442695
        %v4051 = vpow.pop %v4050
        %v4052 = vmul.f32 %v3443, 1.442695
        %v4053 = vpow.pop %v4052
        %v4054 = vmul.f32 %v3444, 1.442695
        %v4055 = vpow.pop %v4054
        %v4056 = vmul.f32 %v3445, 1.442695
        %v4057 = vpow.pop %v4056
        %v4058 = vmul.f32 %v3446, 1.442695
        %v4059 = vpow.pop %v4058
        %v4060 = vmul.f32 %v3447, 1.442695
        %v4061 = vpow.pop %v4060
        %v4062 = vmul.f32 %v3448, 1.442695
        %v4063 = vpow.pop %v4062
        %v4064 = vmul.f32 %v3449, 1.442695
        %v4065 = vpow.pop %v4064
        %v4066 = vmul.f32 %v3450, 1.442695
        %v4067 = vpow.pop %v4066
        %v4068 = vmul.f32 %v3451, 1.442695
        %v4069 = vpow.pop %v4068
        %v4070 = vmul.f32 %v3452, 1.442695
        %v4071 = vpow.pop %v4070
        %v4072 = vmul.f32 %v3453, 1.442695
        %v4073 = vpow.pop %v4072
        %v4074 = vmul.f32 %v3454, 1.442695
        %v4075 = vpow.pop %v4074
        %v4076 = vmul.f32 %v3455, 1.442695
        %v4077 = vpow.pop %v4076
        %v4078 = vmul.f32 %v3456, 1.442695
        %v4079 = vpow.pop %v4078
        %v4080 = vmul.f32 %v3457, 1.442695
        %v4081 = vpow.pop %v4080
        %v4082 = vmul.f32 %v3458, 1.442695
        %v4083 = vpow.pop %v4082
        %v4084 = vmul.f32 %v3459, 1.442695
        %v4085 = vpow.pop %v4084
        %v4086 = vmul.f32 %v3460, 1.442695
        %v4087 = vpow.pop %v4086
        %v4088 = vmul.f32 %v3461, 1.442695
        %v4089 = vpow.pop %v4088
        %v4090 = vmul.f32 %v3462, 1.442695
        %v4091 = vpow.pop %v4090
        %v4092 = vmul.f32 %v3463, 1.442695
        %v4093 = vpow.pop %v4092
        %v4094 = vmul.f32 %v3464, 1.442695
        %v4095 = vpow.pop %v4094
        %v4096 = vmul.f32 %v3465, 1.442695
        %v4097 = vpow.pop %v4096
        %v4098 = vmul.f32 %v3466, 1.442695
        %v4099 = vpow.pop %v4098
        %v4100 = vmul.f32 %v3467, 1.442695
        %v4101 = vpow.pop %v4100
        %v4102 = vmul.f32 %v3468, 1.442695
        %v4103 = vpow.pop %v4102
        %v4104 = vmul.f32 %v3469, 1.442695
        %v4105 = vpow.pop %v4104
        %v4106 = vmul.f32 %v3470, 1.442695
        %v4107 = vpow.pop %v4106
        %v4108 = vmul.f32 %v3471, 1.442695
        %v4109 = vpow.pop %v4108
        %v4110 = vmul.f32 %v3472, 1.442695
        %v4111 = vpow.pop %v4110
        %v4112 = vmul.f32 %v3473, 1.442695
        %v4113 = vpow.pop %v4112
        %v4114 = vmul.f32 %v3474, 1.442695
        %v4115 = vpow.pop %v4114
        %v4116 = vmul.f32 %v3475, 1.442695
        %v4117 = vpow.pop %v4116
        %v4118 = vmul.f32 %v3476, 1.442695
        %v4119 = vpow.pop %v4118
        %v4120 = vmul.f32 %v3477, 1.442695
        %v4121 = vpow.pop %v4120
        %v4122 = vmul.f32 %v3478, 1.442695
        %v4123 = vpow.pop %v4122
        %v4124 = vmul.f32 %v3479, 1.442695
        %v4125 = vpow.pop %v4124
        %v4126 = vmul.f32 %v3480, 1.442695
        %v4127 = vpow.pop %v4126
        %v4128 = vmul.f32 %v3481, 1.442695
        %v4129 = vpow.pop %v4128
        %v4130 = vmul.f32 %v3482, 1.442695
        %v4131 = vpow.pop %v4130
        %v4132 = vmul.f32 %v3483, 1.442695
        %v4133 = vpow.pop %v4132
        %v4134 = vmul.f32 %v3484, 1.442695
        %v4135 = vpow.pop %v4134
        %v4136 = vmul.f32 %v3485, 1.442695
        %v4137 = vpow.pop %v4136
        %v4138 = vmul.f32 %v3486, 1.442695
        %v4139 = vpow.pop %v4138
        %v4140 = vmul.f32 %v3487, 1.442695
        %v4141 = vpow.pop %v4140
        %v4142 = vmul.f32 %v3488, 1.442695
        %v4143 = vpow.pop %v4142
        %v4144 = vmul.f32 %v3489, 1.442695
        %v4145 = vpow.pop %v4144
        %v4146 = vmul.f32 %v3490, 1.442695
        %v4147 = vpow.pop %v4146
        %v4148 = vmul.f32 %v3491, 1.442695
        %v4149 = vpow.pop %v4148
        %v4150 = vmul.f32 %v3492, 1.442695
        %v4151 = vpow.pop %v4150
        %v4152 = vmul.f32 %v3493, 1.442695
        %v4153 = vpow.pop %v4152
        %v4154 = vmul.f32 %v3494, 1.442695
        %v4155 = vpow.pop %v4154
        %v4156 = vmul.f32 %v3495, 1.442695
        %v4157 = vpow.pop %v4156
        %v4158 = vmul.f32 %v3496, 1.442695
        %v4159 = vpow.pop %v4158
        %v4160 = vmul.f32 %v3497, 1.442695
        %v4161 = vpow.pop %v4160
        %v4162 = vmul.f32 %v3498, 1.442695
        %v4163 = vpow.pop %v4162
        %v4164 = vmul.f32 %v3499, 1.442695
        %v4165 = vpow.pop %v4164
        %v4166 = vmul.f32 %v3500, 1.442695
        %v4167 = vpow.pop %v4166
        %v4168 = vmul.f32 %v3501, 1.442695
        %v4169 = vpow.pop %v4168
        %v4170 = vmul.f32 %v3502, 1.442695
        %v4171 = vpow.pop %v4170
        %v4172 = vmul.f32 %v3503, 1.442695
        %v4173 = vpow.pop %v4172
        %v4174 = vmul.f32 %v3504, 1.442695
        %v4175 = vpow.pop %v4174
        %v4176 = vmul.f32 %v3505, 1.442695
        %v4177 = vpow.pop %v4176
        %v4178 = vmul.f32 %v3506, 1.442695
        %v4179 = vpow.pop %v4178
        %v4180 = vmul.f32 %v3507, 1.442695
        %v4181 = vpow.pop %v4180
        %v4182 = vmul.f32 %v3508, 1.442695
        %v4183 = vpow.pop %v4182
        %v4184 = vmul.f32 %v3509, 1.442695
        %v4185 = vpow.pop %v4184
        %v4186 = vmul.f32 %v3510, 1.442695
        %v4187 = vpow.pop %v4186
        %v4188 = vmul.f32 %v3511, 1.442695
        %v4189 = vpow.pop %v4188
        %v4190 = vmul.f32 %v3512, 1.442695
        %v4191 = vpow.pop %v4190
        %v4192 = vmul.f32 %v3513, 1.442695
        %v4193 = vpow.pop %v4192
        %v4194 = vmul.f32 %v3514, 1.442695
        %v4195 = vpow.pop %v4194
        %v4196 = vmul.f32 %v3515, 1.442695
        %v4197 = vpow.pop %v4196
        %v4198 = vmul.f32 %v3516, 1.442695
        %v4199 = vpow.pop %v4198
        %v4200 = vmul.f32 %v3517, 1.442695
        %v4201 = vpow.pop %v4200
        %v4202 = vmul.f32 %v3518, 1.442695
        %v4203 = vpow.pop %v4202
        %v4204 = vmul.f32 %v3519, 1.442695
        %v4205 = vpow.pop %v4204
        %v4206 = vmul.f32 %v3520, 1.442695
        %v4207 = vpow.pop %v4206
        %v4208 = vmul.f32 %v3521, 1.442695
        %v4209 = vpow.pop %v4208
        %v4210 = vmul.f32 %v3522, 1.442695
        %v4211 = vpow.pop %v4210
        %v4212 = vmul.f32 %v3523, 1.442695
        %v4213 = vpow.pop %v4212
        %v4214 = vmul.f32 %v3524, 1.442695
        %v4215 = vpow.pop %v4214
        %v4216 = vmul.f32 %v3525, 1.442695
        %v4217 = vpow.pop %v4216
        %v4218 = vmul.f32 %v3526, 1.442695
        %v4219 = vpow.pop %v4218
        %v4220 = vmul.f32 %v3527, 1.442695
        %v4221 = vpow.pop %v4220
        %v4222 = vmul.f32 %v3528, 1.442695
        %v4223 = vpow.pop %v4222
        %v4224 = vmul.f32 %v3529, 1.442695
        %v4225 = vpow.pop %v4224
        %v4226 = vmul.f32 %v3530, 1.442695
        %v4227 = vpow.pop %v4226
        %v4228 = vmul.f32 %v3531, 1.442695
        %v4229 = vpow.pop %v4228
        %v4230 = vmul.f32 %v3532, 1.442695
        %v4231 = vpow.pop %v4230
        %v4232 = vmul.f32 %v3533, 1.442695
        %v4233 = vpow.pop %v4232
        %v4234 = vmul.f32 %v3534, 1.442695
        %v4235 = vpow.pop %v4234
        %v4236 = vmul.f32 %v3535, 1.442695
        %v4237 = vpow.pop %v4236
        %v4238 = vmul.f32 %v3536, 1.442695
        %v4239 = vpow.pop %v4238
        %v4240 = vmul.f32 %v3537, 1.442695
        %v4241 = vpow.pop %v4240
        %v4242 = vmul.f32 %v3538, 1.442695
        %v4243 = vpow.pop %v4242
        %v4244 = vmul.f32 %v3539, 1.442695
        %v4245 = vpow.pop %v4244
        %v4246 = vmul.f32 %v3540, 1.442695
        %v4247 = vpow.pop %v4246
        %v4248 = vmul.f32 %v3541, 1.442695
        %v4249 = vpow.pop %v4248
        %v4250 = vmul.f32 %v3542, 1.442695
        %v4251 = vpow.pop %v4250
        %v4252 = vmul.f32 %v3543, 1.442695
        %v4253 = vpow.pop %v4252
        %v4254 = vmul.f32 %v3544, 1.442695
        %v4255 = vpow.pop %v4254
        %v4256 = vmul.f32 %v3545, 1.442695
        %v4257 = vpow.pop %v4256
        %v4258 = vmul.f32 %v3546, 1.442695
        %v4259 = vpow.pop %v4258
        %v4260 = vmul.f32 %v3547, 1.442695
        %v4261 = vpow.pop %v4260
        %v4262 = vmul.f32 %v3548, 1.442695
        %v4263 = vpow.pop %v4262
        %v4264 = vmul.f32 %v3549, 1.442695
        %v4265 = vpow.pop %v4264
        %v4266 = vmul.f32 %v3550, 1.442695
        %v4267 = vpow.pop %v4266
        %v4268 = vmul.f32 %v3551, 1.442695
        %v4269 = vpow.pop %v4268
        %v4270 = vmul.f32 %v3552, 1.442695
        %v4271 = vpow.pop %v4270
        %v4272 = vmul.f32 %v3553, 1.442695
        %v4273 = vpow.pop %v4272
        %v4274 = vmul.f32 %v3554, 1.442695
        %v4275 = vpow.pop %v4274
        %v4276 = vmul.f32 %v3555, 1.442695
        %v4277 = vpow.pop %v4276
        %v4278 = vmul.f32 %v3556, 1.442695
        %v4279 = vpow.pop %v4278
        %v4280 = vmul.f32 %v3557, 1.442695
        %v4281 = vpow.pop %v4280
        %v4282 = vmul.f32 %v3558, 1.442695
        %v4283 = vpow.pop %v4282
        %v4284 = vmul.f32 %v3559, 1.442695
        %v4285 = vpow.pop %v4284
        %v4286 = vmul.f32 %v3560, 1.442695
        %v4287 = vpow.pop %v4286
        %v4288 = vmul.f32 %v3561, 1.442695
        %v4289 = vpow.pop %v4288
        %v4290 = vmul.f32 %v3562, 1.442695
        %v4291 = vpow.pop %v4290
        %v4292 = vmul.f32 %v3563, 1.442695
        %v4293 = vpow.pop %v4292
        %v4294 = vmul.f32 %v3564, 1.442695
        %v4295 = vpow.pop %v4294
        %v4296 = vmul.f32 %v3565, 1.442695
        %v4297 = vpow.pop %v4296
        %v4298 = vmul.f32 %v3566, 1.442695
        %v4299 = vpow.pop %v4298
        %v4300 = vmul.f32 %v3567, 1.442695
        %v4301 = vpow.pop %v4300
        %v4302 = vmul.f32 %v3568, 1.442695
        %v4303 = vpow.pop %v4302
        %v4304 = vmul.f32 %v3569, 1.442695
        %v4305 = vpow.pop %v4304
        %v4306 = vmul.f32 %v3570, 1.442695
        %v4307 = vpow.pop %v4306
        %v4308 = vmul.f32 %v3571, 1.442695
        %v4309 = vpow.pop %v4308
        %v4310 = vmul.f32 %v3572, 1.442695
        %v4311 = vpow.pop %v4310
        %v4312 = vmul.f32 %v3573, 1.442695
        %v4313 = vpow.pop %v4312
        %v4314 = vmul.f32 %v3574, 1.442695
        %v4315 = vpow.pop %v4314
        %v4316 = vmul.f32 %v3575, 1.442695
        %v4317 = vpow.pop %v4316
        %v4318 = vmul.f32 %v3576, 1.442695
        %v4319 = vpow.pop %v4318
        %v4320 = vmul.f32 %v3577, 1.442695
        %v4321 = vpow.pop %v4320
        %v4322 = vmul.f32 %v3578, 1.442695
        %v4323 = vpow.pop %v4322
        %v4324 = vmul.f32 %v3579, 1.442695
        %v4325 = vpow.pop %v4324
        %v4326 = vmul.f32 %v3580, 1.442695
        %v4327 = vpow.pop %v4326
        %v4328 = vmul.f32 %v3581, 1.442695
        %v4329 = vpow.pop %v4328
        %v4330 = vmul.f32 %v3582, 1.442695
        %v4331 = vpow.pop %v4330
        %v4332 = vmul.f32 %v3583, 1.442695
        %v4333 = vpow.pop %v4332
        %v4334 = vmul.f32 %v3584, 1.442695
        %v4335 = vpow.pop %v4334
        %v4336 = vmul.f32 %v3585, 1.442695
        %v4337 = vpow.pop %v4336
        %vm4338 = vcmask 408576
        %4339 = vst.msk [vmem:[%s173] sm:$0xff] %vm4338, %v3587
        %4340 = vst.msk [vmem:[%s173 + $0x8] sm:$0xff] %vm4338, %v3589
        %4341 = vst.msk [vmem:[%s173 + $0x10] sm:$0xff] %vm4338, %v3591
        %4342 = vst.msk [vmem:[%s173 + $0x18] sm:$0xff] %vm4338, %v3593
        %4343 = vst.msk [vmem:[%s173 + $0x20] sm:$0xff] %vm4338, %v3595
        %4344 = vst.msk [vmem:[%s173 + $0x28] sm:$0xff] %vm4338, %v3597
        %4345 = vst.msk [vmem:[%s173 + $0x30] sm:$0xff] %vm4338, %v3599
        %4346 = vst.msk [vmem:[%s173 + $0x38] sm:$0xff] %vm4338, %v3601
        %4347 = vst.msk [vmem:[%s173 + $0x40] sm:$0xff] %vm4338, %v3603
        %4348 = vst.msk [vmem:[%s173 + $0x48] sm:$0xff] %vm4338, %v3605
        %4349 = vst.msk [vmem:[%s173 + $0x50] sm:$0xff] %vm4338, %v3607
        %4350 = vst.msk [vmem:[%s173 + $0x58] sm:$0xff] %vm4338, %v3609
        %4351 = vst.msk [vmem:[%s173 + $0x60] sm:$0xff] %vm4338, %v3611
        %4352 = vst.msk [vmem:[%s173 + $0x68] sm:$0xff] %vm4338, %v3613
        %4353 = vst.msk [vmem:[%s173 + $0x70] sm:$0xff] %vm4338, %v3615
        %4354 = vst.msk [vmem:[%s173 + $0x78] sm:$0xff] %vm4338, %v3617
        %4355 = vst.msk [vmem:[%s173 + $0x80] sm:$0xff] %vm4338, %v3619
        %4356 = vst.msk [vmem:[%s173 + $0x88] sm:$0xff] %vm4338, %v3621
        %4357 = vst.msk [vmem:[%s173 + $0x90] sm:$0xff] %vm4338, %v3623
        %4358 = vst.msk [vmem:[%s173 + $0x98] sm:$0xff] %vm4338, %v3625
        %4359 = vst.msk [vmem:[%s173 + $0xa0] sm:$0xff] %vm4338, %v3627
        %4360 = vst.msk [vmem:[%s173 + $0xa8] sm:$0xff] %vm4338, %v3629
        %4361 = vst.msk [vmem:[%s173 + $0xb0] sm:$0xff] %vm4338, %v3631
        %4362 = vst.msk [vmem:[%s173 + $0xb8] sm:$0xff] %vm4338, %v3633
        %4363 = vst.msk [vmem:[%s173 + $0xc0] sm:$0xff] %vm4338, %v3635
        %4364 = vst.msk [vmem:[%s173 + $0xc8] sm:$0xff] %vm4338, %v3637
        %4365 = vst.msk [vmem:[%s173 + $0xd0] sm:$0xff] %vm4338, %v3639
        %4366 = vst.msk [vmem:[%s173 + $0xd8] sm:$0xff] %vm4338, %v3641
        %4367 = vst.msk [vmem:[%s173 + $0xe0] sm:$0xff] %vm4338, %v3643
        %4368 = vst.msk [vmem:[%s173 + $0xe8] sm:$0xff] %vm4338, %v3645
        %4369 = vst.msk [vmem:[%s173 + $0xf0] sm:$0xff] %vm4338, %v3647
        %4370 = vst.msk [vmem:[%s173 + $0xf8] sm:$0xff] %vm4338, %v3649
        %4371 = vst.msk [vmem:[%s173 + $0x100] sm:$0xff] %vm4338, %v3651
        %4372 = vst.msk [vmem:[%s173 + $0x108] sm:$0xff] %vm4338, %v3653
        %4373 = vst.msk [vmem:[%s173 + $0x110] sm:$0xff] %vm4338, %v3655
        %4374 = vst.msk [vmem:[%s173 + $0x118] sm:$0xff] %vm4338, %v3657
        %4375 = vst.msk [vmem:[%s173 + $0x120] sm:$0xff] %vm4338, %v3659
        %4376 = vst.msk [vmem:[%s173 + $0x128] sm:$0xff] %vm4338, %v3661
        %4377 = vst.msk [vmem:[%s173 + $0x130] sm:$0xff] %vm4338, %v3663
        %4378 = vst.msk [vmem:[%s173 + $0x138] sm:$0xff] %vm4338, %v3665
        %4379 = vst.msk [vmem:[%s173 + $0x140] sm:$0xff] %vm4338, %v3667
        %4380 = vst.msk [vmem:[%s173 + $0x148] sm:$0xff] %vm4338, %v3669
        %4381 = vst.msk [vmem:[%s173 + $0x150] sm:$0xff] %vm4338, %v3671
        %4382 = vst.msk [vmem:[%s173 + $0x158] sm:$0xff] %vm4338, %v3673
        %4383 = vst.msk [vmem:[%s173 + $0x160] sm:$0xff] %vm4338, %v3675
        %4384 = vst.msk [vmem:[%s173 + $0x168] sm:$0xff] %vm4338, %v3677
        %4385 = vst.msk [vmem:[%s173 + $0x170] sm:$0xff] %vm4338, %v3679
        %4386 = vst.msk [vmem:[%s173 + $0x178] sm:$0xff] %vm4338, %v3681
        %4387 = vst.msk [vmem:[%s173 + $0x180] sm:$0xff] %vm4338, %v3683
        %4388 = vst.msk [vmem:[%s173 + $0x188] sm:$0xff] %vm4338, %v3685
        %4389 = vst.msk [vmem:[%s173 + $0x190] sm:$0xff] %vm4338, %v3687
        %4390 = vst.msk [vmem:[%s173 + $0x198] sm:$0xff] %vm4338, %v3689
        %4391 = vst.msk [vmem:[%s173 + $0x1a0] sm:$0xff] %vm4338, %v3691
        %4392 = vst.msk [vmem:[%s173 + $0x1a8] sm:$0xff] %vm4338, %v3693
        %4393 = vst.msk [vmem:[%s173 + $0x1b0] sm:$0xff] %vm4338, %v3695
        %4394 = vst.msk [vmem:[%s173 + $0x1b8] sm:$0xff] %vm4338, %v3697
        %4395 = vst.msk [vmem:[%s173 + $0x1c0] sm:$0xff] %vm4338, %v3699
        %4396 = vst.msk [vmem:[%s173 + $0x1c8] sm:$0xff] %vm4338, %v3701
        %4397 = vst.msk [vmem:[%s173 + $0x1d0] sm:$0xff] %vm4338, %v3703
        %4398 = vst.msk [vmem:[%s173 + $0x1d8] sm:$0xff] %vm4338, %v3705
        %4399 = vst.msk [vmem:[%s173 + $0x1e0] sm:$0xff] %vm4338, %v3707
        %4400 = vst.msk [vmem:[%s173 + $0x1e8] sm:$0xff] %vm4338, %v3709
        %4401 = vst.msk [vmem:[%s173 + $0x1f0] sm:$0xff] %vm4338, %v3711
        %4402 = vst.msk [vmem:[%s173 + $0x1f8] sm:$0xff] %vm4338, %v3713
        %4403 = vst.msk [vmem:[%s173 + $0x200] sm:$0xff] %vm4338, %v3715
        %4404 = vst.msk [vmem:[%s173 + $0x208] sm:$0xff] %vm4338, %v3717
        %4405 = vst.msk [vmem:[%s173 + $0x210] sm:$0xff] %vm4338, %v3719
        %4406 = vst.msk [vmem:[%s173 + $0x218] sm:$0xff] %vm4338, %v3721
        %4407 = vst.msk [vmem:[%s173 + $0x220] sm:$0xff] %vm4338, %v3723
        %4408 = vst.msk [vmem:[%s173 + $0x228] sm:$0xff] %vm4338, %v3725
        %4409 = vst.msk [vmem:[%s173 + $0x230] sm:$0xff] %vm4338, %v3727
        %4410 = vst.msk [vmem:[%s173 + $0x238] sm:$0xff] %vm4338, %v3729
        %4411 = vst.msk [vmem:[%s173 + $0x240] sm:$0xff] %vm4338, %v3731
        %4412 = vst.msk [vmem:[%s173 + $0x248] sm:$0xff] %vm4338, %v3733
        %4413 = vst.msk [vmem:[%s173 + $0x250] sm:$0xff] %vm4338, %v3735
        %4414 = vst.msk [vmem:[%s173 + $0x258] sm:$0xff] %vm4338, %v3737
        %4415 = vst.msk [vmem:[%s173 + $0x260] sm:$0xff] %vm4338, %v3739
        %4416 = vst.msk [vmem:[%s173 + $0x268] sm:$0xff] %vm4338, %v3741
        %4417 = vst.msk [vmem:[%s173 + $0x270] sm:$0xff] %vm4338, %v3743
        %4418 = vst.msk [vmem:[%s173 + $0x278] sm:$0xff] %vm4338, %v3745
        %4419 = vst.msk [vmem:[%s173 + $0x280] sm:$0xff] %vm4338, %v3747
        %4420 = vst.msk [vmem:[%s173 + $0x288] sm:$0xff] %vm4338, %v3749
        %4421 = vst.msk [vmem:[%s173 + $0x290] sm:$0xff] %vm4338, %v3751
        %4422 = vst.msk [vmem:[%s173 + $0x298] sm:$0xff] %vm4338, %v3753
        %4423 = vst.msk [vmem:[%s173 + $0x2a0] sm:$0xff] %vm4338, %v3755
        %4424 = vst.msk [vmem:[%s173 + $0x2a8] sm:$0xff] %vm4338, %v3757
        %4425 = vst.msk [vmem:[%s173 + $0x2b0] sm:$0xff] %vm4338, %v3759
        %4426 = vst.msk [vmem:[%s173 + $0x2b8] sm:$0xff] %vm4338, %v3761
        %4427 = vst.msk [vmem:[%s173 + $0x2c0] sm:$0xff] %vm4338, %v3763
        %4428 = vst.msk [vmem:[%s173 + $0x2c8] sm:$0xff] %vm4338, %v3765
        %4429 = vst.msk [vmem:[%s173 + $0x2d0] sm:$0xff] %vm4338, %v3767
        %4430 = vst.msk [vmem:[%s173 + $0x2d8] sm:$0xff] %vm4338, %v3769
        %4431 = vst.msk [vmem:[%s173 + $0x2e0] sm:$0xff] %vm4338, %v3771
        %4432 = vst.msk [vmem:[%s173 + $0x2e8] sm:$0xff] %vm4338, %v3773
        %4433 = vst.msk [vmem:[%s173 + $0x2f0] sm:$0xff] %vm4338, %v3775
        %4434 = vst.msk [vmem:[%s173 + $0x2f8] sm:$0xff] %vm4338, %v3777
        %4435 = vst.msk [vmem:[%s173 + $0x300] sm:$0xff] %vm4338, %v3779
        %4436 = vst.msk [vmem:[%s173 + $0x308] sm:$0xff] %vm4338, %v3781
        %4437 = vst.msk [vmem:[%s173 + $0x310] sm:$0xff] %vm4338, %v3783
        %4438 = vst.msk [vmem:[%s173 + $0x318] sm:$0xff] %vm4338, %v3785
        %4439 = vst.msk [vmem:[%s173 + $0x320] sm:$0xff] %vm4338, %v3787
        %4440 = vst.msk [vmem:[%s173 + $0x328] sm:$0xff] %vm4338, %v3789
        %4441 = vst.msk [vmem:[%s173 + $0x330] sm:$0xff] %vm4338, %v3791
        %4442 = vst.msk [vmem:[%s173 + $0x338] sm:$0xff] %vm4338, %v3793
        %4443 = vst.msk [vmem:[%s173 + $0x340] sm:$0xff] %vm4338, %v3795
        %4444 = vst.msk [vmem:[%s173 + $0x348] sm:$0xff] %vm4338, %v3797
        %4445 = vst.msk [vmem:[%s173 + $0x350] sm:$0xff] %vm4338, %v3799
        %4446 = vst.msk [vmem:[%s173 + $0x358] sm:$0xff] %vm4338, %v3801
        %4447 = vst.msk [vmem:[%s173 + $0x360] sm:$0xff] %vm4338, %v3803
        %4448 = vst.msk [vmem:[%s173 + $0x368] sm:$0xff] %vm4338, %v3805
        %4449 = vst.msk [vmem:[%s173 + $0x370] sm:$0xff] %vm4338, %v3807
        %4450 = vst.msk [vmem:[%s173 + $0x378] sm:$0xff] %vm4338, %v3809
        %4451 = vst.msk [vmem:[%s173 + $0x380] sm:$0xff] %vm4338, %v3811
        %4452 = vst.msk [vmem:[%s173 + $0x388] sm:$0xff] %vm4338, %v3813
        %4453 = vst.msk [vmem:[%s173 + $0x390] sm:$0xff] %vm4338, %v3815
        %4454 = vst.msk [vmem:[%s173 + $0x398] sm:$0xff] %vm4338, %v3817
        %4455 = vst.msk [vmem:[%s173 + $0x3a0] sm:$0xff] %vm4338, %v3819
        %4456 = vst.msk [vmem:[%s173 + $0x3a8] sm:$0xff] %vm4338, %v3821
        %4457 = vst.msk [vmem:[%s173 + $0x3b0] sm:$0xff] %vm4338, %v3823
        %4458 = vst.msk [vmem:[%s173 + $0x3b8] sm:$0xff] %vm4338, %v3825
        %4459 = vst.msk [vmem:[%s173 + $0x3c0] sm:$0xff] %vm4338, %v3827
        %4460 = vst.msk [vmem:[%s173 + $0x3c8] sm:$0xff] %vm4338, %v3829
        %4461 = vst.msk [vmem:[%s173 + $0x3d0] sm:$0xff] %vm4338, %v3831
        %4462 = vst.msk [vmem:[%s173 + $0x3d8] sm:$0xff] %vm4338, %v3833
        %4463 = vst.msk [vmem:[%s173 + $0x3e0] sm:$0xff] %vm4338, %v3835
        %4464 = vst.msk [vmem:[%s173 + $0x3e8] sm:$0xff] %vm4338, %v3837
        %4465 = vst.msk [vmem:[%s173 + $0x3f0] sm:$0xff] %vm4338, %v3839
        %4466 = vst.msk [vmem:[%s173 + $0x3f8] sm:$0xff] %vm4338, %v3841
        %4467 = vst.msk [vmem:[%s173 + $0x400] sm:$0xff] %vm4338, %v3843
        %4468 = vst.msk [vmem:[%s173 + $0x408] sm:$0xff] %vm4338, %v3845
        %4469 = vst.msk [vmem:[%s173 + $0x410] sm:$0xff] %vm4338, %v3847
        %4470 = vst.msk [vmem:[%s173 + $0x418] sm:$0xff] %vm4338, %v3849
        %4471 = vst.msk [vmem:[%s173 + $0x420] sm:$0xff] %vm4338, %v3851
        %4472 = vst.msk [vmem:[%s173 + $0x428] sm:$0xff] %vm4338, %v3853
        %4473 = vst.msk [vmem:[%s173 + $0x430] sm:$0xff] %vm4338, %v3855
        %4474 = vst.msk [vmem:[%s173 + $0x438] sm:$0xff] %vm4338, %v3857
        %4475 = vst.msk [vmem:[%s173 + $0x440] sm:$0xff] %vm4338, %v3859
        %4476 = vst.msk [vmem:[%s173 + $0x448] sm:$0xff] %vm4338, %v3861
        %4477 = vst.msk [vmem:[%s173 + $0x450] sm:$0xff] %vm4338, %v3863
        %4478 = vst.msk [vmem:[%s173 + $0x458] sm:$0xff] %vm4338, %v3865
        %4479 = vst.msk [vmem:[%s173 + $0x460] sm:$0xff] %vm4338, %v3867
        %4480 = vst.msk [vmem:[%s173 + $0x468] sm:$0xff] %vm4338, %v3869
        %4481 = vst.msk [vmem:[%s173 + $0x470] sm:$0xff] %vm4338, %v3871
        %4482 = vst.msk [vmem:[%s173 + $0x478] sm:$0xff] %vm4338, %v3873
        %4483 = vst.msk [vmem:[%s173 + $0x480] sm:$0xff] %vm4338, %v3875
        %4484 = vst.msk [vmem:[%s173 + $0x488] sm:$0xff] %vm4338, %v3877
        %4485 = vst.msk [vmem:[%s173 + $0x490] sm:$0xff] %vm4338, %v3879
        %4486 = vst.msk [vmem:[%s173 + $0x498] sm:$0xff] %vm4338, %v3881
        %4487 = vst.msk [vmem:[%s173 + $0x4a0] sm:$0xff] %vm4338, %v3883
        %4488 = vst.msk [vmem:[%s173 + $0x4a8] sm:$0xff] %vm4338, %v3885
        %4489 = vst.msk [vmem:[%s173 + $0x4b0] sm:$0xff] %vm4338, %v3887
        %4490 = vst.msk [vmem:[%s173 + $0x4b8] sm:$0xff] %vm4338, %v3889
        %4491 = vst.msk [vmem:[%s173 + $0x4c0] sm:$0xff] %vm4338, %v3891
        %4492 = vst.msk [vmem:[%s173 + $0x4c8] sm:$0xff] %vm4338, %v3893
        %4493 = vst.msk [vmem:[%s173 + $0x4d0] sm:$0xff] %vm4338, %v3895
        %4494 = vst.msk [vmem:[%s173 + $0x4d8] sm:$0xff] %vm4338, %v3897
        %4495 = vst.msk [vmem:[%s173 + $0x4e0] sm:$0xff] %vm4338, %v3899
        %4496 = vst.msk [vmem:[%s173 + $0x4e8] sm:$0xff] %vm4338, %v3901
        %4497 = vst.msk [vmem:[%s173 + $0x4f0] sm:$0xff] %vm4338, %v3903
        %4498 = vst.msk [vmem:[%s173 + $0x4f8] sm:$0xff] %vm4338, %v3905
        %4499 = vst.msk [vmem:[%s173 + $0x500] sm:$0xff] %vm4338, %v3907
        %4500 = vst.msk [vmem:[%s173 + $0x508] sm:$0xff] %vm4338, %v3909
        %4501 = vst.msk [vmem:[%s173 + $0x510] sm:$0xff] %vm4338, %v3911
        %4502 = vst.msk [vmem:[%s173 + $0x518] sm:$0xff] %vm4338, %v3913
        %4503 = vst.msk [vmem:[%s173 + $0x520] sm:$0xff] %vm4338, %v3915
        %4504 = vst.msk [vmem:[%s173 + $0x528] sm:$0xff] %vm4338, %v3917
        %4505 = vst.msk [vmem:[%s173 + $0x530] sm:$0xff] %vm4338, %v3919
        %4506 = vst.msk [vmem:[%s173 + $0x538] sm:$0xff] %vm4338, %v3921
        %4507 = vst.msk [vmem:[%s173 + $0x540] sm:$0xff] %vm4338, %v3923
        %4508 = vst.msk [vmem:[%s173 + $0x548] sm:$0xff] %vm4338, %v3925
        %4509 = vst.msk [vmem:[%s173 + $0x550] sm:$0xff] %vm4338, %v3927
        %4510 = vst.msk [vmem:[%s173 + $0x558] sm:$0xff] %vm4338, %v3929
        %4511 = vst.msk [vmem:[%s173 + $0x560] sm:$0xff] %vm4338, %v3931
        %4512 = vst.msk [vmem:[%s173 + $0x568] sm:$0xff] %vm4338, %v3933
        %4513 = vst.msk [vmem:[%s173 + $0x570] sm:$0xff] %vm4338, %v3935
        %4514 = vst.msk [vmem:[%s173 + $0x578] sm:$0xff] %vm4338, %v3937
        %4515 = vst.msk [vmem:[%s173 + $0x580] sm:$0xff] %vm4338, %v3939
        %4516 = vst.msk [vmem:[%s173 + $0x588] sm:$0xff] %vm4338, %v3941
        %4517 = vst.msk [vmem:[%s173 + $0x590] sm:$0xff] %vm4338, %v3943
        %4518 = vst.msk [vmem:[%s173 + $0x598] sm:$0xff] %vm4338, %v3945
        %4519 = vst.msk [vmem:[%s173 + $0x5a0] sm:$0xff] %vm4338, %v3947
        %4520 = vst.msk [vmem:[%s173 + $0x5a8] sm:$0xff] %vm4338, %v3949
        %4521 = vst.msk [vmem:[%s173 + $0x5b0] sm:$0xff] %vm4338, %v3951
        %4522 = vst.msk [vmem:[%s173 + $0x5b8] sm:$0xff] %vm4338, %v3953
        %4523 = vst.msk [vmem:[%s173 + $0x5c0] sm:$0xff] %vm4338, %v3955
        %4524 = vst.msk [vmem:[%s173 + $0x5c8] sm:$0xff] %vm4338, %v3957
        %4525 = vst.msk [vmem:[%s173 + $0x5d0] sm:$0xff] %vm4338, %v3959
        %4526 = vst.msk [vmem:[%s173 + $0x5d8] sm:$0xff] %vm4338, %v3961
        %4527 = vst.msk [vmem:[%s173 + $0x5e0] sm:$0xff] %vm4338, %v3963
        %4528 = vst.msk [vmem:[%s173 + $0x5e8] sm:$0xff] %vm4338, %v3965
        %4529 = vst.msk [vmem:[%s173 + $0x5f0] sm:$0xff] %vm4338, %v3967
        %4530 = vst.msk [vmem:[%s173 + $0x5f8] sm:$0xff] %vm4338, %v3969
        %4531 = vst.msk [vmem:[%s173 + $0x600] sm:$0xff] %vm4338, %v3971
        %4532 = vst.msk [vmem:[%s173 + $0x608] sm:$0xff] %vm4338, %v3973
        %4533 = vst.msk [vmem:[%s173 + $0x610] sm:$0xff] %vm4338, %v3975
        %4534 = vst.msk [vmem:[%s173 + $0x618] sm:$0xff] %vm4338, %v3977
        %4535 = vst.msk [vmem:[%s173 + $0x620] sm:$0xff] %vm4338, %v3979
        %4536 = vst.msk [vmem:[%s173 + $0x628] sm:$0xff] %vm4338, %v3981
        %4537 = vst.msk [vmem:[%s173 + $0x630] sm:$0xff] %vm4338, %v3983
        %4538 = vst.msk [vmem:[%s173 + $0x638] sm:$0xff] %vm4338, %v3985
        %4539 = vst.msk [vmem:[%s173 + $0x640] sm:$0xff] %vm4338, %v3987
        %4540 = vst.msk [vmem:[%s173 + $0x648] sm:$0xff] %vm4338, %v3989
        %4541 = vst.msk [vmem:[%s173 + $0x650] sm:$0xff] %vm4338, %v3991
        %4542 = vst.msk [vmem:[%s173 + $0x658] sm:$0xff] %vm4338, %v3993
        %4543 = vst.msk [vmem:[%s173 + $0x660] sm:$0xff] %vm4338, %v3995
        %4544 = vst.msk [vmem:[%s173 + $0x668] sm:$0xff] %vm4338, %v3997
        %4545 = vst.msk [vmem:[%s173 + $0x670] sm:$0xff] %vm4338, %v3999
        %4546 = vst.msk [vmem:[%s173 + $0x678] sm:$0xff] %vm4338, %v4001
        %4547 = vst.msk [vmem:[%s173 + $0x680] sm:$0xff] %vm4338, %v4003
        %4548 = vst.msk [vmem:[%s173 + $0x688] sm:$0xff] %vm4338, %v4005
        %4549 = vst.msk [vmem:[%s173 + $0x690] sm:$0xff] %vm4338, %v4007
        %4550 = vst.msk [vmem:[%s173 + $0x698] sm:$0xff] %vm4338, %v4009
        %4551 = vst.msk [vmem:[%s173 + $0x6a0] sm:$0xff] %vm4338, %v4011
        %4552 = vst.msk [vmem:[%s173 + $0x6a8] sm:$0xff] %vm4338, %v4013
        %4553 = vst.msk [vmem:[%s173 + $0x6b0] sm:$0xff] %vm4338, %v4015
        %4554 = vst.msk [vmem:[%s173 + $0x6b8] sm:$0xff] %vm4338, %v4017
        %4555 = vst.msk [vmem:[%s173 + $0x6c0] sm:$0xff] %vm4338, %v4019
        %4556 = vst.msk [vmem:[%s173 + $0x6c8] sm:$0xff] %vm4338, %v4021
        %4557 = vst.msk [vmem:[%s173 + $0x6d0] sm:$0xff] %vm4338, %v4023
        %4558 = vst.msk [vmem:[%s173 + $0x6d8] sm:$0xff] %vm4338, %v4025
        %4559 = vst.msk [vmem:[%s173 + $0x6e0] sm:$0xff] %vm4338, %v4027
        %4560 = vst.msk [vmem:[%s173 + $0x6e8] sm:$0xff] %vm4338, %v4029
        %4561 = vst.msk [vmem:[%s173 + $0x6f0] sm:$0xff] %vm4338, %v4031
        %4562 = vst.msk [vmem:[%s173 + $0x6f8] sm:$0xff] %vm4338, %v4033
        %4563 = vst.msk [vmem:[%s173 + $0x700] sm:$0xff] %vm4338, %v4035
        %4564 = vst.msk [vmem:[%s173 + $0x708] sm:$0xff] %vm4338, %v4037
        %4565 = vst.msk [vmem:[%s173 + $0x710] sm:$0xff] %vm4338, %v4039
        %4566 = vst.msk [vmem:[%s173 + $0x718] sm:$0xff] %vm4338, %v4041
        %4567 = vst.msk [vmem:[%s173 + $0x720] sm:$0xff] %vm4338, %v4043
        %4568 = vst.msk [vmem:[%s173 + $0x728] sm:$0xff] %vm4338, %v4045
        %4569 = vst.msk [vmem:[%s173 + $0x730] sm:$0xff] %vm4338, %v4047
        %4570 = vst.msk [vmem:[%s173 + $0x738] sm:$0xff] %vm4338, %v4049
        %4571 = vst.msk [vmem:[%s173 + $0x740] sm:$0xff] %vm4338, %v4051
        %4572 = vst.msk [vmem:[%s173 + $0x748] sm:$0xff] %vm4338, %v4053
        %4573 = vst.msk [vmem:[%s173 + $0x750] sm:$0xff] %vm4338, %v4055
        %4574 = vst.msk [vmem:[%s173 + $0x758] sm:$0xff] %vm4338, %v4057
        %4575 = vst.msk [vmem:[%s173 + $0x760] sm:$0xff] %vm4338, %v4059
        %4576 = vst.msk [vmem:[%s173 + $0x768] sm:$0xff] %vm4338, %v4061
        %4577 = vst.msk [vmem:[%s173 + $0x770] sm:$0xff] %vm4338, %v4063
        %4578 = vst.msk [vmem:[%s173 + $0x778] sm:$0xff] %vm4338, %v4065
        %4579 = vst.msk [vmem:[%s173 + $0x780] sm:$0xff] %vm4338, %v4067
        %4580 = vst.msk [vmem:[%s173 + $0x788] sm:$0xff] %vm4338, %v4069
        %4581 = vst.msk [vmem:[%s173 + $0x790] sm:$0xff] %vm4338, %v4071
        %4582 = vst.msk [vmem:[%s173 + $0x798] sm:$0xff] %vm4338, %v4073
        %4583 = vst.msk [vmem:[%s173 + $0x7a0] sm:$0xff] %vm4338, %v4075
        %4584 = vst.msk [vmem:[%s173 + $0x7a8] sm:$0xff] %vm4338, %v4077
        %4585 = vst.msk [vmem:[%s173 + $0x7b0] sm:$0xff] %vm4338, %v4079
        %4586 = vst.msk [vmem:[%s173 + $0x7b8] sm:$0xff] %vm4338, %v4081
        %4587 = vst.msk [vmem:[%s173 + $0x7c0] sm:$0xff] %vm4338, %v4083
        %4588 = vst.msk [vmem:[%s173 + $0x7c8] sm:$0xff] %vm4338, %v4085
        %4589 = vst.msk [vmem:[%s173 + $0x7d0] sm:$0xff] %vm4338, %v4087
        %4590 = vst.msk [vmem:[%s173 + $0x7d8] sm:$0xff] %vm4338, %v4089
        %4591 = vst.msk [vmem:[%s173 + $0x7e0] sm:$0xff] %vm4338, %v4091
        %4592 = vst.msk [vmem:[%s173 + $0x7e8] sm:$0xff] %vm4338, %v4093
        %4593 = vst.msk [vmem:[%s173 + $0x7f0] sm:$0xff] %vm4338, %v4095
        %4594 = vst.msk [vmem:[%s173 + $0x7f8] sm:$0xff] %vm4338, %v4097
        %4595 = vst.msk [vmem:[%s173 + $0x800] sm:$0xff] %vm4338, %v4099
        %4596 = vst.msk [vmem:[%s173 + $0x808] sm:$0xff] %vm4338, %v4101
        %4597 = vst.msk [vmem:[%s173 + $0x810] sm:$0xff] %vm4338, %v4103
        %4598 = vst.msk [vmem:[%s173 + $0x818] sm:$0xff] %vm4338, %v4105
        %4599 = vst.msk [vmem:[%s173 + $0x820] sm:$0xff] %vm4338, %v4107
        %4600 = vst.msk [vmem:[%s173 + $0x828] sm:$0xff] %vm4338, %v4109
        %4601 = vst.msk [vmem:[%s173 + $0x830] sm:$0xff] %vm4338, %v4111
        %4602 = vst.msk [vmem:[%s173 + $0x838] sm:$0xff] %vm4338, %v4113
        %4603 = vst.msk [vmem:[%s173 + $0x840] sm:$0xff] %vm4338, %v4115
        %4604 = vst.msk [vmem:[%s173 + $0x848] sm:$0xff] %vm4338, %v4117
        %4605 = vst.msk [vmem:[%s173 + $0x850] sm:$0xff] %vm4338, %v4119
        %4606 = vst.msk [vmem:[%s173 + $0x858] sm:$0xff] %vm4338, %v4121
        %4607 = vst.msk [vmem:[%s173 + $0x860] sm:$0xff] %vm4338, %v4123
        %4608 = vst.msk [vmem:[%s173 + $0x868] sm:$0xff] %vm4338, %v4125
        %4609 = vst.msk [vmem:[%s173 + $0x870] sm:$0xff] %vm4338, %v4127
        %4610 = vst.msk [vmem:[%s173 + $0x878] sm:$0xff] %vm4338, %v4129
        %4611 = vst.msk [vmem:[%s173 + $0x880] sm:$0xff] %vm4338, %v4131
        %4612 = vst.msk [vmem:[%s173 + $0x888] sm:$0xff] %vm4338, %v4133
        %4613 = vst.msk [vmem:[%s173 + $0x890] sm:$0xff] %vm4338, %v4135
        %4614 = vst.msk [vmem:[%s173 + $0x898] sm:$0xff] %vm4338, %v4137
        %4615 = vst.msk [vmem:[%s173 + $0x8a0] sm:$0xff] %vm4338, %v4139
        %4616 = vst.msk [vmem:[%s173 + $0x8a8] sm:$0xff] %vm4338, %v4141
        %4617 = vst.msk [vmem:[%s173 + $0x8b0] sm:$0xff] %vm4338, %v4143
        %4618 = vst.msk [vmem:[%s173 + $0x8b8] sm:$0xff] %vm4338, %v4145
        %4619 = vst.msk [vmem:[%s173 + $0x8c0] sm:$0xff] %vm4338, %v4147
        %4620 = vst.msk [vmem:[%s173 + $0x8c8] sm:$0xff] %vm4338, %v4149
        %4621 = vst.msk [vmem:[%s173 + $0x8d0] sm:$0xff] %vm4338, %v4151
        %4622 = vst.msk [vmem:[%s173 + $0x8d8] sm:$0xff] %vm4338, %v4153
        %4623 = vst.msk [vmem:[%s173 + $0x8e0] sm:$0xff] %vm4338, %v4155
        %4624 = vst.msk [vmem:[%s173 + $0x8e8] sm:$0xff] %vm4338, %v4157
        %4625 = vst.msk [vmem:[%s173 + $0x8f0] sm:$0xff] %vm4338, %v4159
        %4626 = vst.msk [vmem:[%s173 + $0x8f8] sm:$0xff] %vm4338, %v4161
        %4627 = vst.msk [vmem:[%s173 + $0x900] sm:$0xff] %vm4338, %v4163
        %4628 = vst.msk [vmem:[%s173 + $0x908] sm:$0xff] %vm4338, %v4165
        %4629 = vst.msk [vmem:[%s173 + $0x910] sm:$0xff] %vm4338, %v4167
        %4630 = vst.msk [vmem:[%s173 + $0x918] sm:$0xff] %vm4338, %v4169
        %4631 = vst.msk [vmem:[%s173 + $0x920] sm:$0xff] %vm4338, %v4171
        %4632 = vst.msk [vmem:[%s173 + $0x928] sm:$0xff] %vm4338, %v4173
        %4633 = vst.msk [vmem:[%s173 + $0x930] sm:$0xff] %vm4338, %v4175
        %4634 = vst.msk [vmem:[%s173 + $0x938] sm:$0xff] %vm4338, %v4177
        %4635 = vst.msk [vmem:[%s173 + $0x940] sm:$0xff] %vm4338, %v4179
        %4636 = vst.msk [vmem:[%s173 + $0x948] sm:$0xff] %vm4338, %v4181
        %4637 = vst.msk [vmem:[%s173 + $0x950] sm:$0xff] %vm4338, %v4183
        %4638 = vst.msk [vmem:[%s173 + $0x958] sm:$0xff] %vm4338, %v4185
        %4639 = vst.msk [vmem:[%s173 + $0x960] sm:$0xff] %vm4338, %v4187
        %4640 = vst.msk [vmem:[%s173 + $0x968] sm:$0xff] %vm4338, %v4189
        %4641 = vst.msk [vmem:[%s173 + $0x970] sm:$0xff] %vm4338, %v4191
        %4642 = vst.msk [vmem:[%s173 + $0x978] sm:$0xff] %vm4338, %v4193
        %4643 = vst.msk [vmem:[%s173 + $0x980] sm:$0xff] %vm4338, %v4195
        %4644 = vst.msk [vmem:[%s173 + $0x988] sm:$0xff] %vm4338, %v4197
        %4645 = vst.msk [vmem:[%s173 + $0x990] sm:$0xff] %vm4338, %v4199
        %4646 = vst.msk [vmem:[%s173 + $0x998] sm:$0xff] %vm4338, %v4201
        %4647 = vst.msk [vmem:[%s173 + $0x9a0] sm:$0xff] %vm4338, %v4203
        %4648 = vst.msk [vmem:[%s173 + $0x9a8] sm:$0xff] %vm4338, %v4205
        %4649 = vst.msk [vmem:[%s173 + $0x9b0] sm:$0xff] %vm4338, %v4207
        %4650 = vst.msk [vmem:[%s173 + $0x9b8] sm:$0xff] %vm4338, %v4209
        %4651 = vst.msk [vmem:[%s173 + $0x9c0] sm:$0xff] %vm4338, %v4211
        %4652 = vst.msk [vmem:[%s173 + $0x9c8] sm:$0xff] %vm4338, %v4213
        %4653 = vst.msk [vmem:[%s173 + $0x9d0] sm:$0xff] %vm4338, %v4215
        %4654 = vst.msk [vmem:[%s173 + $0x9d8] sm:$0xff] %vm4338, %v4217
        %4655 = vst.msk [vmem:[%s173 + $0x9e0] sm:$0xff] %vm4338, %v4219
        %4656 = vst.msk [vmem:[%s173 + $0x9e8] sm:$0xff] %vm4338, %v4221
        %4657 = vst.msk [vmem:[%s173 + $0x9f0] sm:$0xff] %vm4338, %v4223
        %4658 = vst.msk [vmem:[%s173 + $0x9f8] sm:$0xff] %vm4338, %v4225
        %4659 = vst.msk [vmem:[%s173 + $0xa00] sm:$0xff] %vm4338, %v4227
        %4660 = vst.msk [vmem:[%s173 + $0xa08] sm:$0xff] %vm4338, %v4229
        %4661 = vst.msk [vmem:[%s173 + $0xa10] sm:$0xff] %vm4338, %v4231
        %4662 = vst.msk [vmem:[%s173 + $0xa18] sm:$0xff] %vm4338, %v4233
        %4663 = vst.msk [vmem:[%s173 + $0xa20] sm:$0xff] %vm4338, %v4235
        %4664 = vst.msk [vmem:[%s173 + $0xa28] sm:$0xff] %vm4338, %v4237
        %4665 = vst.msk [vmem:[%s173 + $0xa30] sm:$0xff] %vm4338, %v4239
        %4666 = vst.msk [vmem:[%s173 + $0xa38] sm:$0xff] %vm4338, %v4241
        %4667 = vst.msk [vmem:[%s173 + $0xa40] sm:$0xff] %vm4338, %v4243
        %4668 = vst.msk [vmem:[%s173 + $0xa48] sm:$0xff] %vm4338, %v4245
        %4669 = vst.msk [vmem:[%s173 + $0xa50] sm:$0xff] %vm4338, %v4247
        %4670 = vst.msk [vmem:[%s173 + $0xa58] sm:$0xff] %vm4338, %v4249
        %4671 = vst.msk [vmem:[%s173 + $0xa60] sm:$0xff] %vm4338, %v4251
        %4672 = vst.msk [vmem:[%s173 + $0xa68] sm:$0xff] %vm4338, %v4253
        %4673 = vst.msk [vmem:[%s173 + $0xa70] sm:$0xff] %vm4338, %v4255
        %4674 = vst.msk [vmem:[%s173 + $0xa78] sm:$0xff] %vm4338, %v4257
        %4675 = vst.msk [vmem:[%s173 + $0xa80] sm:$0xff] %vm4338, %v4259
        %4676 = vst.msk [vmem:[%s173 + $0xa88] sm:$0xff] %vm4338, %v4261
        %4677 = vst.msk [vmem:[%s173 + $0xa90] sm:$0xff] %vm4338, %v4263
        %4678 = vst.msk [vmem:[%s173 + $0xa98] sm:$0xff] %vm4338, %v4265
        %4679 = vst.msk [vmem:[%s173 + $0xaa0] sm:$0xff] %vm4338, %v4267
        %4680 = vst.msk [vmem:[%s173 + $0xaa8] sm:$0xff] %vm4338, %v4269
        %4681 = vst.msk [vmem:[%s173 + $0xab0] sm:$0xff] %vm4338, %v4271
        %4682 = vst.msk [vmem:[%s173 + $0xab8] sm:$0xff] %vm4338, %v4273
        %4683 = vst.msk [vmem:[%s173 + $0xac0] sm:$0xff] %vm4338, %v4275
        %4684 = vst.msk [vmem:[%s173 + $0xac8] sm:$0xff] %vm4338, %v4277
        %4685 = vst.msk [vmem:[%s173 + $0xad0] sm:$0xff] %vm4338, %v4279
        %4686 = vst.msk [vmem:[%s173 + $0xad8] sm:$0xff] %vm4338, %v4281
        %4687 = vst.msk [vmem:[%s173 + $0xae0] sm:$0xff] %vm4338, %v4283
        %4688 = vst.msk [vmem:[%s173 + $0xae8] sm:$0xff] %vm4338, %v4285
        %4689 = vst.msk [vmem:[%s173 + $0xaf0] sm:$0xff] %vm4338, %v4287
        %4690 = vst.msk [vmem:[%s173 + $0xaf8] sm:$0xff] %vm4338, %v4289
        %4691 = vst.msk [vmem:[%s173 + $0xb00] sm:$0xff] %vm4338, %v4291
        %4692 = vst.msk [vmem:[%s173 + $0xb08] sm:$0xff] %vm4338, %v4293
        %4693 = vst.msk [vmem:[%s173 + $0xb10] sm:$0xff] %vm4338, %v4295
        %4694 = vst.msk [vmem:[%s173 + $0xb18] sm:$0xff] %vm4338, %v4297
        %4695 = vst.msk [vmem:[%s173 + $0xb20] sm:$0xff] %vm4338, %v4299
        %4696 = vst.msk [vmem:[%s173 + $0xb28] sm:$0xff] %vm4338, %v4301
        %4697 = vst.msk [vmem:[%s173 + $0xb30] sm:$0xff] %vm4338, %v4303
        %4698 = vst.msk [vmem:[%s173 + $0xb38] sm:$0xff] %vm4338, %v4305
        %4699 = vst.msk [vmem:[%s173 + $0xb40] sm:$0xff] %vm4338, %v4307
        %4700 = vst.msk [vmem:[%s173 + $0xb48] sm:$0xff] %vm4338, %v4309
        %4701 = vst.msk [vmem:[%s173 + $0xb50] sm:$0xff] %vm4338, %v4311
        %4702 = vst.msk [vmem:[%s173 + $0xb58] sm:$0xff] %vm4338, %v4313
        %4703 = vst.msk [vmem:[%s173 + $0xb60] sm:$0xff] %vm4338, %v4315
        %4704 = vst.msk [vmem:[%s173 + $0xb68] sm:$0xff] %vm4338, %v4317
        %4705 = vst.msk [vmem:[%s173 + $0xb70] sm:$0xff] %vm4338, %v4319
        %4706 = vst.msk [vmem:[%s173 + $0xb78] sm:$0xff] %vm4338, %v4321
        %4707 = vst.msk [vmem:[%s173 + $0xb80] sm:$0xff] %vm4338, %v4323
        %4708 = vst.msk [vmem:[%s173 + $0xb88] sm:$0xff] %vm4338, %v4325
        %4709 = vst.msk [vmem:[%s173 + $0xb90] sm:$0xff] %vm4338, %v4327
        %4710 = vst.msk [vmem:[%s173 + $0xb98] sm:$0xff] %vm4338, %v4329
        %4711 = vst.msk [vmem:[%s173 + $0xba0] sm:$0xff] %vm4338, %v4331
        %4712 = vst.msk [vmem:[%s173 + $0xba8] sm:$0xff] %vm4338, %v4333
        %4713 = vst.msk [vmem:[%s173 + $0xbb0] sm:$0xff] %vm4338, %v4335
        %4714 = vst.msk [vmem:[%s173 + $0xbb8] sm:$0xff] %vm4338, %v4337
        %s4715 = sand.u32 %s91, 1
        %s4716 = sand.u32 %s91, 1
        %s4717 = smul.addr %s4716, 3008
        %s4718 = scalar_lea.vmem [#allocation3], %s4717
        // Predicated region
        $region33: #{tpu_custom_call.1} parent=31 // pred_check
          %p4719 = pneg %p101
        $region34: #{tpu_custom_call.1} parent=31 // pred_check_branch
          %4721 = sbr.rel (%p4719) target = $region36
        $region35: #{tpu_custom_call.1} parent=31 // pred_region
          %s4722 = smul.u32 376, %s15
          %s4723 = ssub.s32 751, %s4722
          %p4724 = scmp.lt.s32.totalorder %s4723, 376
          %s4725 = scalar_select %p4724, %s4723, 376
          %s4726 = smul.u32 128, %s4725
          %p4727 = scmp.ne.s32.totalorder 0, %s4726
          %s4728 = smul.addr %s4722, 8
          %s4729 = scalar_lea.vmem %s3, %s4728
          // Predicated region
          $region37: #{tpu_custom_call.1} parent=35 // pred_check
            %p4730 = pneg %p4727
          $region38: #{tpu_custom_call.1} parent=35 // pred_check_branch
            %4732 = sbr.rel (%p4730) target = $region40
          $region39: #{tpu_custom_call.1} parent=35 // pred_region
            // Predicated region
            $region41: #{tpu_custom_call.1} parent=39 // pred_check
              _
            $region42: #{tpu_custom_call.1} parent=39 // pred_check_branch
              %4734 = sbr.rel (0) target = $region44
            $region43: #{tpu_custom_call.1} parent=39 // pred_region
              // Predicated region
              $region63: #{tpu_custom_call.1} parent=43 // pred_check
                _
              $region64: #{tpu_custom_call.1} parent=43 // pred_check_branch
                %4909 = sbr.rel (0) target = $region66
              $region65: #{tpu_custom_call.1} parent=43 // pred_region
                %s4910 = sshrl.u32 %s4725, 6
                // While loop
                $region67: #{tpu_custom_call.1} parent=65 // loop_pre_header
                  _
                $region68: #{tpu_custom_call.1} parent=65 // loop_header
                  %s4912 = sphi 0, %s4914
                  %p4913 = scmp.ge.s32.totalorder %s4912, %s4910
                  %s4917 = sphi 0, %s5050
                  %s4918 = sphi %s4718, %s5053
                  %s4919 = sphi %s4729, %s5054
                $region69: #{tpu_custom_call.1} parent=65 // loop_header_branch
                  %4916 = sbr.rel (%p4913) target = $region73
                $region70: #{tpu_custom_call.1} parent=65 // loop_body
                  %v4920 = vld [vmem:[%s4918] sm:$0xff]
                  %4921 = vst [vmem:[%s4919] sm:$0xff] %v4920
                  %v4922 = vld [vmem:[%s4918 + $0x8] sm:$0xff]
                  %4923 = vst [vmem:[%s4919 + $0x8] sm:$0xff] %v4922
                  %v4924 = vld [vmem:[%s4918 + $0x10] sm:$0xff]
                  %4925 = vst [vmem:[%s4919 + $0x10] sm:$0xff] %v4924
                  %v4926 = vld [vmem:[%s4918 + $0x18] sm:$0xff]
                  %4927 = vst [vmem:[%s4919 + $0x18] sm:$0xff] %v4926
                  %v4928 = vld [vmem:[%s4918 + $0x20] sm:$0xff]
                  %4929 = vst [vmem:[%s4919 + $0x20] sm:$0xff] %v4928
                  %v4930 = vld [vmem:[%s4918 + $0x28] sm:$0xff]
                  %4931 = vst [vmem:[%s4919 + $0x28] sm:$0xff] %v4930
                  %v4932 = vld [vmem:[%s4918 + $0x30] sm:$0xff]
                  %4933 = vst [vmem:[%s4919 + $0x30] sm:$0xff] %v4932
                  %v4934 = vld [vmem:[%s4918 + $0x38] sm:$0xff]
                  %4935 = vst [vmem:[%s4919 + $0x38] sm:$0xff] %v4934
                  %v4936 = vld [vmem:[%s4918 + $0x40] sm:$0xff]
                  %4937 = vst [vmem:[%s4919 + $0x40] sm:$0xff] %v4936
                  %v4938 = vld [vmem:[%s4918 + $0x48] sm:$0xff]
                  %4939 = vst [vmem:[%s4919 + $0x48] sm:$0xff] %v4938
                  %v4940 = vld [vmem:[%s4918 + $0x50] sm:$0xff]
                  %4941 = vst [vmem:[%s4919 + $0x50] sm:$0xff] %v4940
                  %v4942 = vld [vmem:[%s4918 + $0x58] sm:$0xff]
                  %4943 = vst [vmem:[%s4919 + $0x58] sm:$0xff] %v4942
                  %v4944 = vld [vmem:[%s4918 + $0x60] sm:$0xff]
                  %4945 = vst [vmem:[%s4919 + $0x60] sm:$0xff] %v4944
                  %v4946 = vld [vmem:[%s4918 + $0x68] sm:$0xff]
                  %4947 = vst [vmem:[%s4919 + $0x68] sm:$0xff] %v4946
                  %v4948 = vld [vmem:[%s4918 + $0x70] sm:$0xff]
                  %4949 = vst [vmem:[%s4919 + $0x70] sm:$0xff] %v4948
                  %v4950 = vld [vmem:[%s4918 + $0x78] sm:$0xff]
                  %4951 = vst [vmem:[%s4919 + $0x78] sm:$0xff] %v4950
                  %v4952 = vld [vmem:[%s4918 + $0x80] sm:$0xff]
                  %4953 = vst [vmem:[%s4919 + $0x80] sm:$0xff] %v4952
                  %v4954 = vld [vmem:[%s4918 + $0x88] sm:$0xff]
                  %4955 = vst [vmem:[%s4919 + $0x88] sm:$0xff] %v4954
                  %v4956 = vld [vmem:[%s4918 + $0x90] sm:$0xff]
                  %4957 = vst [vmem:[%s4919 + $0x90] sm:$0xff] %v4956
                  %v4958 = vld [vmem:[%s4918 + $0x98] sm:$0xff]
                  %4959 = vst [vmem:[%s4919 + $0x98] sm:$0xff] %v4958
                  %v4960 = vld [vmem:[%s4918 + $0xa0] sm:$0xff]
                  %4961 = vst [vmem:[%s4919 + $0xa0] sm:$0xff] %v4960
                  %v4962 = vld [vmem:[%s4918 + $0xa8] sm:$0xff]
                  %4963 = vst [vmem:[%s4919 + $0xa8] sm:$0xff] %v4962
                  %v4964 = vld [vmem:[%s4918 + $0xb0] sm:$0xff]
                  %4965 = vst [vmem:[%s4919 + $0xb0] sm:$0xff] %v4964
                  %v4966 = vld [vmem:[%s4918 + $0xb8] sm:$0xff]
                  %4967 = vst [vmem:[%s4919 + $0xb8] sm:$0xff] %v4966
                  %v4968 = vld [vmem:[%s4918 + $0xc0] sm:$0xff]
                  %4969 = vst [vmem:[%s4919 + $0xc0] sm:$0xff] %v4968
                  %v4970 = vld [vmem:[%s4918 + $0xc8] sm:$0xff]
                  %4971 = vst [vmem:[%s4919 + $0xc8] sm:$0xff] %v4970
                  %v4972 = vld [vmem:[%s4918 + $0xd0] sm:$0xff]
                  %4973 = vst [vmem:[%s4919 + $0xd0] sm:$0xff] %v4972
                  %v4974 = vld [vmem:[%s4918 + $0xd8] sm:$0xff]
                  %4975 = vst [vmem:[%s4919 + $0xd8] sm:$0xff] %v4974
                  %v4976 = vld [vmem:[%s4918 + $0xe0] sm:$0xff]
                  %4977 = vst [vmem:[%s4919 + $0xe0] sm:$0xff] %v4976
                  %v4978 = vld [vmem:[%s4918 + $0xe8] sm:$0xff]
                  %4979 = vst [vmem:[%s4919 + $0xe8] sm:$0xff] %v4978
                  %v4980 = vld [vmem:[%s4918 + $0xf0] sm:$0xff]
                  %4981 = vst [vmem:[%s4919 + $0xf0] sm:$0xff] %v4980
                  %v4982 = vld [vmem:[%s4918 + $0xf8] sm:$0xff]
                  %4983 = vst [vmem:[%s4919 + $0xf8] sm:$0xff] %v4982
                  %v4984 = vld [vmem:[%s4918 + $0x100] sm:$0xff]
                  %4985 = vst [vmem:[%s4919 + $0x100] sm:$0xff] %v4984
                  %v4986 = vld [vmem:[%s4918 + $0x108] sm:$0xff]
                  %4987 = vst [vmem:[%s4919 + $0x108] sm:$0xff] %v4986
                  %v4988 = vld [vmem:[%s4918 + $0x110] sm:$0xff]
                  %4989 = vst [vmem:[%s4919 + $0x110] sm:$0xff] %v4988
                  %v4990 = vld [vmem:[%s4918 + $0x118] sm:$0xff]
                  %4991 = vst [vmem:[%s4919 + $0x118] sm:$0xff] %v4990
                  %v4992 = vld [vmem:[%s4918 + $0x120] sm:$0xff]
                  %4993 = vst [vmem:[%s4919 + $0x120] sm:$0xff] %v4992
                  %v4994 = vld [vmem:[%s4918 + $0x128] sm:$0xff]
                  %4995 = vst [vmem:[%s4919 + $0x128] sm:$0xff] %v4994
                  %v4996 = vld [vmem:[%s4918 + $0x130] sm:$0xff]
                  %4997 = vst [vmem:[%s4919 + $0x130] sm:$0xff] %v4996
                  %v4998 = vld [vmem:[%s4918 + $0x138] sm:$0xff]
                  %4999 = vst [vmem:[%s4919 + $0x138] sm:$0xff] %v4998
                  %v5000 = vld [vmem:[%s4918 + $0x140] sm:$0xff]
                  %5001 = vst [vmem:[%s4919 + $0x140] sm:$0xff] %v5000
                  %v5002 = vld [vmem:[%s4918 + $0x148] sm:$0xff]
                  %5003 = vst [vmem:[%s4919 + $0x148] sm:$0xff] %v5002
                  %v5004 = vld [vmem:[%s4918 + $0x150] sm:$0xff]
                  %5005 = vst [vmem:[%s4919 + $0x150] sm:$0xff] %v5004
                  %v5006 = vld [vmem:[%s4918 + $0x158] sm:$0xff]
                  %5007 = vst [vmem:[%s4919 + $0x158] sm:$0xff] %v5006
                  %v5008 = vld [vmem:[%s4918 + $0x160] sm:$0xff]
                  %5009 = vst [vmem:[%s4919 + $0x160] sm:$0xff] %v5008
                  %v5010 = vld [vmem:[%s4918 + $0x168] sm:$0xff]
                  %5011 = vst [vmem:[%s4919 + $0x168] sm:$0xff] %v5010
                  %v5012 = vld [vmem:[%s4918 + $0x170] sm:$0xff]
                  %5013 = vst [vmem:[%s4919 + $0x170] sm:$0xff] %v5012
                  %v5014 = vld [vmem:[%s4918 + $0x178] sm:$0xff]
                  %5015 = vst [vmem:[%s4919 + $0x178] sm:$0xff] %v5014
                  %v5016 = vld [vmem:[%s4918 + $0x180] sm:$0xff]
                  %5017 = vst [vmem:[%s4919 + $0x180] sm:$0xff] %v5016
                  %v5018 = vld [vmem:[%s4918 + $0x188] sm:$0xff]
                  %5019 = vst [vmem:[%s4919 + $0x188] sm:$0xff] %v5018
                  %v5020 = vld [vmem:[%s4918 + $0x190] sm:$0xff]
                  %5021 = vst [vmem:[%s4919 + $0x190] sm:$0xff] %v5020
                  %v5022 = vld [vmem:[%s4918 + $0x198] sm:$0xff]
                  %5023 = vst [vmem:[%s4919 + $0x198] sm:$0xff] %v5022
                  %v5024 = vld [vmem:[%s4918 + $0x1a0] sm:$0xff]
                  %5025 = vst [vmem:[%s4919 + $0x1a0] sm:$0xff] %v5024
                  %v5026 = vld [vmem:[%s4918 + $0x1a8] sm:$0xff]
                  %5027 = vst [vmem:[%s4919 + $0x1a8] sm:$0xff] %v5026
                  %v5028 = vld [vmem:[%s4918 + $0x1b0] sm:$0xff]
                  %5029 = vst [vmem:[%s4919 + $0x1b0] sm:$0xff] %v5028
                  %v5030 = vld [vmem:[%s4918 + $0x1b8] sm:$0xff]
                  %5031 = vst [vmem:[%s4919 + $0x1b8] sm:$0xff] %v5030
                  %v5032 = vld [vmem:[%s4918 + $0x1c0] sm:$0xff]
                  %5033 = vst [vmem:[%s4919 + $0x1c0] sm:$0xff] %v5032
                  %v5034 = vld [vmem:[%s4918 + $0x1c8] sm:$0xff]
                  %5035 = vst [vmem:[%s4919 + $0x1c8] sm:$0xff] %v5034
                  %v5036 = vld [vmem:[%s4918 + $0x1d0] sm:$0xff]
                  %5037 = vst [vmem:[%s4919 + $0x1d0] sm:$0xff] %v5036
                  %v5038 = vld [vmem:[%s4918 + $0x1d8] sm:$0xff]
                  %5039 = vst [vmem:[%s4919 + $0x1d8] sm:$0xff] %v5038
                  %v5040 = vld [vmem:[%s4918 + $0x1e0] sm:$0xff]
                  %5041 = vst [vmem:[%s4919 + $0x1e0] sm:$0xff] %v5040
                  %v5042 = vld [vmem:[%s4918 + $0x1e8] sm:$0xff]
                  %5043 = vst [vmem:[%s4919 + $0x1e8] sm:$0xff] %v5042
                  %v5044 = vld [vmem:[%s4918 + $0x1f0] sm:$0xff]
                  %5045 = vst [vmem:[%s4919 + $0x1f0] sm:$0xff] %v5044
                  %v5046 = vld [vmem:[%s4918 + $0x1f8] sm:$0xff]
                  %5047 = vst [vmem:[%s4919 + $0x1f8] sm:$0xff] %v5046
                  %s5048 = sadd.s32 1, %s4917
                  %p5049 = scmp.ge.s32.totalorder %s5048, %s4910
                  %s5050 = scalar_select %p5049, 0, %s5048
                  %s5051 = smul.u32 %s5050, 512
                  %s5052 = smul.u32 %s5050, 512
                  %s5053 = scalar_lea.vmem %s4718, %s5051 [#allocation3]
                  %s5054 = scalar_lea.vmem %s4729, %s5052
                $region71: #{tpu_custom_call.1} parent=65 // loop_footer
                  %s4914 = sadd.s32 %s4912, 1
                $region72: #{tpu_custom_call.1} parent=65 // loop_footer_branch
                  %4911 = sbr.rel target = $region68
                $region73: #{tpu_custom_call.1} parent=65 // loop_exit
                  _
                %s5055 = sshrl.u32 %s4725, 6
                %s5056 = sand.u32 %s4725, 63
                %s5057 = smul.u32 %s5055, 64
                %s5058 = smul.u32 8, %s5057
                %s5059 = scalar_lea.vmem %s4718, %s5058 [#allocation3]
                %s5060 = smul.u32 8, %s5057
                %s5061 = scalar_lea.vmem %s4729, %s5060
                // While loop
                $region74: #{tpu_custom_call.1} parent=65 // loop_pre_header
                  _
                $region75: #{tpu_custom_call.1} parent=65 // loop_header
                  %s5063 = sphi 0, %s5065
                  %p5064 = scmp.ge.s32.totalorder %s5063, %s5056
                  %s5068 = sphi 0, %s5075
                  %s5069 = sphi %s5059, %s5078
                  %s5070 = sphi %s5061, %s5079
                $region76: #{tpu_custom_call.1} parent=65 // loop_header_branch
                  %5067 = sbr.rel (%p5064) target = $region80
                $region77: #{tpu_custom_call.1} parent=65 // loop_body
                  %v5071 = vld [vmem:[%s5069] sm:$0xff]
                  %5072 = vst [vmem:[%s5070] sm:$0xff] %v5071
                  %s5073 = sadd.s32 1, %s5068
                  %p5074 = scmp.ge.s32.totalorder %s5073, %s5056
                  %s5075 = scalar_select %p5074, 0, %s5073
                  %s5076 = smul.u32 %s5075, 8
                  %s5077 = smul.u32 %s5075, 8
                  %s5078 = scalar_lea.vmem %s5059, %s5076 [#allocation3]
                  %s5079 = scalar_lea.vmem %s5061, %s5077
                $region78: #{tpu_custom_call.1} parent=65 // loop_footer
                  %s5065 = sadd.s32 %s5063, 1
                $region79: #{tpu_custom_call.1} parent=65 // loop_footer_branch
                  %5062 = sbr.rel target = $region75
                $region80: #{tpu_custom_call.1} parent=65 // loop_exit
                  _
              $region66: #{tpu_custom_call.1} parent=43 // pred_fallthru
                _
              // Predicated region
              $region81: #{tpu_custom_call.1} parent=43 // pred_check
                _
              $region82: #{tpu_custom_call.1} parent=43 // pred_check_branch
                %5081 = sbr.rel target = $region84
              $region83: #{tpu_custom_call.1} parent=43 // pred_region
                _
              $region84: #{tpu_custom_call.1} parent=43 // pred_fallthru
                _
            $region44: #{tpu_custom_call.1} parent=39 // pred_fallthru
              _
            // Predicated region
            $region45: #{tpu_custom_call.1} parent=39 // pred_check
              _
            $region46: #{tpu_custom_call.1} parent=39 // pred_check_branch
              %4736 = sbr.rel target = $region48
            $region47: #{tpu_custom_call.1} parent=39 // pred_region
              %s4738 = sshrl.u32 %s4725, 6
              // While loop
              $region49: #{tpu_custom_call.1} parent=47 // loop_pre_header
                _
              $region50: #{tpu_custom_call.1} parent=47 // loop_header
                %s4740 = sphi 0, %s4742
                %p4741 = scmp.ge.s32.totalorder %s4740, %s4738
                %s4745 = sphi 0, %s4878
                %s4746 = sphi %s4718, %s4881
                %s4747 = sphi %s4729, %s4882
              $region51: #{tpu_custom_call.1} parent=47 // loop_header_branch
                %4744 = sbr.rel (%p4741) target = $region55
              $region52: #{tpu_custom_call.1} parent=47 // loop_body
                %v4748 = vld [vmem:[%s4746] sm:$0xff]
                %4749 = vst [vmem:[%s4747] sm:$0xff] %v4748
                %v4750 = vld [vmem:[%s4746 + $0x8] sm:$0xff]
                %4751 = vst [vmem:[%s4747 + $0x8] sm:$0xff] %v4750
                %v4752 = vld [vmem:[%s4746 + $0x10] sm:$0xff]
                %4753 = vst [vmem:[%s4747 + $0x10] sm:$0xff] %v4752
                %v4754 = vld [vmem:[%s4746 + $0x18] sm:$0xff]
                %4755 = vst [vmem:[%s4747 + $0x18] sm:$0xff] %v4754
                %v4756 = vld [vmem:[%s4746 + $0x20] sm:$0xff]
                %4757 = vst [vmem:[%s4747 + $0x20] sm:$0xff] %v4756
                %v4758 = vld [vmem:[%s4746 + $0x28] sm:$0xff]
                %4759 = vst [vmem:[%s4747 + $0x28] sm:$0xff] %v4758
                %v4760 = vld [vmem:[%s4746 + $0x30] sm:$0xff]
                %4761 = vst [vmem:[%s4747 + $0x30] sm:$0xff] %v4760
                %v4762 = vld [vmem:[%s4746 + $0x38] sm:$0xff]
                %4763 = vst [vmem:[%s4747 + $0x38] sm:$0xff] %v4762
                %v4764 = vld [vmem:[%s4746 + $0x40] sm:$0xff]
                %4765 = vst [vmem:[%s4747 + $0x40] sm:$0xff] %v4764
                %v4766 = vld [vmem:[%s4746 + $0x48] sm:$0xff]
                %4767 = vst [vmem:[%s4747 + $0x48] sm:$0xff] %v4766
                %v4768 = vld [vmem:[%s4746 + $0x50] sm:$0xff]
                %4769 = vst [vmem:[%s4747 + $0x50] sm:$0xff] %v4768
                %v4770 = vld [vmem:[%s4746 + $0x58] sm:$0xff]
                %4771 = vst [vmem:[%s4747 + $0x58] sm:$0xff] %v4770
                %v4772 = vld [vmem:[%s4746 + $0x60] sm:$0xff]
                %4773 = vst [vmem:[%s4747 + $0x60] sm:$0xff] %v4772
                %v4774 = vld [vmem:[%s4746 + $0x68] sm:$0xff]
                %4775 = vst [vmem:[%s4747 + $0x68] sm:$0xff] %v4774
                %v4776 = vld [vmem:[%s4746 + $0x70] sm:$0xff]
                %4777 = vst [vmem:[%s4747 + $0x70] sm:$0xff] %v4776
                %v4778 = vld [vmem:[%s4746 + $0x78] sm:$0xff]
                %4779 = vst [vmem:[%s4747 + $0x78] sm:$0xff] %v4778
                %v4780 = vld [vmem:[%s4746 + $0x80] sm:$0xff]
                %4781 = vst [vmem:[%s4747 + $0x80] sm:$0xff] %v4780
                %v4782 = vld [vmem:[%s4746 + $0x88] sm:$0xff]
                %4783 = vst [vmem:[%s4747 + $0x88] sm:$0xff] %v4782
                %v4784 = vld [vmem:[%s4746 + $0x90] sm:$0xff]
                %4785 = vst [vmem:[%s4747 + $0x90] sm:$0xff] %v4784
                %v4786 = vld [vmem:[%s4746 + $0x98] sm:$0xff]
                %4787 = vst [vmem:[%s4747 + $0x98] sm:$0xff] %v4786
                %v4788 = vld [vmem:[%s4746 + $0xa0] sm:$0xff]
                %4789 = vst [vmem:[%s4747 + $0xa0] sm:$0xff] %v4788
                %v4790 = vld [vmem:[%s4746 + $0xa8] sm:$0xff]
                %4791 = vst [vmem:[%s4747 + $0xa8] sm:$0xff] %v4790
                %v4792 = vld [vmem:[%s4746 + $0xb0] sm:$0xff]
                %4793 = vst [vmem:[%s4747 + $0xb0] sm:$0xff] %v4792
                %v4794 = vld [vmem:[%s4746 + $0xb8] sm:$0xff]
                %4795 = vst [vmem:[%s4747 + $0xb8] sm:$0xff] %v4794
                %v4796 = vld [vmem:[%s4746 + $0xc0] sm:$0xff]
                %4797 = vst [vmem:[%s4747 + $0xc0] sm:$0xff] %v4796
                %v4798 = vld [vmem:[%s4746 + $0xc8] sm:$0xff]
                %4799 = vst [vmem:[%s4747 + $0xc8] sm:$0xff] %v4798
                %v4800 = vld [vmem:[%s4746 + $0xd0] sm:$0xff]
                %4801 = vst [vmem:[%s4747 + $0xd0] sm:$0xff] %v4800
                %v4802 = vld [vmem:[%s4746 + $0xd8] sm:$0xff]
                %4803 = vst [vmem:[%s4747 + $0xd8] sm:$0xff] %v4802
                %v4804 = vld [vmem:[%s4746 + $0xe0] sm:$0xff]
                %4805 = vst [vmem:[%s4747 + $0xe0] sm:$0xff] %v4804
                %v4806 = vld [vmem:[%s4746 + $0xe8] sm:$0xff]
                %4807 = vst [vmem:[%s4747 + $0xe8] sm:$0xff] %v4806
                %v4808 = vld [vmem:[%s4746 + $0xf0] sm:$0xff]
                %4809 = vst [vmem:[%s4747 + $0xf0] sm:$0xff] %v4808
                %v4810 = vld [vmem:[%s4746 + $0xf8] sm:$0xff]
                %4811 = vst [vmem:[%s4747 + $0xf8] sm:$0xff] %v4810
                %v4812 = vld [vmem:[%s4746 + $0x100] sm:$0xff]
                %4813 = vst [vmem:[%s4747 + $0x100] sm:$0xff] %v4812
                %v4814 = vld [vmem:[%s4746 + $0x108] sm:$0xff]
                %4815 = vst [vmem:[%s4747 + $0x108] sm:$0xff] %v4814
                %v4816 = vld [vmem:[%s4746 + $0x110] sm:$0xff]
                %4817 = vst [vmem:[%s4747 + $0x110] sm:$0xff] %v4816
                %v4818 = vld [vmem:[%s4746 + $0x118] sm:$0xff]
                %4819 = vst [vmem:[%s4747 + $0x118] sm:$0xff] %v4818
                %v4820 = vld [vmem:[%s4746 + $0x120] sm:$0xff]
                %4821 = vst [vmem:[%s4747 + $0x120] sm:$0xff] %v4820
                %v4822 = vld [vmem:[%s4746 + $0x128] sm:$0xff]
                %4823 = vst [vmem:[%s4747 + $0x128] sm:$0xff] %v4822
                %v4824 = vld [vmem:[%s4746 + $0x130] sm:$0xff]
                %4825 = vst [vmem:[%s4747 + $0x130] sm:$0xff] %v4824
                %v4826 = vld [vmem:[%s4746 + $0x138] sm:$0xff]
                %4827 = vst [vmem:[%s4747 + $0x138] sm:$0xff] %v4826
                %v4828 = vld [vmem:[%s4746 + $0x140] sm:$0xff]
                %4829 = vst [vmem:[%s4747 + $0x140] sm:$0xff] %v4828
                %v4830 = vld [vmem:[%s4746 + $0x148] sm:$0xff]
                %4831 = vst [vmem:[%s4747 + $0x148] sm:$0xff] %v4830
                %v4832 = vld [vmem:[%s4746 + $0x150] sm:$0xff]
                %4833 = vst [vmem:[%s4747 + $0x150] sm:$0xff] %v4832
                %v4834 = vld [vmem:[%s4746 + $0x158] sm:$0xff]
                %4835 = vst [vmem:[%s4747 + $0x158] sm:$0xff] %v4834
                %v4836 = vld [vmem:[%s4746 + $0x160] sm:$0xff]
                %4837 = vst [vmem:[%s4747 + $0x160] sm:$0xff] %v4836
                %v4838 = vld [vmem:[%s4746 + $0x168] sm:$0xff]
                %4839 = vst [vmem:[%s4747 + $0x168] sm:$0xff] %v4838
                %v4840 = vld [vmem:[%s4746 + $0x170] sm:$0xff]
                %4841 = vst [vmem:[%s4747 + $0x170] sm:$0xff] %v4840
                %v4842 = vld [vmem:[%s4746 + $0x178] sm:$0xff]
                %4843 = vst [vmem:[%s4747 + $0x178] sm:$0xff] %v4842
                %v4844 = vld [vmem:[%s4746 + $0x180] sm:$0xff]
                %4845 = vst [vmem:[%s4747 + $0x180] sm:$0xff] %v4844
                %v4846 = vld [vmem:[%s4746 + $0x188] sm:$0xff]
                %4847 = vst [vmem:[%s4747 + $0x188] sm:$0xff] %v4846
                %v4848 = vld [vmem:[%s4746 + $0x190] sm:$0xff]
                %4849 = vst [vmem:[%s4747 + $0x190] sm:$0xff] %v4848
                %v4850 = vld [vmem:[%s4746 + $0x198] sm:$0xff]
                %4851 = vst [vmem:[%s4747 + $0x198] sm:$0xff] %v4850
                %v4852 = vld [vmem:[%s4746 + $0x1a0] sm:$0xff]
                %4853 = vst [vmem:[%s4747 + $0x1a0] sm:$0xff] %v4852
                %v4854 = vld [vmem:[%s4746 + $0x1a8] sm:$0xff]
                %4855 = vst [vmem:[%s4747 + $0x1a8] sm:$0xff] %v4854
                %v4856 = vld [vmem:[%s4746 + $0x1b0] sm:$0xff]
                %4857 = vst [vmem:[%s4747 + $0x1b0] sm:$0xff] %v4856
                %v4858 = vld [vmem:[%s4746 + $0x1b8] sm:$0xff]
                %4859 = vst [vmem:[%s4747 + $0x1b8] sm:$0xff] %v4858
                %v4860 = vld [vmem:[%s4746 + $0x1c0] sm:$0xff]
                %4861 = vst [vmem:[%s4747 + $0x1c0] sm:$0xff] %v4860
                %v4862 = vld [vmem:[%s4746 + $0x1c8] sm:$0xff]
                %4863 = vst [vmem:[%s4747 + $0x1c8] sm:$0xff] %v4862
                %v4864 = vld [vmem:[%s4746 + $0x1d0] sm:$0xff]
                %4865 = vst [vmem:[%s4747 + $0x1d0] sm:$0xff] %v4864
                %v4866 = vld [vmem:[%s4746 + $0x1d8] sm:$0xff]
                %4867 = vst [vmem:[%s4747 + $0x1d8] sm:$0xff] %v4866
                %v4868 = vld [vmem:[%s4746 + $0x1e0] sm:$0xff]
                %4869 = vst [vmem:[%s4747 + $0x1e0] sm:$0xff] %v4868
                %v4870 = vld [vmem:[%s4746 + $0x1e8] sm:$0xff]
                %4871 = vst [vmem:[%s4747 + $0x1e8] sm:$0xff] %v4870
                %v4872 = vld [vmem:[%s4746 + $0x1f0] sm:$0xff]
                %4873 = vst [vmem:[%s4747 + $0x1f0] sm:$0xff] %v4872
                %v4874 = vld [vmem:[%s4746 + $0x1f8] sm:$0xff]
                %4875 = vst [vmem:[%s4747 + $0x1f8] sm:$0xff] %v4874
                %s4876 = sadd.s32 1, %s4745
                %p4877 = scmp.ge.s32.totalorder %s4876, %s4738
                %s4878 = scalar_select %p4877, 0, %s4876
                %s4879 = smul.u32 %s4878, 512
                %s4880 = smul.u32 %s4878, 512
                %s4881 = scalar_lea.vmem %s4718, %s4879 [#allocation3]
                %s4882 = scalar_lea.vmem %s4729, %s4880
              $region53: #{tpu_custom_call.1} parent=47 // loop_footer
                %s4742 = sadd.s32 %s4740, 1
              $region54: #{tpu_custom_call.1} parent=47 // loop_footer_branch
                %4739 = sbr.rel target = $region50
              $region55: #{tpu_custom_call.1} parent=47 // loop_exit
                _
              %s4883 = sshrl.u32 %s4725, 6
              %s4884 = sand.u32 %s4725, 63
              %s4885 = smul.u32 %s4883, 64
              %s4886 = smul.u32 8, %s4885
              %s4887 = scalar_lea.vmem %s4718, %s4886 [#allocation3]
              %s4888 = smul.u32 8, %s4885
              %s4889 = scalar_lea.vmem %s4729, %s4888
              // While loop
              $region56: #{tpu_custom_call.1} parent=47 // loop_pre_header
                _
              $region57: #{tpu_custom_call.1} parent=47 // loop_header
                %s4891 = sphi 0, %s4893
                %p4892 = scmp.ge.s32.totalorder %s4891, %s4884
                %s4896 = sphi 0, %s4903
                %s4897 = sphi %s4887, %s4906
                %s4898 = sphi %s4889, %s4907
              $region58: #{tpu_custom_call.1} parent=47 // loop_header_branch
                %4895 = sbr.rel (%p4892) target = $region62
              $region59: #{tpu_custom_call.1} parent=47 // loop_body
                %v4899 = vld [vmem:[%s4897] sm:$0xff]
                %4900 = vst [vmem:[%s4898] sm:$0xff] %v4899
                %s4901 = sadd.s32 1, %s4896
                %p4902 = scmp.ge.s32.totalorder %s4901, %s4884
                %s4903 = scalar_select %p4902, 0, %s4901
                %s4904 = smul.u32 %s4903, 8
                %s4905 = smul.u32 %s4903, 8
                %s4906 = scalar_lea.vmem %s4887, %s4904 [#allocation3]
                %s4907 = scalar_lea.vmem %s4889, %s4905
              $region60: #{tpu_custom_call.1} parent=47 // loop_footer
                %s4893 = sadd.s32 %s4891, 1
              $region61: #{tpu_custom_call.1} parent=47 // loop_footer_branch
                %4890 = sbr.rel target = $region57
              $region62: #{tpu_custom_call.1} parent=47 // loop_exit
                _
            $region48: #{tpu_custom_call.1} parent=39 // pred_fallthru
              _
          $region40: #{tpu_custom_call.1} parent=35 // pred_fallthru
            _
          %5082 = vnop
        $region36: #{tpu_custom_call.1} parent=31 // pred_fallthru
          _
      $region32: #{tpu_custom_call.1} parent=5 // pred_fallthru
        _
      %p5083 = scmp.le.s32.totalorder 2, %s10
      // Predicated region
      $region85: #{tpu_custom_call.1} parent=5 // pred_check
        %p5084 = pneg %p5083
      $region86: #{tpu_custom_call.1} parent=5 // pred_check_branch
        %5086 = sbr.rel (%p5084) target = $region88
      $region87: #{tpu_custom_call.1} parent=5 // pred_region
        %s5087 = ssub.s32 %s10, 2
        // Predicated region
        $region89: #{tpu_custom_call.1} parent=87 // pred_check
          %p5088 = pneg %p107
        $region90: #{tpu_custom_call.1} parent=87 // pred_check_branch
          %5090 = sbr.rel (%p5088) target = $region92
        $region91: #{tpu_custom_call.1} parent=87 // pred_region
          %s5091 = sand.u32 %s92, 1
          %s5092 = sand.u32 %s92, 1
          %s5093 = smul.addr %s5092, 3008
          %s5094 = scalar_lea.vmem [#allocation3], %s5093
        $region92: #{tpu_custom_call.1} parent=87 // pred_fallthru
          _
      $region88: #{tpu_custom_call.1} parent=5 // pred_fallthru
        _
    $region6: #{tpu_custom_call.1} parent=1 // loop_footer
      %s14 = sadd.s32 1, %s10
    $region7: #{tpu_custom_call.1} parent=1 // loop_footer_branch
      %9 = sbr.rel target = $region3
    $region8: #{tpu_custom_call.1} parent=1 // loop_exit
      _

</llo_original>
